<compile_context>
chip_gen: v7x
topology: tpu7x:2x2x1
jax: 0.10.0
libtpu: 0.0.40
codegen_flags: <defaults>
</compile_context>

<pallas_src>
import functools

import jax
import jax.numpy as jnp
import numpy as np
from jax.experimental import pallas as pl
from jax.experimental.pallas import tpu as pltpu

LEAKY_ALPHA = 0.2  # negative slope of LeakyReLU ("alpha" in the module)


def _elu(v):
    return jnp.where(v > 0, v, jnp.exp(jnp.minimum(v, 0.0)) - 1.0)


def _gat_attn_kernel(mask_ref, hdst_ref, ssrc_ref, sdst_ref, o_ref, acc_ref,
                     *, nheads, nhid):
    """One grid step == one dst tile; heads are statically unrolled inside."""
    d = pl.program_id(0)

    @pl.when(d == 0)
    def _init():
        acc_ref[...] = jnp.zeros_like(acc_ref)

    # int8 edge mask -> f32 once per tile, shared by all heads.
    maskf = mask_ref[...].astype(jnp.float32)                 # (N, TD), 0/1
    # 0 on edges, -1e30 on non-edges (one fused VPU pass, replaces selects).
    neg_bias = (maskf - 1.0) * jnp.float32(1e30)              # (N, TD)

    for h in range(nheads):                                   # static unroll
        # e[src, dst] = leakyrelu(s_src[src] + s_dst[dst])
        e = ssrc_ref[h] + sdst_ref[h]                         # (N,1)+(1,TD)->(N,TD)
        e = jnp.maximum(e, LEAKY_ALPHA * e)                   # LeakyReLU, 1 max

        # Column (per-dst) softmax over src, restricted to edges.
        cmax = jnp.max(e + neg_bias, axis=0, keepdims=True)   # masked max (1,TD)
        cmax = jnp.maximum(cmax, 0.0)                         # keep empty cols finite
        p = maskf * jnp.exp(e - cmax)                         # unnormalized att (N,TD)
        denom = jnp.sum(p, axis=0, keepdims=True)             # (1,TD)
        # denom==0 only for zero-degree dst columns (self-loops normally prevent
        # this); such columns contribute exactly 0, matching the old guard.
        inv = pl.reciprocal(jnp.where(denom > 0.0, denom, 1.0), approx=False)
        # NOTE: approx=True uses the EUP vrcp (cheaper) at ~1e-4 rel. error;
        # kept exact here to hold a tight test tolerance.

        # Normalize by scaling the dst-indexed h rows (TD*nhid mults) instead of
        # dividing the (N, TD) attention matrix elementwise.
        h_scaled = hdst_ref[h] * jnp.transpose(inv, (1, 0))   # (TD, nhid)

        # Partial aggregation for this dst tile (MXU), accumulate per head slice.
        part = jnp.dot(p, h_scaled, preferred_element_type=jnp.float32)  # (N,nhid)
        acc_ref[:, h * nhid:(h + 1) * nhid] += part

    @pl.when(d == pl.num_programs(0) - 1)
    def _finalize():
        # Per-head ELU (concat=True) then GATConv's outer ELU (elementwise, so it
        # commutes with the concat). Single full-width lane-dense store.
        o_ref[...] = _elu(_elu(acc_ref[...])).astype(o_ref.dtype)


def gat_conv(x, mask, wfc, bfc, a_src, a_dst, *, tile_d=512,
             vmem_limit_bytes=64 * 1024 * 1024):
    """x: (N, Fin) f32; mask: (N, N) 0/1 (src, dst); wfc: (H, Fin, Fout);
    bfc/a_src/a_dst: (H, Fout).  Returns (N, H*Fout) f32.

    tile_d: dst-tile width. Per-generation guidance: 512-2048 on v5e/v6e
    (raise vmem_limit_bytes accordingly), ~half that on v7x (64 MiB VMEM).
    """
    nheads, nfeat, nhid = wfc.shape
    N = x.shape[0]
    tile_d = min(tile_d, N)
    assert N % tile_d == 0, "N must be divisible by the dst tile width"
    assert tile_d == N or tile_d % 128 == 0, "tile_d must be lane-aligned (x128)"
    n_dst = N // tile_d

    # --- hoisted per-node prep (one fused MXU matmul for all heads) ---------
    h_all = jnp.einsum("nf,hfo->hno", x, wfc) + bfc[:, None, :]      # (H, N, nhid)
    s_src = jnp.einsum("hno,ho->hn", h_all, a_src)[:, :, None]       # (H, N, 1)
    s_dst = jnp.einsum("hno,ho->hn", h_all, a_dst)[:, None, :]       # (H, 1, N)
    mask_i8 = (mask > 0).astype(jnp.int8)                            # compress HBM stream

    kernel = functools.partial(_gat_attn_kernel, nheads=nheads, nhid=nhid)

    return pl.pallas_call(
        kernel,
        out_shape=jax.ShapeDtypeStruct((N, nheads * nhid), jnp.float32),
        grid_spec=pltpu.PrefetchScalarGridSpec(
            num_scalar_prefetch=0,
            grid=(n_dst,),
            in_specs=[
                # dense edge mask, streamed per dst tile (dominant HBM traffic)
                pl.BlockSpec((N, tile_d), lambda d: (0, d)),
                # h rows for this dst tile, all heads
                pl.BlockSpec((nheads, tile_d, nhid), lambda d: (0, d, 0)),
                # s_src for all src nodes / heads (resident across the grid)
                pl.BlockSpec((nheads, N, 1), lambda d: (0, 0, 0)),
                # s_dst row for this dst tile, all heads
                pl.BlockSpec((nheads, 1, tile_d), lambda d: (0, 0, d)),
            ],
            out_specs=pl.BlockSpec((N, nheads * nhid), lambda d: (0, 0)),
            scratch_shapes=[pltpu.VMEM((N, nheads * nhid), jnp.float32)],
        ),
        compiler_params=pltpu.CompilerParams(
            # dst is a reduction axis (accumulator) -> "arbitrary".
            # TODO(synk): v7x megacore would need a head-level or two-pass split
            #             to feed both TensorCores; single-axis here.
            dimension_semantics=("arbitrary",),
            vmem_limit_bytes=vmem_limit_bytes,
        ),
    )(mask_i8, h_all, s_src, s_dst)


def gat_conv_reference(x, mask, wfc, bfc, a_src, a_dst):
    outs = []
    for hd in range(wfc.shape[0]):
        h = x @ wfc[hd] + bfc[hd][None, :]
        s_src = (h * a_src[hd][None, :]).sum(1, keepdims=True)
        s_dst = (h * a_dst[hd][None, :]).sum(1, keepdims=True)
        e = s_src + s_dst.T
        e = jnp.where(e > 0, e, LEAKY_ALPHA * e)
        em = jnp.where(mask > 0, e, -1e30)
        m = em.max(0, keepdims=True)
        p = jnp.where(mask > 0, jnp.exp(em - m), 0.0)
        d = p.sum(0, keepdims=True)
        att = p / jnp.where(d > 0, d, 1.0)
        outs.append(_elu(att @ h))
    return _elu(jnp.concatenate(outs, axis=1))


if __name__ == "__main__":
    # Small deterministic setup: N=256 nodes, nfeat=16, nhid=32, nheads=4
    # (nheads*nhid = 128 -> exactly lane-dense output; tile_d=128 -> 2 dst tiles
    # so the accumulator path is exercised).
    N, nfeat, nhid, nheads = 256, 16, 32, 4
    key = jax.random.PRNGKey(0)
    kx, km, kw, kb, kas, kad = jax.random.split(key, 6)

    x = jax.random.normal(kx, (N, nfeat), dtype=jnp.float32)

    # Random sparse graph as a dense mask; self-loops keep edge_softmax defined.
    mask = (jax.random.uniform(km, (N, N)) < 0.05).astype(jnp.float32)
    mask = jnp.maximum(mask, jnp.eye(N, dtype=jnp.float32))

    # Per-head parameters (fc weight stored already transposed: (Fin, Fout)).
    wfc = 0.5 * jax.random.normal(kw, (nheads, nfeat, nhid), dtype=jnp.float32)
    bfc = 0.1 * jax.random.normal(kb, (nheads, nhid), dtype=jnp.float32)
    a_src = 0.5 * jax.random.normal(kas, (nheads, nhid), dtype=jnp.float32)
    a_dst = 0.5 * jax.random.normal(kad, (nheads, nhid), dtype=jnp.float32)

    out = gat_conv(x, mask, wfc, bfc, a_src, a_dst, tile_d=128)
    out = jax.block_until_ready(out)

    ref = gat_conv_reference(x, mask, wfc, bfc, a_src, a_dst)
    np.testing.assert_allclose(np.asarray(out), np.asarray(ref),
                               rtol=1e-4, atol=1e-4)
    print("KERNEL_OK")
</pallas_src>

<mosaic_0001>
module attributes {stable_mosaic.version = 11 : i64} {
  func.func @_gat_attn_kernel(%arg0: i32, %arg1: memref<256x128xi8, #tpu.memory_space<vmem>>, %arg2: memref<4x128x32xf32, #tpu.memory_space<vmem>>, %arg3: memref<4x256x1xf32, #tpu.memory_space<vmem>>, %arg4: memref<4x1x128xf32, #tpu.memory_space<vmem>>, %arg5: memref<256x128xf32, #tpu.memory_space<vmem>>, %arg6: memref<256x128xf32, #tpu.memory_space<vmem>>) attributes {dimension_semantics = [#tpu.dimension_semantics<arbitrary>], iteration_bounds = array<i64: 2>, scalar_prefetch = 0 : i64, scratch_operands = 1 : i64, tpu.core_type = #tpu.core_type<tc>, window_params = [{transform_indices = @transform_0, window_bounds = array<i64: 256, 128>}, {transform_indices = @transform_1, window_bounds = array<i64: 4, 128, 32>}, {pipeline_mode = #tpu.pipeline_mode<synchronous>, transform_indices = @transform_2, window_bounds = array<i64: 4, 256, 1>}, {transform_indices = @transform_3, window_bounds = array<i64: 4, 1, 128>}, {pipeline_mode = #tpu.pipeline_mode<synchronous>, transform_indices = @transform_4, window_bounds = array<i64: 256, 128>}]} {
    %c0_i32 = arith.constant 0 : i32
    %0 = arith.cmpi eq, %arg0, %c0_i32 : i32
    %1 = arith.extui %0 : i1 to i32
    %c0_i32_0 = arith.constant 0 : i32
    %2 = arith.cmpi ne, %1, %c0_i32_0 : i32
    scf.if %2 {
      %cst_78 = arith.constant 0.000000e+00 : f32
      %152 = vector.broadcast %cst_78 : f32 to vector<256x128xf32>
      %c0_79 = arith.constant 0 : index
      %c0_80 = arith.constant 0 : index
      %153 = vector.load %arg6[%c0_79, %c0_80] : memref<256x128xf32, #tpu.memory_space<vmem>>, vector<256x128xf32>
      tpu.vector_store %arg6[%c0_79, %c0_80], %152 {strides = array<i32>} : memref<256x128xf32, #tpu.memory_space<vmem>>, vector<256x128xf32>,
    } else {
    }
    %c0 = arith.constant 0 : index
    %c0_1 = arith.constant 0 : index
    %3 = vector.load %arg1[%c0, %c0_1] : memref<256x128xi8, #tpu.memory_space<vmem>>, vector<256x128xi8>
    %4 = arith.sitofp %3 : vector<256x128xi8> to vector<256x128xf32>
    %cst = arith.constant 1.000000e+00 : f32
    %5 = vector.broadcast %cst : f32 to vector<256x128xf32>
    %6 = arith.subf %4, %5 : vector<256x128xf32>
    %cst_2 = arith.constant 1.000000e+30 : f32
    %7 = vector.broadcast %cst_2 : f32 to vector<256x128xf32>
    %8 = arith.mulf %6, %7 : vector<256x128xf32>
    %c0_3 = arith.constant 0 : index
    %c0_4 = arith.constant 0 : index
    %c0_5 = arith.constant 0 : index
    %9 = vector.load %arg3[%c0_3, %c0_4, %c0_5] : memref<4x256x1xf32, #tpu.memory_space<vmem>>, vector<1x256x1xf32>
    %10 = vector.shape_cast %9 : vector<1x256x1xf32> to vector<256x1xf32>
    %c0_6 = arith.constant 0 : index
    %c0_7 = arith.constant 0 : index
    %c0_8 = arith.constant 0 : index
    %11 = vector.load %arg4[%c0_6, %c0_7, %c0_8] : memref<4x1x128xf32, #tpu.memory_space<vmem>>, vector<1x1x128xf32>
    %12 = vector.shape_cast %11 : vector<1x1x128xf32> to vector<1x128xf32>
    %13 = vector.broadcast %10 : vector<256x1xf32> to vector<256x128xf32>
    %14 = vector.broadcast %12 : vector<1x128xf32> to vector<256x128xf32>
    %15 = arith.addf %13, %14 : vector<256x128xf32>
    %cst_9 = arith.constant 2.000000e-01 : f32
    %16 = vector.broadcast %cst_9 : f32 to vector<256x128xf32>
    %17 = arith.mulf %16, %15 : vector<256x128xf32>
    %18 = arith.maximumf %15, %17 : vector<256x128xf32>
    %19 = arith.addf %18, %8 : vector<256x128xf32>
    %cst_10 = arith.constant dense<0xFF800000> : vector<128xf32>
    %20 = vector.multi_reduction <maximumf>, %19, %cst_10 [0] : vector<256x128xf32> to vector<128xf32>
    %21 = vector.shape_cast %20 : vector<128xf32> to vector<1x128xf32>
    %cst_11 = arith.constant 0.000000e+00 : f32
    %22 = vector.broadcast %cst_11 : f32 to vector<1x128xf32>
    %23 = arith.maximumf %21, %22 : vector<1x128xf32>
    %24 = vector.broadcast %23 : vector<1x128xf32> to vector<256x128xf32>
    %25 = arith.subf %18, %24 : vector<256x128xf32>
    %26 = math.exp %25 : vector<256x128xf32>
    %27 = arith.mulf %4, %26 : vector<256x128xf32>
    %cst_12 = arith.constant dense<0.000000e+00> : vector<128xf32>
    %28 = vector.multi_reduction <add>, %27, %cst_12 [0] : vector<256x128xf32> to vector<128xf32>
    %29 = vector.shape_cast %28 : vector<128xf32> to vector<1x128xf32>
    %cst_13 = arith.constant 0.000000e+00 : f32
    %30 = vector.broadcast %cst_13 : f32 to vector<1x128xf32>
    %31 = arith.cmpf ogt, %29, %30 : vector<1x128xf32>
    %cst_14 = arith.constant 1.000000e+00 : f32
    %32 = vector.broadcast %cst_14 : f32 to vector<1x128xf32>
    %33 = arith.select %31, %29, %32 : vector<1x128xi1>, vector<1x128xf32>
    %34 = tpu.reciprocal %33 : vector<1x128xf32> -> vector<1x128xf32>
    %c0_15 = arith.constant 0 : index
    %c0_16 = arith.constant 0 : index
    %c0_17 = arith.constant 0 : index
    %35 = vector.load %arg2[%c0_15, %c0_16, %c0_17] : memref<4x128x32xf32, #tpu.memory_space<vmem>>, vector<1x128x32xf32>
    %36 = vector.shape_cast %35 : vector<1x128x32xf32> to vector<128x32xf32>
    %37 = tpu.transpose %34, [1, 0] : vector<1x128xf32> -> vector<128x1xf32>
    %38 = vector.broadcast %37 : vector<128x1xf32> to vector<128x32xf32>
    %39 = arith.mulf %36, %38 : vector<128x32xf32>
    %cst_18 = arith.constant dense<0.000000e+00> : vector<256x32xf32>
    %40 = tpu.matmul %27, %39, %cst_18 {dimension_numbers = #tpu.dot_dimension_numbers<[1], [0], [0], [1], [0, 0, 1, 1], [], []>} : vector<256x128xf32>, vector<128x32xf32>, vector<256x32xf32> -> vector<256x32xf32>
    %c0_19 = arith.constant 0 : index
    %c0_20 = arith.constant 0 : index
    %41 = vector.load %arg6[%c0_19, %c0_20] : memref<256x128xf32, #tpu.memory_space<vmem>>, vector<256x32xf32>
    %42 = arith.addf %41, %40 : vector<256x32xf32>
    %c0_21 = arith.constant 0 : index
    %c0_22 = arith.constant 0 : index
    %43 = vector.load %arg6[%c0_21, %c0_22] : memref<256x128xf32, #tpu.memory_space<vmem>>, vector<256x32xf32>
    tpu.vector_store %arg6[%c0_21, %c0_22], %42 {strides = array<i32>} : memref<256x128xf32, #tpu.memory_space<vmem>>, vector<256x32xf32>,
    %c1 = arith.constant 1 : index
    %c0_23 = arith.constant 0 : index
    %c0_24 = arith.constant 0 : index
    %44 = vector.load %arg3[%c1, %c0_23, %c0_24] : memref<4x256x1xf32, #tpu.memory_space<vmem>>, vector<1x256x1xf32>
    %45 = vector.shape_cast %44 : vector<1x256x1xf32> to vector<256x1xf32>
    %c1_25 = arith.constant 1 : index
    %c0_26 = arith.constant 0 : index
    %c0_27 = arith.constant 0 : index
    %46 = vector.load %arg4[%c1_25, %c0_26, %c0_27] : memref<4x1x128xf32, #tpu.memory_space<vmem>>, vector<1x1x128xf32>
    %47 = vector.shape_cast %46 : vector<1x1x128xf32> to vector<1x128xf32>
    %48 = vector.broadcast %45 : vector<256x1xf32> to vector<256x128xf32>
    %49 = vector.broadcast %47 : vector<1x128xf32> to vector<256x128xf32>
    %50 = arith.addf %48, %49 : vector<256x128xf32>
    %cst_28 = arith.constant 2.000000e-01 : f32
    %51 = vector.broadcast %cst_28 : f32 to vector<256x128xf32>
    %52 = arith.mulf %51, %50 : vector<256x128xf32>
    %53 = arith.maximumf %50, %52 : vector<256x128xf32>
    %54 = arith.addf %53, %8 : vector<256x128xf32>
    %cst_29 = arith.constant dense<0xFF800000> : vector<128xf32>
    %55 = vector.multi_reduction <maximumf>, %54, %cst_29 [0] : vector<256x128xf32> to vector<128xf32>
    %56 = vector.shape_cast %55 : vector<128xf32> to vector<1x128xf32>
    %cst_30 = arith.constant 0.000000e+00 : f32
    %57 = vector.broadcast %cst_30 : f32 to vector<1x128xf32>
    %58 = arith.maximumf %56, %57 : vector<1x128xf32>
    %59 = vector.broadcast %58 : vector<1x128xf32> to vector<256x128xf32>
    %60 = arith.subf %53, %59 : vector<256x128xf32>
    %61 = math.exp %60 : vector<256x128xf32>
    %62 = arith.mulf %4, %61 : vector<256x128xf32>
    %cst_31 = arith.constant dense<0.000000e+00> : vector<128xf32>
    %63 = vector.multi_reduction <add>, %62, %cst_31 [0] : vector<256x128xf32> to vector<128xf32>
    %64 = vector.shape_cast %63 : vector<128xf32> to vector<1x128xf32>
    %cst_32 = arith.constant 0.000000e+00 : f32
    %65 = vector.broadcast %cst_32 : f32 to vector<1x128xf32>
    %66 = arith.cmpf ogt, %64, %65 : vector<1x128xf32>
    %cst_33 = arith.constant 1.000000e+00 : f32
    %67 = vector.broadcast %cst_33 : f32 to vector<1x128xf32>
    %68 = arith.select %66, %64, %67 : vector<1x128xi1>, vector<1x128xf32>
    %69 = tpu.reciprocal %68 : vector<1x128xf32> -> vector<1x128xf32>
    %c1_34 = arith.constant 1 : index
    %c0_35 = arith.constant 0 : index
    %c0_36 = arith.constant 0 : index
    %70 = vector.load %arg2[%c1_34, %c0_35, %c0_36] : memref<4x128x32xf32, #tpu.memory_space<vmem>>, vector<1x128x32xf32>
    %71 = vector.shape_cast %70 : vector<1x128x32xf32> to vector<128x32xf32>
    %72 = tpu.transpose %69, [1, 0] : vector<1x128xf32> -> vector<128x1xf32>
    %73 = vector.broadcast %72 : vector<128x1xf32> to vector<128x32xf32>
    %74 = arith.mulf %71, %73 : vector<128x32xf32>
    %cst_37 = arith.constant dense<0.000000e+00> : vector<256x32xf32>
    %75 = tpu.matmul %62, %74, %cst_37 {dimension_numbers = #tpu.dot_dimension_numbers<[1], [0], [0], [1], [0, 0, 1, 1], [], []>} : vector<256x128xf32>, vector<128x32xf32>, vector<256x32xf32> -> vector<256x32xf32>
    %c0_38 = arith.constant 0 : index
    %c32 = arith.constant 32 : index
    %76 = vector.load %arg6[%c0_38, %c32] : memref<256x128xf32, #tpu.memory_space<vmem>>, vector<256x32xf32>
    %77 = arith.addf %76, %75 : vector<256x32xf32>
    %c0_39 = arith.constant 0 : index
    %c32_40 = arith.constant 32 : index
    %78 = vector.load %arg6[%c0_39, %c32_40] : memref<256x128xf32, #tpu.memory_space<vmem>>, vector<256x32xf32>
    tpu.vector_store %arg6[%c0_39, %c32_40], %77 {strides = array<i32>} : memref<256x128xf32, #tpu.memory_space<vmem>>, vector<256x32xf32>,
    %c2 = arith.constant 2 : index
    %c0_41 = arith.constant 0 : index
    %c0_42 = arith.constant 0 : index
    %79 = vector.load %arg3[%c2, %c0_41, %c0_42] : memref<4x256x1xf32, #tpu.memory_space<vmem>>, vector<1x256x1xf32>
    %80 = vector.shape_cast %79 : vector<1x256x1xf32> to vector<256x1xf32>
    %c2_43 = arith.constant 2 : index
    %c0_44 = arith.constant 0 : index
    %c0_45 = arith.constant 0 : index
    %81 = vector.load %arg4[%c2_43, %c0_44, %c0_45] : memref<4x1x128xf32, #tpu.memory_space<vmem>>, vector<1x1x128xf32>
    %82 = vector.shape_cast %81 : vector<1x1x128xf32> to vector<1x128xf32>
    %83 = vector.broadcast %80 : vector<256x1xf32> to vector<256x128xf32>
    %84 = vector.broadcast %82 : vector<1x128xf32> to vector<256x128xf32>
    %85 = arith.addf %83, %84 : vector<256x128xf32>
    %cst_46 = arith.constant 2.000000e-01 : f32
    %86 = vector.broadcast %cst_46 : f32 to vector<256x128xf32>
    %87 = arith.mulf %86, %85 : vector<256x128xf32>
    %88 = arith.maximumf %85, %87 : vector<256x128xf32>
    %89 = arith.addf %88, %8 : vector<256x128xf32>
    %cst_47 = arith.constant dense<0xFF800000> : vector<128xf32>
    %90 = vector.multi_reduction <maximumf>, %89, %cst_47 [0] : vector<256x128xf32> to vector<128xf32>
    %91 = vector.shape_cast %90 : vector<128xf32> to vector<1x128xf32>
    %cst_48 = arith.constant 0.000000e+00 : f32
    %92 = vector.broadcast %cst_48 : f32 to vector<1x128xf32>
    %93 = arith.maximumf %91, %92 : vector<1x128xf32>
    %94 = vector.broadcast %93 : vector<1x128xf32> to vector<256x128xf32>
    %95 = arith.subf %88, %94 : vector<256x128xf32>
    %96 = math.exp %95 : vector<256x128xf32>
    %97 = arith.mulf %4, %96 : vector<256x128xf32>
    %cst_49 = arith.constant dense<0.000000e+00> : vector<128xf32>
    %98 = vector.multi_reduction <add>, %97, %cst_49 [0] : vector<256x128xf32> to vector<128xf32>
    %99 = vector.shape_cast %98 : vector<128xf32> to vector<1x128xf32>
    %cst_50 = arith.constant 0.000000e+00 : f32
    %100 = vector.broadcast %cst_50 : f32 to vector<1x128xf32>
    %101 = arith.cmpf ogt, %99, %100 : vector<1x128xf32>
    %cst_51 = arith.constant 1.000000e+00 : f32
    %102 = vector.broadcast %cst_51 : f32 to vector<1x128xf32>
    %103 = arith.select %101, %99, %102 : vector<1x128xi1>, vector<1x128xf32>
    %104 = tpu.reciprocal %103 : vector<1x128xf32> -> vector<1x128xf32>
    %c2_52 = arith.constant 2 : index
    %c0_53 = arith.constant 0 : index
    %c0_54 = arith.constant 0 : index
    %105 = vector.load %arg2[%c2_52, %c0_53, %c0_54] : memref<4x128x32xf32, #tpu.memory_space<vmem>>, vector<1x128x32xf32>
    %106 = vector.shape_cast %105 : vector<1x128x32xf32> to vector<128x32xf32>
    %107 = tpu.transpose %104, [1, 0] : vector<1x128xf32> -> vector<128x1xf32>
    %108 = vector.broadcast %107 : vector<128x1xf32> to vector<128x32xf32>
    %109 = arith.mulf %106, %108 : vector<128x32xf32>
    %cst_55 = arith.constant dense<0.000000e+00> : vector<256x32xf32>
    %110 = tpu.matmul %97, %109, %cst_55 {dimension_numbers = #tpu.dot_dimension_numbers<[1], [0], [0], [1], [0, 0, 1, 1], [], []>} : vector<256x128xf32>, vector<128x32xf32>, vector<256x32xf32> -> vector<256x32xf32>
    %c0_56 = arith.constant 0 : index
    %c64 = arith.constant 64 : index
    %111 = vector.load %arg6[%c0_56, %c64] : memref<256x128xf32, #tpu.memory_space<vmem>>, vector<256x32xf32>
    %112 = arith.addf %111, %110 : vector<256x32xf32>
    %c0_57 = arith.constant 0 : index
    %c64_58 = arith.constant 64 : index
    %113 = vector.load %arg6[%c0_57, %c64_58] : memref<256x128xf32, #tpu.memory_space<vmem>>, vector<256x32xf32>
    tpu.vector_store %arg6[%c0_57, %c64_58], %112 {strides = array<i32>} : memref<256x128xf32, #tpu.memory_space<vmem>>, vector<256x32xf32>,
    %c3 = arith.constant 3 : index
    %c0_59 = arith.constant 0 : index
    %c0_60 = arith.constant 0 : index
    %114 = vector.load %arg3[%c3, %c0_59, %c0_60] : memref<4x256x1xf32, #tpu.memory_space<vmem>>, vector<1x256x1xf32>
    %115 = vector.shape_cast %114 : vector<1x256x1xf32> to vector<256x1xf32>
    %c3_61 = arith.constant 3 : index
    %c0_62 = arith.constant 0 : index
    %c0_63 = arith.constant 0 : index
    %116 = vector.load %arg4[%c3_61, %c0_62, %c0_63] : memref<4x1x128xf32, #tpu.memory_space<vmem>>, vector<1x1x128xf32>
    %117 = vector.shape_cast %116 : vector<1x1x128xf32> to vector<1x128xf32>
    %118 = vector.broadcast %115 : vector<256x1xf32> to vector<256x128xf32>
    %119 = vector.broadcast %117 : vector<1x128xf32> to vector<256x128xf32>
    %120 = arith.addf %118, %119 : vector<256x128xf32>
    %cst_64 = arith.constant 2.000000e-01 : f32
    %121 = vector.broadcast %cst_64 : f32 to vector<256x128xf32>
    %122 = arith.mulf %121, %120 : vector<256x128xf32>
    %123 = arith.maximumf %120, %122 : vector<256x128xf32>
    %124 = arith.addf %123, %8 : vector<256x128xf32>
    %cst_65 = arith.constant dense<0xFF800000> : vector<128xf32>
    %125 = vector.multi_reduction <maximumf>, %124, %cst_65 [0] : vector<256x128xf32> to vector<128xf32>
    %126 = vector.shape_cast %125 : vector<128xf32> to vector<1x128xf32>
    %cst_66 = arith.constant 0.000000e+00 : f32
    %127 = vector.broadcast %cst_66 : f32 to vector<1x128xf32>
    %128 = arith.maximumf %126, %127 : vector<1x128xf32>
    %129 = vector.broadcast %128 : vector<1x128xf32> to vector<256x128xf32>
    %130 = arith.subf %123, %129 : vector<256x128xf32>
    %131 = math.exp %130 : vector<256x128xf32>
    %132 = arith.mulf %4, %131 : vector<256x128xf32>
    %cst_67 = arith.constant dense<0.000000e+00> : vector<128xf32>
    %133 = vector.multi_reduction <add>, %132, %cst_67 [0] : vector<256x128xf32> to vector<128xf32>
    %134 = vector.shape_cast %133 : vector<128xf32> to vector<1x128xf32>
    %cst_68 = arith.constant 0.000000e+00 : f32
    %135 = vector.broadcast %cst_68 : f32 to vector<1x128xf32>
    %136 = arith.cmpf ogt, %134, %135 : vector<1x128xf32>
    %cst_69 = arith.constant 1.000000e+00 : f32
    %137 = vector.broadcast %cst_69 : f32 to vector<1x128xf32>
    %138 = arith.select %136, %134, %137 : vector<1x128xi1>, vector<1x128xf32>
    %139 = tpu.reciprocal %138 : vector<1x128xf32> -> vector<1x128xf32>
    %c3_70 = arith.constant 3 : index
    %c0_71 = arith.constant 0 : index
    %c0_72 = arith.constant 0 : index
    %140 = vector.load %arg2[%c3_70, %c0_71, %c0_72] : memref<4x128x32xf32, #tpu.memory_space<vmem>>, vector<1x128x32xf32>
    %141 = vector.shape_cast %140 : vector<1x128x32xf32> to vector<128x32xf32>
    %142 = tpu.transpose %139, [1, 0] : vector<1x128xf32> -> vector<128x1xf32>
    %143 = vector.broadcast %142 : vector<128x1xf32> to vector<128x32xf32>
    %144 = arith.mulf %141, %143 : vector<128x32xf32>
    %cst_73 = arith.constant dense<0.000000e+00> : vector<256x32xf32>
    %145 = tpu.matmul %132, %144, %cst_73 {dimension_numbers = #tpu.dot_dimension_numbers<[1], [0], [0], [1], [0, 0, 1, 1], [], []>} : vector<256x128xf32>, vector<128x32xf32>, vector<256x32xf32> -> vector<256x32xf32>
    %c0_74 = arith.constant 0 : index
    %c96 = arith.constant 96 : index
    %146 = vector.load %arg6[%c0_74, %c96] : memref<256x128xf32, #tpu.memory_space<vmem>>, vector<256x32xf32>
    %147 = arith.addf %146, %145 : vector<256x32xf32>
    %c0_75 = arith.constant 0 : index
    %c96_76 = arith.constant 96 : index
    %148 = vector.load %arg6[%c0_75, %c96_76] : memref<256x128xf32, #tpu.memory_space<vmem>>, vector<256x32xf32>
    tpu.vector_store %arg6[%c0_75, %c96_76], %147 {strides = array<i32>} : memref<256x128xf32, #tpu.memory_space<vmem>>, vector<256x32xf32>,
    %c1_i32 = arith.constant 1 : i32
    %149 = arith.cmpi eq, %arg0, %c1_i32 : i32
    %150 = arith.extui %149 : i1 to i32
    %c0_i32_77 = arith.constant 0 : i32
    %151 = arith.cmpi ne, %150, %c0_i32_77 : i32
    scf.if %151 {
      %c0_78 = arith.constant 0 : index
      %c0_79 = arith.constant 0 : index
      %152 = vector.load %arg6[%c0_78, %c0_79] : memref<256x128xf32, #tpu.memory_space<vmem>>, vector<256x128xf32>
      %cst_80 = arith.constant 0.000000e+00 : f32
      %153 = vector.broadcast %cst_80 : f32 to vector<256x128xf32>
      %154 = arith.cmpf ogt, %152, %153 : vector<256x128xf32>
      %cst_81 = arith.constant 0.000000e+00 : f32
      %155 = vector.broadcast %cst_81 : f32 to vector<256x128xf32>
      %156 = arith.minimumf %152, %155 : vector<256x128xf32>
      %157 = math.exp %156 : vector<256x128xf32>
      %cst_82 = arith.constant 1.000000e+00 : f32
      %158 = vector.broadcast %cst_82 : f32 to vector<256x128xf32>
      %159 = arith.subf %157, %158 : vector<256x128xf32>
      %160 = arith.select %154, %152, %159 : vector<256x128xi1>, vector<256x128xf32>
      %cst_83 = arith.constant 0.000000e+00 : f32
      %161 = vector.broadcast %cst_83 : f32 to vector<256x128xf32>
      %162 = arith.cmpf ogt, %160, %161 : vector<256x128xf32>
      %cst_84 = arith.constant 0.000000e+00 : f32
      %163 = vector.broadcast %cst_84 : f32 to vector<256x128xf32>
      %164 = arith.minimumf %160, %163 : vector<256x128xf32>
      %165 = math.exp %164 : vector<256x128xf32>
      %cst_85 = arith.constant 1.000000e+00 : f32
      %166 = vector.broadcast %cst_85 : f32 to vector<256x128xf32>
      %167 = arith.subf %165, %166 : vector<256x128xf32>
      %168 = arith.select %162, %160, %167 : vector<256x128xi1>, vector<256x128xf32>
      %c0_86 = arith.constant 0 : index
      %c0_87 = arith.constant 0 : index
      %169 = vector.load %arg5[%c0_86, %c0_87] : memref<256x128xf32, #tpu.memory_space<vmem>>, vector<256x128xf32>
      tpu.vector_store %arg5[%c0_86, %c0_87], %168 {strides = array<i32>} : memref<256x128xf32, #tpu.memory_space<vmem>>, vector<256x128xf32>,
    } else {
    }
    return
  }
  func.func @transform_0(%arg0: i32) -> (i32, i32) {
    %c0_i32 = arith.constant 0 : i32
    %c0_i32_0 = arith.constant 0 : i32
    return %c0_i32, %arg0 : i32, i32
  }
  func.func @transform_1(%arg0: i32) -> (i32, i32, i32) {
    %c0_i32 = arith.constant 0 : i32
    %c0_i32_0 = arith.constant 0 : i32
    %c0_i32_1 = arith.constant 0 : i32
    return %c0_i32, %arg0, %c0_i32_0 : i32, i32, i32
  }
  func.func @transform_2(%arg0: i32) -> (i32, i32, i32) {
    %c0_i32 = arith.constant 0 : i32
    %c0_i32_0 = arith.constant 0 : i32
    %c0_i32_1 = arith.constant 0 : i32
    %c0_i32_2 = arith.constant 0 : i32
    return %c0_i32, %c0_i32_0, %c0_i32_1 : i32, i32, i32
  }
  func.func @transform_3(%arg0: i32) -> (i32, i32, i32) {
    %c0_i32 = arith.constant 0 : i32
    %c0_i32_0 = arith.constant 0 : i32
    %c0_i32_1 = arith.constant 0 : i32
    return %c0_i32, %c0_i32_0, %arg0 : i32, i32, i32
  }
  func.func @transform_4(%arg0: i32) -> (i32, i32) {
    %c0_i32 = arith.constant 0 : i32
    %c0_i32_0 = arith.constant 0 : i32
    %c0_i32_1 = arith.constant 0 : i32
    return %c0_i32, %c0_i32_0 : i32, i32
  }
}

</mosaic_0001>

<llo_original>
// kernel: tpu_custom_call.1
$region0: #{tpu_custom_call.1}
  #allocation0 [shape = 'u32[]', space=smem, size = 0x4, offset = 0x4, fixed_abs, tag = 'smem constant byte address 0x4 - core index']
  #allocation1 [shape = 'u32[144,128]{1,0:T(1,128)}', space=vmem, size = 0x12000, scoped, tag = 'internal scratch']
  #allocation2 [shape = 'f32[256,128]{1,0:T(8,128)}', space=vmem, size = 0x20000, scoped, tag = 'scratch operand']
  #allocation12 [shape = 's32[]', space=sflag, size = 0x4, offset = 0, fixed_abs, tag = 'sflag constant byte address 0x0 - dummy sync flag']
  %s0 = inlined_call_operand.hbm [shape: s8[256,256], index: 0, kind: input, shape index: {}]
  %s1 = inlined_call_operand.hbm [shape: f32[4,256,32], index: 1, kind: input, shape index: {}]
  %s2 = inlined_call_operand.hbm [shape: f32[4,256,1], index: 2, kind: input, shape index: {}]
  %s3 = inlined_call_operand.hbm [shape: f32[4,1,256], index: 3, kind: input, shape index: {}]
  %s4 = inlined_call_operand.hbm [shape: f32[256,128], index: 4, kind: output, shape index: {}]
  %s5 = sld [smem:[#allocation0]]
  $region73: #{tpu_custom_call.1} parent=0
    _
  %s7 = ssub.s32 1, %s5
  %s8 = scalar_select 0, %s7, %s5
  $region1: #{tpu_custom_call.1} parent=0
    #allocation3 [shape = 'u8[65536]{0}', space=vmem, size = 0x10000, scoped, tag = 'input window, operand 0']
    #allocation4 [shape = 's32[2]{0}', space=sflag, size = 0x8, scoped, tag = 'scoped memory for tpu_custom_call.1']
    #allocation5 [shape = 's32[2]{0}', space=sflag, size = 0x8, scoped, tag = 'scoped memory for tpu_custom_call.1']
    #allocation6 [shape = 'u8[524288]{0}', space=vmem, size = 0x80000, scoped, tag = 'input window, operand 1']
    #allocation7 [shape = 's32[2]{0}', space=sflag, size = 0x8, scoped, tag = 'scoped memory for tpu_custom_call.1']
    #allocation8 [shape = 'u8[524288]{0}', space=vmem, size = 0x80000, scoped, tag = 'input window, operand 2, single buffered']
    #allocation9 [shape = 'u8[4096]{0}', space=vmem, size = 0x1000, scoped, tag = 'input window, operand 3']
    #allocation10 [shape = 's32[2]{0}', space=sflag, size = 0x8, scoped, tag = 'scoped memory for tpu_custom_call.1']
    #allocation11 [shape = 'u8[131072]{0}', space=vmem, size = 0x20000, scoped, tag = 'output window, operand 0, single buffered']
    %9 = vsyncpa [#allocation4], 0
    %s10 = scalar_lea.sflag [#allocation4], 1
    %11 = vsyncpa %s10, 0
    %12 = vsyncpa [#allocation7], 0
    %s13 = scalar_lea.sflag [#allocation7], 1
    %14 = vsyncpa %s13, 0
    %15 = vsyncpa [#allocation10], 0
    %s16 = scalar_lea.sflag [#allocation10], 1
    %17 = vsyncpa %s16, 0
    %18 = vsyncpa [#allocation5], 0
    loop: start=0, step=1, limit=4
    $region2: #{tpu_custom_call.1} parent=1 // loop_pre_header
      _
    $region3: #{tpu_custom_call.1} parent=1 // loop_header
      %s20 = sphi 0, %s24
      %p21 = scmp.ge.s32.totalorder %s20, 4
      %s30 = sphi 0, %s32
      %s33 = sphi 0, %s30
      %s34 = sphi 0, %s33
      %s50 = sphi 0, %s34
      %s56 = sphi 0, %s58
      %s59 = sphi 0, %s56
      %s60 = sphi 0, %s59
      %s76 = sphi 0, %s60
      %s80 = sphi 0, %s80
      %s82 = sphi 0, %s80
      %s83 = sphi 0, %s82
      %s97 = sphi 0, %s83
      %s103 = sphi 0, %s105
      %s106 = sphi 0, %s103
      %s107 = sphi 0, %s106
      %s123 = sphi 0, %s107
      %s127 = sphi 0, %s127
      %s129 = sphi 0, %s127
      %s130 = sphi 0, %s129
      %s144 = sphi 0, %s130
    $region4: #{tpu_custom_call.1} parent=1 // loop_header_branch
      %23 = sbr.rel (%p21) target = $region8
    $region5: #{tpu_custom_call.1} parent=1 // loop_body
      %s25 = ssub.s32 %s20, 1
      %s26 = ssub.s32 %s20, 2
      %s27 = sadd.s32 %s20, 1
      %s28 = ssub.s32 %s20, %s27
      %p29 = scmp.eq.s32.totalorder %s28, 0
      %s31 = sadd.s32 %s30, 1
      %s32 = scalar_select %p29, %s30, %s31
      %p35 = pneg %p29
      %p36 = scmp.eq.s32.totalorder %s20, 1
      %p37 = por %p35, %p36
      %p38 = scmp.ne.s32.totalorder %s30, %s33
      %p39 = scmp.eq.s32.totalorder %s20, 0
      %p40 = por %p38, %p39
      %p41 = scmp.ne.s32.totalorder %s30, %s33
      %p42 = scmp.eq.s32.totalorder %s25, 1
      %p43 = por %p41, %p42
      %p44 = scmp.ne.s32.totalorder %s33, %s34
      %p45 = scmp.eq.s32.totalorder %s25, 0
      %p46 = por %p44, %p45
      %p47 = scmp.ne.s32.totalorder %s33, %s34
      %p48 = scmp.eq.s32.totalorder %s26, 1
      %p49 = por %p47, %p48
      %p51 = scmp.ne.s32.totalorder %s34, %s50
      %p52 = scmp.eq.s32.totalorder %s26, 0
      %p53 = por %p51, %p52
      %s54 = ssub.s32 %s20, %s27
      %p55 = scmp.eq.s32.totalorder %s54, 0
      %s57 = sadd.s32 %s56, 1
      %s58 = scalar_select %p55, %s56, %s57
      %p61 = pneg %p55
      %p62 = scmp.eq.s32.totalorder %s20, 1
      %p63 = por %p61, %p62
      %p64 = scmp.ne.s32.totalorder %s56, %s59
      %p65 = scmp.eq.s32.totalorder %s20, 0
      %p66 = por %p64, %p65
      %p67 = scmp.ne.s32.totalorder %s56, %s59
      %p68 = scmp.eq.s32.totalorder %s25, 1
      %p69 = por %p67, %p68
      %p70 = scmp.ne.s32.totalorder %s59, %s60
      %p71 = scmp.eq.s32.totalorder %s25, 0
      %p72 = por %p70, %p71
      %p73 = scmp.ne.s32.totalorder %s59, %s60
      %p74 = scmp.eq.s32.totalorder %s26, 1
      %p75 = por %p73, %p74
      %p77 = scmp.ne.s32.totalorder %s60, %s76
      %p78 = scmp.eq.s32.totalorder %s26, 0
      %p79 = por %p77, %p78
      %s81 = sadd.s32 %s80, 1
      %p84 = scmp.eq.s32.totalorder %s20, 1
      %p85 = scmp.ne.s32.totalorder %s80, %s82
      %p86 = scmp.eq.s32.totalorder %s20, 0
      %p87 = por %p85, %p86
      %p88 = scmp.ne.s32.totalorder %s80, %s82
      %p89 = scmp.eq.s32.totalorder %s25, 1
      %p90 = por %p88, %p89
      %p91 = scmp.ne.s32.totalorder %s82, %s83
      %p92 = scmp.eq.s32.totalorder %s25, 0
      %p93 = por %p91, %p92
      %p94 = scmp.ne.s32.totalorder %s82, %s83
      %p95 = scmp.eq.s32.totalorder %s26, 1
      %p96 = por %p94, %p95
      %p98 = scmp.ne.s32.totalorder %s83, %s97
      %p99 = scmp.eq.s32.totalorder %s26, 0
      %p100 = por %p98, %p99
      %s101 = ssub.s32 %s20, %s27
      %p102 = scmp.eq.s32.totalorder %s101, 0
      %s104 = sadd.s32 %s103, 1
      %s105 = scalar_select %p102, %s103, %s104
      %p108 = pneg %p102
      %p109 = scmp.eq.s32.totalorder %s20, 1
      %p110 = por %p108, %p109
      %p111 = scmp.ne.s32.totalorder %s103, %s106
      %p112 = scmp.eq.s32.totalorder %s20, 0
      %p113 = por %p111, %p112
      %p114 = scmp.ne.s32.totalorder %s103, %s106
      %p115 = scmp.eq.s32.totalorder %s25, 1
      %p116 = por %p114, %p115
      %p117 = scmp.ne.s32.totalorder %s106, %s107
      %p118 = scmp.eq.s32.totalorder %s25, 0
      %p119 = por %p117, %p118
      %p120 = scmp.ne.s32.totalorder %s106, %s107
      %p121 = scmp.eq.s32.totalorder %s26, 1
      %p122 = por %p120, %p121
      %p124 = scmp.ne.s32.totalorder %s107, %s123
      %p125 = scmp.eq.s32.totalorder %s26, 0
      %p126 = por %p124, %p125
      %s128 = sadd.s32 %s127, 1
      %p131 = scmp.eq.s32.totalorder %s20, 1
      %p132 = scmp.ne.s32.totalorder %s127, %s129
      %p133 = scmp.eq.s32.totalorder %s20, 0
      %p134 = por %p132, %p133
      %p135 = scmp.ne.s32.totalorder %s127, %s129
      %p136 = scmp.eq.s32.totalorder %s25, 1
      %p137 = por %p135, %p136
      %p138 = scmp.ne.s32.totalorder %s129, %s130
      %p139 = scmp.eq.s32.totalorder %s25, 0
      %p140 = por %p138, %p139
      %p141 = scmp.ne.s32.totalorder %s129, %s130
      %p142 = scmp.eq.s32.totalorder %s26, 1
      %p143 = por %p141, %p142
      %p145 = scmp.ne.s32.totalorder %s130, %s144
      %p146 = scmp.eq.s32.totalorder %s26, 0
      %p147 = por %p145, %p146
      %p148 = scmp.le.s32.totalorder 1, %s20
      %p149 = scmp.lt.s32.totalorder %s20, 3
      %p150 = pnand %p148, %p149
      %p151 = pneg %p150
      // Predicated region
      $region9: #{tpu_custom_call.1} parent=5 // pred_check
        _
      $region10: #{tpu_custom_call.1} parent=5 // pred_check_branch
        %153 = sbr.rel (%p150) target = $region12
      $region11: #{tpu_custom_call.1} parent=5 // pred_region
        %s154 = ssub.s32 %s20, 1
        // Predicated region
        $region13: #{tpu_custom_call.1} parent=11 // pred_check
          %p155 = pneg %p93
        $region14: #{tpu_custom_call.1} parent=11 // pred_check_branch
          %157 = sbr.rel (%p155) target = $region16
        $region15: #{tpu_custom_call.1} parent=11 // pred_region
          %s159 = ssub.s32 16384, 16384
          %160 = vsyncadd [#allocation7], %s159
          %s161 = sshll.u32 [#allocation8], 4
          %s162 = int_to_ptr.vmem [resolvable:$true] %s161
          %167 = dma.hbm_to_vmem [thread:$0]  %s2, 16384, %s162, [#allocation7], 128, 128, 8
        $region16: #{tpu_custom_call.1} parent=11 // pred_fallthru
          _
      $region12: #{tpu_custom_call.1} parent=5 // pred_fallthru
        _
      %p168 = scmp.lt.s32.totalorder %s20, 2
      // Predicated region
      $region17: #{tpu_custom_call.1} parent=5 // pred_check
        %p169 = pneg %p168
      $region18: #{tpu_custom_call.1} parent=5 // pred_check_branch
        %171 = sbr.rel (%p169) target = $region20
      $region19: #{tpu_custom_call.1} parent=5 // pred_region
        // Predicated region
        $region21: #{tpu_custom_call.1} parent=19 // pred_check
          %p172 = pneg %p40
        $region22: #{tpu_custom_call.1} parent=19 // pred_check_branch
          %174 = sbr.rel (%p172) target = $region24
        $region23: #{tpu_custom_call.1} parent=19 // pred_region
          %s175 = sand.u32 %s30, 1
          %s176 = scalar_lea.sflag [#allocation4], %s175
          %s177 = sand.u32 %s30, 1
          %s178 = smul.addr %s177, 64
          %s179 = scalar_lea.vmem [#allocation3], %s178
          %s181 = ssub.s32 1024, 1024
          %182 = vsyncadd %s176, %s181
          %s183 = smul.addr %s20, 128
          %s184 = scalar_lea.hbm %s0, %s183
          %s185 = sshll.u32 %s179, 4
          %s186 = int_to_ptr.vmem [resolvable:$true] %s185
          %191 = dma.hbm_to_vmem [thread:$0]  %s184, 1024, %s186, %s176, 256, 128, 8
        $region24: #{tpu_custom_call.1} parent=19 // pred_fallthru
          _
        // Predicated region
        $region25: #{tpu_custom_call.1} parent=19 // pred_check
          %p192 = pneg %p66
        $region26: #{tpu_custom_call.1} parent=19 // pred_check_branch
          %194 = sbr.rel (%p192) target = $region28
        $region27: #{tpu_custom_call.1} parent=19 // pred_region
          #allocation13 [shape = 'u32[6]{0}', space=smem, size = 0x18, scoped, tag = 'DMA stride descriptor']
          %s195 = sand.u32 %s20, 1
          %s196 = scalar_lea.sflag [#allocation7], %s195
          %s197 = sand.u32 %s56, 1
          %s198 = smul.addr %s197, 512
          %s199 = scalar_lea.vmem [#allocation6], %s198
          %s200 = smul.u32 16, %s20
          %s202 = ssub.s32 8192, 8192
          %203 = vsyncadd %s196, %s202
          %s204 = smul.addr %s200, 128
          %s205 = scalar_lea.hbm %s1, %s204
          %s207 = sshll.u32 1, 14
          %s208 = sxor.u32 4294967295, %s207
          %s210 = sld [smem:[#allocation0]]
          %s211 = sadd.s32 2, %s210
          %s213 = sshll.u32 7, 26
          %s214 = sxor.u32 4294967295, %s213
          %s215 = sand.u32 0, %s214
          %s216 = sshll.u32 %s211, 26
          %s217 = sor.u32 %s215, %s216
          %s218 = sshll.u32 %s199, 4
          %s219 = int_to_ptr.vmem [resolvable:$true] %s218
          %225 = sst [smem:[#allocation13]] 4096
          %s226 = scalar_lea.smem [#allocation13], 1
          %227 = sst [smem:[%s226]] 2048
          %s228 = scalar_lea.smem [#allocation13], 2
          %229 = sst [smem:[%s228]] 16
          %s230 = scalar_lea.smem [#allocation13], 3
          %231 = sst [smem:[%s230]] 128
          %s232 = scalar_lea.smem [#allocation13], 4
          %233 = sst [smem:[%s232]] 128
          %s234 = scalar_lea.smem [#allocation13], 5
          %235 = sst [smem:[%s234]] 8
          %237 = dma.general %s205, 8192, %s219, %s196, [#allocation12], [#allocation13], %s217, 0
        $region28: #{tpu_custom_call.1} parent=19 // pred_fallthru
          _
        // Predicated region
        $region29: #{tpu_custom_call.1} parent=19 // pred_check
          %p238 = pneg %p113
        $region30: #{tpu_custom_call.1} parent=19 // pred_check_branch
          %240 = sbr.rel (%p238) target = $region32
        $region31: #{tpu_custom_call.1} parent=19 // pred_region
          %s241 = sand.u32 %s103, 1
          %s242 = scalar_lea.sflag [#allocation10], %s241
          %s243 = sand.u32 %s103, 1
          %s244 = smul.addr %s243, 4
          %s245 = scalar_lea.vmem [#allocation9], %s244
          %s247 = ssub.s32 64, 64
          %248 = vsyncadd %s242, %s247
          %s249 = smul.addr %s20, 16
          %s250 = scalar_lea.hbm %s3, %s249
          %s251 = sshll.u32 %s245, 4
          %s252 = int_to_ptr.vmem [resolvable:$true] %s251
          %257 = dma.hbm_to_vmem [thread:$0]  %s250, 64, %s252, %s242, 32, 16, 1
        $region32: #{tpu_custom_call.1} parent=19 // pred_fallthru
          _
      $region20: #{tpu_custom_call.1} parent=5 // pred_fallthru
        _
      %p258 = scmp.le.s32.totalorder 1, %s20
      %p259 = scmp.lt.s32.totalorder %s20, 3
      %p260 = pnand %p258, %p259
      %p261 = pneg %p260
      // Predicated region
      $region33: #{tpu_custom_call.1} parent=5 // pred_check
        _
      $region34: #{tpu_custom_call.1} parent=5 // pred_check_branch
        %263 = sbr.rel (%p260) target = $region36
      $region35: #{tpu_custom_call.1} parent=5 // pred_region
        %s264 = ssub.s32 %s20, 1
        %s265 = sand.u32 %s33, 1
        %s266 = scalar_lea.sflag [#allocation4], %s265
        %s267 = sand.u32 %s33, 1
        %s268 = smul.addr %s267, 64
        %s269 = scalar_lea.vmem [#allocation3], %s268
        // Predicated region
        $region37: #{tpu_custom_call.1} parent=35 // pred_check
          %p270 = pneg %p46
        $region38: #{tpu_custom_call.1} parent=35 // pred_check_branch
          %272 = sbr.rel (%p270) target = $region40
        $region39: #{tpu_custom_call.1} parent=35 // pred_region
          %273 = dma.done %s266, 1024
        $region40: #{tpu_custom_call.1} parent=35 // pred_fallthru
          _
        %s274 = sand.u32 %s25, 1
        %s275 = scalar_lea.sflag [#allocation7], %s274
        %s276 = sand.u32 %s59, 1
        %s277 = smul.addr %s276, 512
        %s278 = scalar_lea.vmem [#allocation6], %s277
        // Predicated region
        $region41: #{tpu_custom_call.1} parent=35 // pred_check
          %p279 = pneg %p72
        $region42: #{tpu_custom_call.1} parent=35 // pred_check_branch
          %281 = sbr.rel (%p279) target = $region44
        $region43: #{tpu_custom_call.1} parent=35 // pred_region
          %282 = dma.done %s275, 8192
        $region44: #{tpu_custom_call.1} parent=35 // pred_fallthru
          _
        // Predicated region
        $region45: #{tpu_custom_call.1} parent=35 // pred_check
          %p283 = pneg %p93
        $region46: #{tpu_custom_call.1} parent=35 // pred_check_branch
          %285 = sbr.rel (%p283) target = $region48
        $region47: #{tpu_custom_call.1} parent=35 // pred_region
          %286 = dma.done [#allocation7], 16384
        $region48: #{tpu_custom_call.1} parent=35 // pred_fallthru
          _
        %s287 = sand.u32 %s106, 1
        %s288 = scalar_lea.sflag [#allocation10], %s287
        %s289 = sand.u32 %s106, 1
        %s290 = smul.addr %s289, 4
        %s291 = scalar_lea.vmem [#allocation9], %s290
        // Predicated region
        $region49: #{tpu_custom_call.1} parent=35 // pred_check
          %p292 = pneg %p119
        $region50: #{tpu_custom_call.1} parent=35 // pred_check_branch
          %294 = sbr.rel (%p292) target = $region52
        $region51: #{tpu_custom_call.1} parent=35 // pred_region
          %295 = dma.done %s288, 64
        $region52: #{tpu_custom_call.1} parent=35 // pred_fallthru
          _
        %s296 = sand.u32 %s33, 1
        %s297 = scalar_lea.sflag [#allocation4], %s296
        %s298 = sand.u32 %s33, 1
        %s299 = smul.addr %s298, 64
        %s300 = scalar_lea.vmem [#allocation3], %s299
        %p301 = pneg %p46
        %p302 = pneg %p43
        %s303 = sand.u32 %s25, 1
        %s304 = scalar_lea.sflag [#allocation7], %s303
        %s305 = sand.u32 %s59, 1
        %s306 = smul.addr %s305, 512
        %s307 = scalar_lea.vmem [#allocation6], %s306
        %p308 = pneg %p72
        %p309 = pneg %p69
        %p310 = pneg %p93
        %p311 = pneg %p90
        %s312 = sand.u32 %s106, 1
        %s313 = scalar_lea.sflag [#allocation10], %s312
        %s314 = sand.u32 %s106, 1
        %s315 = smul.addr %s314, 4
        %s316 = scalar_lea.vmem [#allocation9], %s315
        %p317 = pneg %p119
        %p318 = pneg %p116
        %p319 = pneg %p140
        %p320 = pneg %p137
        %s321 = smul.u32 16, %s25
        %p322 = scmp.eq.s32.totalorder %s25, 0
        // Predicated region
        $region53: #{tpu_custom_call.1} parent=35 // pred_check
          %p323 = pneg %p322
        $region54: #{tpu_custom_call.1} parent=35 // pred_check_branch
          %325 = sbr.rel (%p323) target = $region56
        $region55: #{tpu_custom_call.1} parent=35 // pred_region
          %326 = vst [vmem:[#allocation2] sm:$0xff] 0.0
          %327 = vst [vmem:[#allocation2 + $0x8] sm:$0xff] 0.0
          %328 = vst [vmem:[#allocation2 + $0x10] sm:$0xff] 0.0
          %329 = vst [vmem:[#allocation2 + $0x18] sm:$0xff] 0.0
          %330 = vst [vmem:[#allocation2 + $0x20] sm:$0xff] 0.0
          %331 = vst [vmem:[#allocation2 + $0x28] sm:$0xff] 0.0
          %332 = vst [vmem:[#allocation2 + $0x30] sm:$0xff] 0.0
          %333 = vst [vmem:[#allocation2 + $0x38] sm:$0xff] 0.0
          %334 = vst [vmem:[#allocation2 + $0x40] sm:$0xff] 0.0
          %335 = vst [vmem:[#allocation2 + $0x48] sm:$0xff] 0.0
          %336 = vst [vmem:[#allocation2 + $0x50] sm:$0xff] 0.0
          %337 = vst [vmem:[#allocation2 + $0x58] sm:$0xff] 0.0
          %338 = vst [vmem:[#allocation2 + $0x60] sm:$0xff] 0.0
          %339 = vst [vmem:[#allocation2 + $0x68] sm:$0xff] 0.0
          %340 = vst [vmem:[#allocation2 + $0x70] sm:$0xff] 0.0
          %341 = vst [vmem:[#allocation2 + $0x78] sm:$0xff] 0.0
          %342 = vst [vmem:[#allocation2 + $0x80] sm:$0xff] 0.0
          %343 = vst [vmem:[#allocation2 + $0x88] sm:$0xff] 0.0
          %344 = vst [vmem:[#allocation2 + $0x90] sm:$0xff] 0.0
          %345 = vst [vmem:[#allocation2 + $0x98] sm:$0xff] 0.0
          %346 = vst [vmem:[#allocation2 + $0xa0] sm:$0xff] 0.0
          %347 = vst [vmem:[#allocation2 + $0xa8] sm:$0xff] 0.0
          %348 = vst [vmem:[#allocation2 + $0xb0] sm:$0xff] 0.0
          %349 = vst [vmem:[#allocation2 + $0xb8] sm:$0xff] 0.0
          %350 = vst [vmem:[#allocation2 + $0xc0] sm:$0xff] 0.0
          %351 = vst [vmem:[#allocation2 + $0xc8] sm:$0xff] 0.0
          %352 = vst [vmem:[#allocation2 + $0xd0] sm:$0xff] 0.0
          %353 = vst [vmem:[#allocation2 + $0xd8] sm:$0xff] 0.0
          %354 = vst [vmem:[#allocation2 + $0xe0] sm:$0xff] 0.0
          %355 = vst [vmem:[#allocation2 + $0xe8] sm:$0xff] 0.0
          %356 = vst [vmem:[#allocation2 + $0xf0] sm:$0xff] 0.0
          %357 = vst [vmem:[#allocation2 + $0xf8] sm:$0xff] 0.0
        $region56: #{tpu_custom_call.1} parent=35 // pred_fallthru
          _
        %v358 = vld [vmem:[%s269] sm:$0xff]
        %v359 = vld [vmem:[%s269 + $0x8] sm:$0xff]
        %v360 = vld [vmem:[%s269 + $0x10] sm:$0xff]
        %v361 = vld [vmem:[%s269 + $0x18] sm:$0xff]
        %v362 = vld [vmem:[%s269 + $0x20] sm:$0xff]
        %v363 = vld [vmem:[%s269 + $0x28] sm:$0xff]
        %v364 = vld [vmem:[%s269 + $0x30] sm:$0xff]
        %v365 = vld [vmem:[%s269 + $0x38] sm:$0xff]
        %v366 = vunpack.c.0.s8 %v358
        %v367 = vunpack.c.1.s8 %v358
        %v368 = vunpack.c.2.s8 %v358
        %v369 = vunpack.c.3.s8 %v358
        %v370 = vunpack.c.0.s8 %v359
        %v371 = vunpack.c.1.s8 %v359
        %v372 = vunpack.c.2.s8 %v359
        %v373 = vunpack.c.3.s8 %v359
        %v374 = vunpack.c.0.s8 %v360
        %v375 = vunpack.c.1.s8 %v360
        %v376 = vunpack.c.2.s8 %v360
        %v377 = vunpack.c.3.s8 %v360
        %v378 = vunpack.c.0.s8 %v361
        %v379 = vunpack.c.1.s8 %v361
        %v380 = vunpack.c.2.s8 %v361
        %v381 = vunpack.c.3.s8 %v361
        %v382 = vunpack.c.0.s8 %v362
        %v383 = vunpack.c.1.s8 %v362
        %v384 = vunpack.c.2.s8 %v362
        %v385 = vunpack.c.3.s8 %v362
        %v386 = vunpack.c.0.s8 %v363
        %v387 = vunpack.c.1.s8 %v363
        %v388 = vunpack.c.2.s8 %v363
        %v389 = vunpack.c.3.s8 %v363
        %v390 = vunpack.c.0.s8 %v364
        %v391 = vunpack.c.1.s8 %v364
        %v392 = vunpack.c.2.s8 %v364
        %v393 = vunpack.c.3.s8 %v364
        %v394 = vunpack.c.0.s8 %v365
        %v395 = vunpack.c.1.s8 %v365
        %v396 = vunpack.c.2.s8 %v365
        %v397 = vunpack.c.3.s8 %v365
        %v398 = vcvt.s32.f32 %v366
        %v399 = vcvt.s32.f32 %v367
        %v400 = vcvt.s32.f32 %v368
        %v401 = vcvt.s32.f32 %v369
        %v402 = vcvt.s32.f32 %v370
        %v403 = vcvt.s32.f32 %v371
        %v404 = vcvt.s32.f32 %v372
        %v405 = vcvt.s32.f32 %v373
        %v406 = vcvt.s32.f32 %v374
        %v407 = vcvt.s32.f32 %v375
        %v408 = vcvt.s32.f32 %v376
        %v409 = vcvt.s32.f32 %v377
        %v410 = vcvt.s32.f32 %v378
        %v411 = vcvt.s32.f32 %v379
        %v412 = vcvt.s32.f32 %v380
        %v413 = vcvt.s32.f32 %v381
        %v414 = vcvt.s32.f32 %v382
        %v415 = vcvt.s32.f32 %v383
        %v416 = vcvt.s32.f32 %v384
        %v417 = vcvt.s32.f32 %v385
        %v418 = vcvt.s32.f32 %v386
        %v419 = vcvt.s32.f32 %v387
        %v420 = vcvt.s32.f32 %v388
        %v421 = vcvt.s32.f32 %v389
        %v422 = vcvt.s32.f32 %v390
        %v423 = vcvt.s32.f32 %v391
        %v424 = vcvt.s32.f32 %v392
        %v425 = vcvt.s32.f32 %v393
        %v426 = vcvt.s32.f32 %v394
        %v427 = vcvt.s32.f32 %v395
        %v428 = vcvt.s32.f32 %v396
        %v429 = vcvt.s32.f32 %v397
        %v430 = vsub.f32 %v398, 1.0
        %v431 = vsub.f32 %v399, 1.0
        %v432 = vsub.f32 %v400, 1.0
        %v433 = vsub.f32 %v401, 1.0
        %v434 = vsub.f32 %v402, 1.0
        %v435 = vsub.f32 %v403, 1.0
        %v436 = vsub.f32 %v404, 1.0
        %v437 = vsub.f32 %v405, 1.0
        %v438 = vsub.f32 %v406, 1.0
        %v439 = vsub.f32 %v407, 1.0
        %v440 = vsub.f32 %v408, 1.0
        %v441 = vsub.f32 %v409, 1.0
        %v442 = vsub.f32 %v410, 1.0
        %v443 = vsub.f32 %v411, 1.0
        %v444 = vsub.f32 %v412, 1.0
        %v445 = vsub.f32 %v413, 1.0
        %v446 = vsub.f32 %v414, 1.0
        %v447 = vsub.f32 %v415, 1.0
        %v448 = vsub.f32 %v416, 1.0
        %v449 = vsub.f32 %v417, 1.0
        %v450 = vsub.f32 %v418, 1.0
        %v451 = vsub.f32 %v419, 1.0
        %v452 = vsub.f32 %v420, 1.0
        %v453 = vsub.f32 %v421, 1.0
        %v454 = vsub.f32 %v422, 1.0
        %v455 = vsub.f32 %v423, 1.0
        %v456 = vsub.f32 %v424, 1.0
        %v457 = vsub.f32 %v425, 1.0
        %v458 = vsub.f32 %v426, 1.0
        %v459 = vsub.f32 %v427, 1.0
        %v460 = vsub.f32 %v428, 1.0
        %v461 = vsub.f32 %v429, 1.0
        %v462 = vmul.f32 %v430, 1e+30
        %v463 = vmul.f32 %v431, 1e+30
        %v464 = vmul.f32 %v432, 1e+30
        %v465 = vmul.f32 %v433, 1e+30
        %v466 = vmul.f32 %v434, 1e+30
        %v467 = vmul.f32 %v435, 1e+30
        %v468 = vmul.f32 %v436, 1e+30
        %v469 = vmul.f32 %v437, 1e+30
        %v470 = vmul.f32 %v438, 1e+30
        %v471 = vmul.f32 %v439, 1e+30
        %v472 = vmul.f32 %v440, 1e+30
        %v473 = vmul.f32 %v441, 1e+30
        %v474 = vmul.f32 %v442, 1e+30
        %v475 = vmul.f32 %v443, 1e+30
        %v476 = vmul.f32 %v444, 1e+30
        %v477 = vmul.f32 %v445, 1e+30
        %v478 = vmul.f32 %v446, 1e+30
        %v479 = vmul.f32 %v447, 1e+30
        %v480 = vmul.f32 %v448, 1e+30
        %v481 = vmul.f32 %v449, 1e+30
        %v482 = vmul.f32 %v450, 1e+30
        %v483 = vmul.f32 %v451, 1e+30
        %v484 = vmul.f32 %v452, 1e+30
        %v485 = vmul.f32 %v453, 1e+30
        %v486 = vmul.f32 %v454, 1e+30
        %v487 = vmul.f32 %v455, 1e+30
        %v488 = vmul.f32 %v456, 1e+30
        %v489 = vmul.f32 %v457, 1e+30
        %v490 = vmul.f32 %v458, 1e+30
        %v491 = vmul.f32 %v459, 1e+30
        %v492 = vmul.f32 %v460, 1e+30
        %v493 = vmul.f32 %v461, 1e+30
        %v494 = vld [vmem:[#allocation8] sm:$0xff]
        %v495 = vld [vmem:[#allocation8 + $0x8] sm:$0xff]
        %v496 = vld [vmem:[#allocation8 + $0x10] sm:$0xff]
        %v497 = vld [vmem:[#allocation8 + $0x18] sm:$0xff]
        %v498 = vld [vmem:[#allocation8 + $0x20] sm:$0xff]
        %v499 = vld [vmem:[#allocation8 + $0x28] sm:$0xff]
        %v500 = vld [vmem:[#allocation8 + $0x30] sm:$0xff]
        %v501 = vld [vmem:[#allocation8 + $0x38] sm:$0xff]
        %v502 = vld [vmem:[#allocation8 + $0x40] sm:$0xff]
        %v503 = vld [vmem:[#allocation8 + $0x48] sm:$0xff]
        %v504 = vld [vmem:[#allocation8 + $0x50] sm:$0xff]
        %v505 = vld [vmem:[#allocation8 + $0x58] sm:$0xff]
        %v506 = vld [vmem:[#allocation8 + $0x60] sm:$0xff]
        %v507 = vld [vmem:[#allocation8 + $0x68] sm:$0xff]
        %v508 = vld [vmem:[#allocation8 + $0x70] sm:$0xff]
        %v509 = vld [vmem:[#allocation8 + $0x78] sm:$0xff]
        %v510 = vld [vmem:[#allocation8 + $0x80] sm:$0xff]
        %v511 = vld [vmem:[#allocation8 + $0x88] sm:$0xff]
        %v512 = vld [vmem:[#allocation8 + $0x90] sm:$0xff]
        %v513 = vld [vmem:[#allocation8 + $0x98] sm:$0xff]
        %v514 = vld [vmem:[#allocation8 + $0xa0] sm:$0xff]
        %v515 = vld [vmem:[#allocation8 + $0xa8] sm:$0xff]
        %v516 = vld [vmem:[#allocation8 + $0xb0] sm:$0xff]
        %v517 = vld [vmem:[#allocation8 + $0xb8] sm:$0xff]
        %v518 = vld [vmem:[#allocation8 + $0xc0] sm:$0xff]
        %v519 = vld [vmem:[#allocation8 + $0xc8] sm:$0xff]
        %v520 = vld [vmem:[#allocation8 + $0xd0] sm:$0xff]
        %v521 = vld [vmem:[#allocation8 + $0xd8] sm:$0xff]
        %v522 = vld [vmem:[#allocation8 + $0xe0] sm:$0xff]
        %v523 = vld [vmem:[#allocation8 + $0xe8] sm:$0xff]
        %v524 = vld [vmem:[#allocation8 + $0xf0] sm:$0xff]
        %v525 = vld [vmem:[#allocation8 + $0xf8] sm:$0xff]
        %v526 = vld [vmem:[%s291] sm:$0x1]
        %528 = vset.pattern.permute.xlu0 0
        %529 = vperm.xlu0 %528, %v494
        %v530 = vpop.permute.xlu0 %529
        %533 = vset.pattern.permute.xlu0 0
        %534 = vperm.xlu0 %533, %v495
        %v535 = vpop.permute.xlu0 %534
        %538 = vset.pattern.permute.xlu0 0
        %539 = vperm.xlu0 %538, %v496
        %v540 = vpop.permute.xlu0 %539
        %543 = vset.pattern.permute.xlu0 0
        %544 = vperm.xlu0 %543, %v497
        %v545 = vpop.permute.xlu0 %544
        %548 = vset.pattern.permute.xlu0 0
        %549 = vperm.xlu0 %548, %v498
        %v550 = vpop.permute.xlu0 %549
        %553 = vset.pattern.permute.xlu0 0
        %554 = vperm.xlu0 %553, %v499
        %v555 = vpop.permute.xlu0 %554
        %558 = vset.pattern.permute.xlu0 0
        %559 = vperm.xlu0 %558, %v500
        %v560 = vpop.permute.xlu0 %559
        %563 = vset.pattern.permute.xlu0 0
        %564 = vperm.xlu0 %563, %v501
        %v565 = vpop.permute.xlu0 %564
        %568 = vset.pattern.permute.xlu0 0
        %569 = vperm.xlu0 %568, %v502
        %v570 = vpop.permute.xlu0 %569
        %573 = vset.pattern.permute.xlu0 0
        %574 = vperm.xlu0 %573, %v503
        %v575 = vpop.permute.xlu0 %574
        %578 = vset.pattern.permute.xlu0 0
        %579 = vperm.xlu0 %578, %v504
        %v580 = vpop.permute.xlu0 %579
        %583 = vset.pattern.permute.xlu0 0
        %584 = vperm.xlu0 %583, %v505
        %v585 = vpop.permute.xlu0 %584
        %588 = vset.pattern.permute.xlu0 0
        %589 = vperm.xlu0 %588, %v506
        %v590 = vpop.permute.xlu0 %589
        %593 = vset.pattern.permute.xlu0 0
        %594 = vperm.xlu0 %593, %v507
        %v595 = vpop.permute.xlu0 %594
        %598 = vset.pattern.permute.xlu0 0
        %599 = vperm.xlu0 %598, %v508
        %v600 = vpop.permute.xlu0 %599
        %603 = vset.pattern.permute.xlu0 0
        %604 = vperm.xlu0 %603, %v509
        %v605 = vpop.permute.xlu0 %604
        %608 = vset.pattern.permute.xlu0 0
        %609 = vperm.xlu0 %608, %v510
        %v610 = vpop.permute.xlu0 %609
        %613 = vset.pattern.permute.xlu0 0
        %614 = vperm.xlu0 %613, %v511
        %v615 = vpop.permute.xlu0 %614
        %618 = vset.pattern.permute.xlu0 0
        %619 = vperm.xlu0 %618, %v512
        %v620 = vpop.permute.xlu0 %619
        %623 = vset.pattern.permute.xlu0 0
        %624 = vperm.xlu0 %623, %v513
        %v625 = vpop.permute.xlu0 %624
        %628 = vset.pattern.permute.xlu0 0
        %629 = vperm.xlu0 %628, %v514
        %v630 = vpop.permute.xlu0 %629
        %633 = vset.pattern.permute.xlu0 0
        %634 = vperm.xlu0 %633, %v515
        %v635 = vpop.permute.xlu0 %634
        %638 = vset.pattern.permute.xlu0 0
        %639 = vperm.xlu0 %638, %v516
        %v640 = vpop.permute.xlu0 %639
        %643 = vset.pattern.permute.xlu0 0
        %644 = vperm.xlu0 %643, %v517
        %v645 = vpop.permute.xlu0 %644
        %648 = vset.pattern.permute.xlu0 0
        %649 = vperm.xlu0 %648, %v518
        %v650 = vpop.permute.xlu0 %649
        %653 = vset.pattern.permute.xlu0 0
        %654 = vperm.xlu0 %653, %v519
        %v655 = vpop.permute.xlu0 %654
        %658 = vset.pattern.permute.xlu0 0
        %659 = vperm.xlu0 %658, %v520
        %v660 = vpop.permute.xlu0 %659
        %663 = vset.pattern.permute.xlu0 0
        %664 = vperm.xlu0 %663, %v521
        %v665 = vpop.permute.xlu0 %664
        %668 = vset.pattern.permute.xlu0 0
        %669 = vperm.xlu0 %668, %v522
        %v670 = vpop.permute.xlu0 %669
        %673 = vset.pattern.permute.xlu0 0
        %674 = vperm.xlu0 %673, %v523
        %v675 = vpop.permute.xlu0 %674
        %678 = vset.pattern.permute.xlu0 0
        %679 = vperm.xlu0 %678, %v524
        %v680 = vpop.permute.xlu0 %679
        %683 = vset.pattern.permute.xlu0 0
        %684 = vperm.xlu0 %683, %v525
        %v685 = vpop.permute.xlu0 %684
        %v688 = vlaneseq
        %v689 = vshrl.u32 %v688, 7
        %v690 = vsub.s32 0, %v689
        %v691 = vrot.slane %v526, %v690
        %v693 = vadd.f32 %v530, %v691
        %v694 = vadd.f32 %v535, %v691
        %v695 = vadd.f32 %v540, %v691
        %v696 = vadd.f32 %v545, %v691
        %v697 = vadd.f32 %v550, %v691
        %v698 = vadd.f32 %v555, %v691
        %v699 = vadd.f32 %v560, %v691
        %v700 = vadd.f32 %v565, %v691
        %v701 = vadd.f32 %v570, %v691
        %v702 = vadd.f32 %v575, %v691
        %v703 = vadd.f32 %v580, %v691
        %v704 = vadd.f32 %v585, %v691
        %v705 = vadd.f32 %v590, %v691
        %v706 = vadd.f32 %v595, %v691
        %v707 = vadd.f32 %v600, %v691
        %v708 = vadd.f32 %v605, %v691
        %v709 = vadd.f32 %v610, %v691
        %v710 = vadd.f32 %v615, %v691
        %v711 = vadd.f32 %v620, %v691
        %v712 = vadd.f32 %v625, %v691
        %v713 = vadd.f32 %v630, %v691
        %v714 = vadd.f32 %v635, %v691
        %v715 = vadd.f32 %v640, %v691
        %v716 = vadd.f32 %v645, %v691
        %v717 = vadd.f32 %v650, %v691
        %v718 = vadd.f32 %v655, %v691
        %v719 = vadd.f32 %v660, %v691
        %v720 = vadd.f32 %v665, %v691
        %v721 = vadd.f32 %v670, %v691
        %v722 = vadd.f32 %v675, %v691
        %v723 = vadd.f32 %v680, %v691
        %v724 = vadd.f32 %v685, %v691
        %v725 = vmul.f32 %v693, 0.2
        %v726 = vmul.f32 %v694, 0.2
        %v727 = vmul.f32 %v695, 0.2
        %v728 = vmul.f32 %v696, 0.2
        %v729 = vmul.f32 %v697, 0.2
        %v730 = vmul.f32 %v698, 0.2
        %v731 = vmul.f32 %v699, 0.2
        %v732 = vmul.f32 %v700, 0.2
        %v733 = vmul.f32 %v701, 0.2
        %v734 = vmul.f32 %v702, 0.2
        %v735 = vmul.f32 %v703, 0.2
        %v736 = vmul.f32 %v704, 0.2
        %v737 = vmul.f32 %v705, 0.2
        %v738 = vmul.f32 %v706, 0.2
        %v739 = vmul.f32 %v707, 0.2
        %v740 = vmul.f32 %v708, 0.2
        %v741 = vmul.f32 %v709, 0.2
        %v742 = vmul.f32 %v710, 0.2
        %v743 = vmul.f32 %v711, 0.2
        %v744 = vmul.f32 %v712, 0.2
        %v745 = vmul.f32 %v713, 0.2
        %v746 = vmul.f32 %v714, 0.2
        %v747 = vmul.f32 %v715, 0.2
        %v748 = vmul.f32 %v716, 0.2
        %v749 = vmul.f32 %v717, 0.2
        %v750 = vmul.f32 %v718, 0.2
        %v751 = vmul.f32 %v719, 0.2
        %v752 = vmul.f32 %v720, 0.2
        %v753 = vmul.f32 %v721, 0.2
        %v754 = vmul.f32 %v722, 0.2
        %v755 = vmul.f32 %v723, 0.2
        %v756 = vmul.f32 %v724, 0.2
        %v757 = vmax.f32 %v693, %v725
        %v758 = vmax.f32 %v694, %v726
        %v759 = vmax.f32 %v695, %v727
        %v760 = vmax.f32 %v696, %v728
        %v761 = vmax.f32 %v697, %v729
        %v762 = vmax.f32 %v698, %v730
        %v763 = vmax.f32 %v699, %v731
        %v764 = vmax.f32 %v700, %v732
        %v765 = vmax.f32 %v701, %v733
        %v766 = vmax.f32 %v702, %v734
        %v767 = vmax.f32 %v703, %v735
        %v768 = vmax.f32 %v704, %v736
        %v769 = vmax.f32 %v705, %v737
        %v770 = vmax.f32 %v706, %v738
        %v771 = vmax.f32 %v707, %v739
        %v772 = vmax.f32 %v708, %v740
        %v773 = vmax.f32 %v709, %v741
        %v774 = vmax.f32 %v710, %v742
        %v775 = vmax.f32 %v711, %v743
        %v776 = vmax.f32 %v712, %v744
        %v777 = vmax.f32 %v713, %v745
        %v778 = vmax.f32 %v714, %v746
        %v779 = vmax.f32 %v715, %v747
        %v780 = vmax.f32 %v716, %v748
        %v781 = vmax.f32 %v717, %v749
        %v782 = vmax.f32 %v718, %v750
        %v783 = vmax.f32 %v719, %v751
        %v784 = vmax.f32 %v720, %v752
        %v785 = vmax.f32 %v721, %v753
        %v786 = vmax.f32 %v722, %v754
        %v787 = vmax.f32 %v723, %v755
        %v788 = vmax.f32 %v724, %v756
        %v789 = vadd.f32 %v757, %v462
        %v790 = vadd.f32 %v758, %v463
        %v791 = vadd.f32 %v759, %v464
        %v792 = vadd.f32 %v760, %v465
        %v793 = vadd.f32 %v761, %v466
        %v794 = vadd.f32 %v762, %v467
        %v795 = vadd.f32 %v763, %v468
        %v796 = vadd.f32 %v764, %v469
        %v797 = vadd.f32 %v765, %v470
        %v798 = vadd.f32 %v766, %v471
        %v799 = vadd.f32 %v767, %v472
        %v800 = vadd.f32 %v768, %v473
        %v801 = vadd.f32 %v769, %v474
        %v802 = vadd.f32 %v770, %v475
        %v803 = vadd.f32 %v771, %v476
        %v804 = vadd.f32 %v772, %v477
        %v805 = vadd.f32 %v773, %v478
        %v806 = vadd.f32 %v774, %v479
        %v807 = vadd.f32 %v775, %v480
        %v808 = vadd.f32 %v776, %v481
        %v809 = vadd.f32 %v777, %v482
        %v810 = vadd.f32 %v778, %v483
        %v811 = vadd.f32 %v779, %v484
        %v812 = vadd.f32 %v780, %v485
        %v813 = vadd.f32 %v781, %v486
        %v814 = vadd.f32 %v782, %v487
        %v815 = vadd.f32 %v783, %v488
        %v816 = vadd.f32 %v784, %v489
        %v817 = vadd.f32 %v785, %v490
        %v818 = vadd.f32 %v786, %v491
        %v819 = vadd.f32 %v787, %v492
        %v820 = vadd.f32 %v788, %v493
        %v821 = vmax.f32 %v789, %v793
        %v822 = vmax.f32 %v790, %v794
        %v823 = vmax.f32 %v791, %v795
        %v824 = vmax.f32 %v792, %v796
        %v825 = vmax.f32 %v821, %v797
        %v826 = vmax.f32 %v822, %v798
        %v827 = vmax.f32 %v823, %v799
        %v828 = vmax.f32 %v824, %v800
        %v829 = vmax.f32 %v825, %v801
        %v830 = vmax.f32 %v826, %v802
        %v831 = vmax.f32 %v827, %v803
        %v832 = vmax.f32 %v828, %v804
        %v833 = vmax.f32 %v829, %v805
        %v834 = vmax.f32 %v830, %v806
        %v835 = vmax.f32 %v831, %v807
        %v836 = vmax.f32 %v832, %v808
        %v837 = vmax.f32 %v833, %v809
        %v838 = vmax.f32 %v834, %v810
        %v839 = vmax.f32 %v835, %v811
        %v840 = vmax.f32 %v836, %v812
        %v841 = vmax.f32 %v837, %v813
        %v842 = vmax.f32 %v838, %v814
        %v843 = vmax.f32 %v839, %v815
        %v844 = vmax.f32 %v840, %v816
        %v845 = vmax.f32 %v841, %v817
        %v846 = vmax.f32 %v842, %v818
        %v847 = vmax.f32 %v843, %v819
        %v848 = vmax.f32 %v844, %v820
        %v849 = vmax.f32 %v845, %v846
        %v850 = vmax.f32 %v847, %v848
        %v851 = vmax.f32 %v849, %v850
        %v852 = vrot.slane %v851, 4
        %v853 = vmax.f32 %v851, %v852
        %v854 = vrot.slane %v853, 2
        %v855 = vmax.f32 %v853, %v854
        %v856 = vrot.slane %v855, 1
        %v857 = vmax.f32 %v855, %v856
        %v858 = vmax.f32 %v857, 0.0
        %v859 = vsub.f32 %v757, %v858
        %v860 = vsub.f32 %v758, %v858
        %v861 = vsub.f32 %v759, %v858
        %v862 = vsub.f32 %v760, %v858
        %v863 = vsub.f32 %v761, %v858
        %v864 = vsub.f32 %v762, %v858
        %v865 = vsub.f32 %v763, %v858
        %v866 = vsub.f32 %v764, %v858
        %v867 = vsub.f32 %v765, %v858
        %v868 = vsub.f32 %v766, %v858
        %v869 = vsub.f32 %v767, %v858
        %v870 = vsub.f32 %v768, %v858
        %v871 = vsub.f32 %v769, %v858
        %v872 = vsub.f32 %v770, %v858
        %v873 = vsub.f32 %v771, %v858
        %v874 = vsub.f32 %v772, %v858
        %v875 = vsub.f32 %v773, %v858
        %v876 = vsub.f32 %v774, %v858
        %v877 = vsub.f32 %v775, %v858
        %v878 = vsub.f32 %v776, %v858
        %v879 = vsub.f32 %v777, %v858
        %v880 = vsub.f32 %v778, %v858
        %v881 = vsub.f32 %v779, %v858
        %v882 = vsub.f32 %v780, %v858
        %v883 = vsub.f32 %v781, %v858
        %v884 = vsub.f32 %v782, %v858
        %v885 = vsub.f32 %v783, %v858
        %v886 = vsub.f32 %v784, %v858
        %v887 = vsub.f32 %v785, %v858
        %v888 = vsub.f32 %v786, %v858
        %v889 = vsub.f32 %v787, %v858
        %v890 = vsub.f32 %v788, %v858
        %v891 = vmul.f32 %v859, 1.442695
        %v892 = vpow.pop %v891
        %v893 = vmul.f32 %v860, 1.442695
        %v894 = vpow.pop %v893
        %v895 = vmul.f32 %v861, 1.442695
        %v896 = vpow.pop %v895
        %v897 = vmul.f32 %v862, 1.442695
        %v898 = vpow.pop %v897
        %v899 = vmul.f32 %v863, 1.442695
        %v900 = vpow.pop %v899
        %v901 = vmul.f32 %v864, 1.442695
        %v902 = vpow.pop %v901
        %v903 = vmul.f32 %v865, 1.442695
        %v904 = vpow.pop %v903
        %v905 = vmul.f32 %v866, 1.442695
        %v906 = vpow.pop %v905
        %v907 = vmul.f32 %v867, 1.442695
        %v908 = vpow.pop %v907
        %v909 = vmul.f32 %v868, 1.442695
        %v910 = vpow.pop %v909
        %v911 = vmul.f32 %v869, 1.442695
        %v912 = vpow.pop %v911
        %v913 = vmul.f32 %v870, 1.442695
        %v914 = vpow.pop %v913
        %v915 = vmul.f32 %v871, 1.442695
        %v916 = vpow.pop %v915
        %v917 = vmul.f32 %v872, 1.442695
        %v918 = vpow.pop %v917
        %v919 = vmul.f32 %v873, 1.442695
        %v920 = vpow.pop %v919
        %v921 = vmul.f32 %v874, 1.442695
        %v922 = vpow.pop %v921
        %v923 = vmul.f32 %v875, 1.442695
        %v924 = vpow.pop %v923
        %v925 = vmul.f32 %v876, 1.442695
        %v926 = vpow.pop %v925
        %v927 = vmul.f32 %v877, 1.442695
        %v928 = vpow.pop %v927
        %v929 = vmul.f32 %v878, 1.442695
        %v930 = vpow.pop %v929
        %v931 = vmul.f32 %v879, 1.442695
        %v932 = vpow.pop %v931
        %v933 = vmul.f32 %v880, 1.442695
        %v934 = vpow.pop %v933
        %v935 = vmul.f32 %v881, 1.442695
        %v936 = vpow.pop %v935
        %v937 = vmul.f32 %v882, 1.442695
        %v938 = vpow.pop %v937
        %v939 = vmul.f32 %v883, 1.442695
        %v940 = vpow.pop %v939
        %v941 = vmul.f32 %v884, 1.442695
        %v942 = vpow.pop %v941
        %v943 = vmul.f32 %v885, 1.442695
        %v944 = vpow.pop %v943
        %v945 = vmul.f32 %v886, 1.442695
        %v946 = vpow.pop %v945
        %v947 = vmul.f32 %v887, 1.442695
        %v948 = vpow.pop %v947
        %v949 = vmul.f32 %v888, 1.442695
        %v950 = vpow.pop %v949
        %v951 = vmul.f32 %v889, 1.442695
        %v952 = vpow.pop %v951
        %v953 = vmul.f32 %v890, 1.442695
        %v954 = vpow.pop %v953
        %v955 = vmul.f32 %v398, %v892
        %v956 = vmul.f32 %v399, %v894
        %v957 = vmul.f32 %v400, %v896
        %v958 = vmul.f32 %v401, %v898
        %v959 = vmul.f32 %v402, %v900
        %v960 = vmul.f32 %v403, %v902
        %v961 = vmul.f32 %v404, %v904
        %v962 = vmul.f32 %v405, %v906
        %v963 = vmul.f32 %v406, %v908
        %v964 = vmul.f32 %v407, %v910
        %v965 = vmul.f32 %v408, %v912
        %v966 = vmul.f32 %v409, %v914
        %v967 = vmul.f32 %v410, %v916
        %v968 = vmul.f32 %v411, %v918
        %v969 = vmul.f32 %v412, %v920
        %v970 = vmul.f32 %v413, %v922
        %v971 = vmul.f32 %v414, %v924
        %v972 = vmul.f32 %v415, %v926
        %v973 = vmul.f32 %v416, %v928
        %v974 = vmul.f32 %v417, %v930
        %v975 = vmul.f32 %v418, %v932
        %v976 = vmul.f32 %v419, %v934
        %v977 = vmul.f32 %v420, %v936
        %v978 = vmul.f32 %v421, %v938
        %v979 = vmul.f32 %v422, %v940
        %v980 = vmul.f32 %v423, %v942
        %v981 = vmul.f32 %v424, %v944
        %v982 = vmul.f32 %v425, %v946
        %v983 = vmul.f32 %v426, %v948
        %v984 = vmul.f32 %v427, %v950
        %v985 = vmul.f32 %v428, %v952
        %v986 = vmul.f32 %v429, %v954
        %v987 = vadd.f32 %v955, %v956
        %v988 = vadd.f32 %v987, %v957
        %v989 = vadd.f32 %v988, %v958
        %v990 = vadd.f32 %v989, %v959
        %v991 = vadd.f32 %v990, %v960
        %v992 = vadd.f32 %v991, %v961
        %v993 = vadd.f32 %v992, %v962
        %v994 = vadd.f32 %v993, %v963
        %v995 = vadd.f32 %v994, %v964
        %v996 = vadd.f32 %v995, %v965
        %v997 = vadd.f32 %v996, %v966
        %v998 = vadd.f32 %v997, %v967
        %v999 = vadd.f32 %v998, %v968
        %v1000 = vadd.f32 %v999, %v969
        %v1001 = vadd.f32 %v1000, %v970
        %v1002 = vadd.f32 %v1001, %v971
        %v1003 = vadd.f32 %v1002, %v972
        %v1004 = vadd.f32 %v1003, %v973
        %v1005 = vadd.f32 %v1004, %v974
        %v1006 = vadd.f32 %v1005, %v975
        %v1007 = vadd.f32 %v1006, %v976
        %v1008 = vadd.f32 %v1007, %v977
        %v1009 = vadd.f32 %v1008, %v978
        %v1010 = vadd.f32 %v1009, %v979
        %v1011 = vadd.f32 %v1010, %v980
        %v1012 = vadd.f32 %v1011, %v981
        %v1013 = vadd.f32 %v1012, %v982
        %v1014 = vadd.f32 %v1013, %v983
        %v1015 = vadd.f32 %v1014, %v984
        %v1016 = vadd.f32 %v1015, %v985
        %v1017 = vadd.f32 %v1016, %v986
        %v1018 = vrot.slane %v1017, 4
        %v1019 = vadd.f32 %v1017, %v1018
        %v1020 = vrot.slane %v1019, 2
        %v1021 = vadd.f32 %v1019, %v1020
        %v1022 = vrot.slane %v1021, 1
        %v1023 = vadd.f32 %v1021, %v1022
        %vm1024 = vcmp.gt.f32.partialorder %v1023, 0.0
        %v1025 = vsel %vm1024, %v1023, 1.0
        %v1026 = vrcp.pop %v1025
        %v1027 = vld [vmem:[%s278] sm:$0xff]
        %v1028 = vld [vmem:[%s278 + $0x8] sm:$0xff]
        %v1029 = vld [vmem:[%s278 + $0x10] sm:$0xff]
        %v1030 = vld [vmem:[%s278 + $0x18] sm:$0xff]
        %v1031 = vld [vmem:[%s278 + $0x20] sm:$0xff]
        %v1032 = vld [vmem:[%s278 + $0x28] sm:$0xff]
        %v1033 = vld [vmem:[%s278 + $0x30] sm:$0xff]
        %v1034 = vld [vmem:[%s278 + $0x38] sm:$0xff]
        %v1035 = vld [vmem:[%s278 + $0x40] sm:$0xff]
        %v1036 = vld [vmem:[%s278 + $0x48] sm:$0xff]
        %v1037 = vld [vmem:[%s278 + $0x50] sm:$0xff]
        %v1038 = vld [vmem:[%s278 + $0x58] sm:$0xff]
        %v1039 = vld [vmem:[%s278 + $0x60] sm:$0xff]
        %v1040 = vld [vmem:[%s278 + $0x68] sm:$0xff]
        %v1041 = vld [vmem:[%s278 + $0x70] sm:$0xff]
        %v1042 = vld [vmem:[%s278 + $0x78] sm:$0xff]
        %1043 = vxpose.xlu0.b32.start [1/16] %v1026, 128
        %1044 = vxpose.xlu0.b32.cont [2/16] 0.0, 128
        %1045 = vxpose.xlu0.b32.cont [3/16] 0.0, 128
        %1046 = vxpose.xlu0.b32.cont [4/16] 0.0, 128
        %1047 = vxpose.xlu0.b32.cont [5/16] 0.0, 128
        %1048 = vxpose.xlu0.b32.cont [6/16] 0.0, 128
        %1049 = vxpose.xlu0.b32.cont [7/16] 0.0, 128
        %1050 = vxpose.xlu0.b32.cont [8/16] 0.0, 128
        %1051 = vxpose.xlu0.b32.cont [9/16] 0.0, 128
        %1052 = vxpose.xlu0.b32.cont [10/16] 0.0, 128
        %1053 = vxpose.xlu0.b32.cont [11/16] 0.0, 128
        %1054 = vxpose.xlu0.b32.cont [12/16] 0.0, 128
        %1055 = vxpose.xlu0.b32.cont [13/16] 0.0, 128
        %1056 = vxpose.xlu0.b32.cont [14/16] 0.0, 128
        %1057 = vxpose.xlu0.b32.cont [15/16] 0.0, 128
        %1058 = vxpose.xlu0.b32.end [16/16] 0.0, 128
        %v1059 = vpop.trf.xlu0
        %v1060 = vpop.trf.xlu0
        %v1061 = vpop.trf.xlu0
        %v1062 = vpop.trf.xlu0
        %v1063 = vpop.trf.xlu0
        %v1064 = vpop.trf.xlu0
        %v1065 = vpop.trf.xlu0
        %v1066 = vpop.trf.xlu0
        %v1067 = vpop.trf.xlu0
        %v1068 = vpop.trf.xlu0
        %v1069 = vpop.trf.xlu0
        %v1070 = vpop.trf.xlu0
        %v1071 = vpop.trf.xlu0
        %v1072 = vpop.trf.xlu0
        %v1073 = vpop.trf.xlu0
        %v1074 = vpop.trf.xlu0
        %1076 = vset.pattern.permute.xlu0 0
        %1077 = vperm.xlu0 %1076, %v1059
        %v1078 = vpop.permute.xlu0 %1077
        %1081 = vset.pattern.permute.xlu0 0
        %1082 = vperm.xlu0 %1081, %v1060
        %v1083 = vpop.permute.xlu0 %1082
        %1086 = vset.pattern.permute.xlu0 0
        %1087 = vperm.xlu0 %1086, %v1061
        %v1088 = vpop.permute.xlu0 %1087
        %1091 = vset.pattern.permute.xlu0 0
        %1092 = vperm.xlu0 %1091, %v1062
        %v1093 = vpop.permute.xlu0 %1092
        %1096 = vset.pattern.permute.xlu0 0
        %1097 = vperm.xlu0 %1096, %v1063
        %v1098 = vpop.permute.xlu0 %1097
        %1101 = vset.pattern.permute.xlu0 0
        %1102 = vperm.xlu0 %1101, %v1064
        %v1103 = vpop.permute.xlu0 %1102
        %1106 = vset.pattern.permute.xlu0 0
        %1107 = vperm.xlu0 %1106, %v1065
        %v1108 = vpop.permute.xlu0 %1107
        %1111 = vset.pattern.permute.xlu0 0
        %1112 = vperm.xlu0 %1111, %v1066
        %v1113 = vpop.permute.xlu0 %1112
        %1116 = vset.pattern.permute.xlu0 0
        %1117 = vperm.xlu0 %1116, %v1067
        %v1118 = vpop.permute.xlu0 %1117
        %1121 = vset.pattern.permute.xlu0 0
        %1122 = vperm.xlu0 %1121, %v1068
        %v1123 = vpop.permute.xlu0 %1122
        %1126 = vset.pattern.permute.xlu0 0
        %1127 = vperm.xlu0 %1126, %v1069
        %v1128 = vpop.permute.xlu0 %1127
        %1131 = vset.pattern.permute.xlu0 0
        %1132 = vperm.xlu0 %1131, %v1070
        %v1133 = vpop.permute.xlu0 %1132
        %1136 = vset.pattern.permute.xlu0 0
        %1137 = vperm.xlu0 %1136, %v1071
        %v1138 = vpop.permute.xlu0 %1137
        %1141 = vset.pattern.permute.xlu0 0
        %1142 = vperm.xlu0 %1141, %v1072
        %v1143 = vpop.permute.xlu0 %1142
        %1146 = vset.pattern.permute.xlu0 0
        %1147 = vperm.xlu0 %1146, %v1073
        %v1148 = vpop.permute.xlu0 %1147
        %1151 = vset.pattern.permute.xlu0 0
        %1152 = vperm.xlu0 %1151, %v1074
        %v1153 = vpop.permute.xlu0 %1152
        %v1155 = vmul.f32 %v1027, %v1078
        %v1156 = vmul.f32 %v1028, %v1083
        %v1157 = vmul.f32 %v1029, %v1088
        %v1158 = vmul.f32 %v1030, %v1093
        %v1159 = vmul.f32 %v1031, %v1098
        %v1160 = vmul.f32 %v1032, %v1103
        %v1161 = vmul.f32 %v1033, %v1108
        %v1162 = vmul.f32 %v1034, %v1113
        %v1163 = vmul.f32 %v1035, %v1118
        %v1164 = vmul.f32 %v1036, %v1123
        %v1165 = vmul.f32 %v1037, %v1128
        %v1166 = vmul.f32 %v1038, %v1133
        %v1167 = vmul.f32 %v1039, %v1138
        %v1168 = vmul.f32 %v1040, %v1143
        %v1169 = vmul.f32 %v1041, %v1148
        %v1170 = vmul.f32 %v1042, %v1153
        %1171 = vmatprep.subr.mxu0 0.0
        %1172 = vmatpush1.msra.mxu0 %v1155
        %1173 = vmatprep.subr.mxu0 0.0
        %1174 = vmatpush1.msra.mxu0 %v1156
        %1175 = vmatprep.subr.mxu0 0.0
        %1176 = vmatpush1.msra.mxu0 %v1157
        %1177 = vmatprep.subr.mxu0 0.0
        %1178 = vmatpush1.msra.mxu0 %v1158
        %1179 = vmatprep.subr.mxu0 0.0
        %1180 = vmatpush1.msra.mxu0 %v1159
        %1181 = vmatprep.subr.mxu0 0.0
        %1182 = vmatpush1.msra.mxu0 %v1160
        %1183 = vmatprep.subr.mxu0 0.0
        %1184 = vmatpush1.msra.mxu0 %v1161
        %1185 = vmatprep.subr.mxu0 0.0
        %1186 = vmatpush1.msra.mxu0 %v1162
        %1187 = vmatprep.subr.mxu0 0.0
        %1188 = vmatpush1.msra.mxu0 %v1163
        %1189 = vmatprep.subr.mxu0 0.0
        %1190 = vmatpush1.msra.mxu0 %v1164
        %1191 = vmatprep.subr.mxu0 0.0
        %1192 = vmatpush1.msra.mxu0 %v1165
        %1193 = vmatprep.subr.mxu0 0.0
        %1194 = vmatpush1.msra.mxu0 %v1166
        %1195 = vmatprep.subr.mxu0 0.0
        %1196 = vmatpush1.msra.mxu0 %v1167
        %1197 = vmatprep.subr.mxu0 0.0
        %1198 = vmatpush1.msra.mxu0 %v1168
        %1199 = vmatprep.subr.mxu0 0.0
        %1200 = vmatpush1.msra.mxu0 %v1169
        %1201 = vmatprep.subr.mxu0 0.0
        %1202 = vmatpush1.msra.mxu0 %v1170
        %1203 = vmatprep.subr.mxu0 0.0
        %1204 = vmatpush1.msra.mxu0 0.0
        %1205 = vmatprep.subr.mxu0 0.0
        %1206 = vmatpush1.msra.mxu0 0.0
        %1207 = vmatprep.subr.mxu0 0.0
        %1208 = vmatpush1.msra.mxu0 0.0
        %1209 = vmatprep.subr.mxu0 0.0
        %1210 = vmatpush1.msra.mxu0 0.0
        %1211 = vmatprep.subr.mxu0 0.0
        %1212 = vmatpush1.msra.mxu0 0.0
        %1213 = vmatprep.subr.mxu0 0.0
        %1214 = vmatpush1.msra.mxu0 0.0
        %1215 = vmatprep.subr.mxu0 0.0
        %1216 = vmatpush1.msra.mxu0 0.0
        %1217 = vmatprep.subr.mxu0 0.0
        %1218 = vmatpush1.msra.mxu0 0.0
        %1219 = vmatprep.subr.mxu0 0.0
        %1220 = vmatpush1.msra.mxu0 0.0
        %1221 = vmatprep.subr.mxu0 0.0
        %1222 = vmatpush1.msra.mxu0 0.0
        %1223 = vmatprep.subr.mxu0 0.0
        %1224 = vmatpush1.msra.mxu0 0.0
        %1225 = vmatprep.subr.mxu0 0.0
        %1226 = vmatpush1.msra.mxu0 0.0
        %1227 = vmatprep.subr.mxu0 0.0
        %1228 = vmatpush1.msra.mxu0 0.0
        %1229 = vmatprep.subr.mxu0 0.0
        %1230 = vmatpush1.msra.mxu0 0.0
        %1231 = vmatprep.subr.mxu0 0.0
        %1232 = vmatpush1.msra.mxu0 0.0
        %1233 = vmatprep.subr.mxu0 0.0
        %1234 = vmatpush1.msra.mxu0 0.0
        %1235 = vmatprep.mubr.f32.mxu0 0.0
        %1236 = vmatmul.mubr.f32.gmra.mrb[0].mxu0 %v955
        %v1237 = vpop.f32.mrb[0].mxu0
        %v1238 = vadd.f32 0.0, %v1237
        %v1239 = vpop.f32.mrb[0].mxu0
        %1240 = vmatprep.mubr.f32.mxu0 0.0
        %1241 = vmatmul.mubr.f32.gmra.mrb[0].mxu0 %v956
        %v1242 = vpop.f32.mrb[0].mxu0
        %v1243 = vadd.f32 0.0, %v1242
        %v1244 = vpop.f32.mrb[0].mxu0
        %1245 = vmatprep.mubr.f32.mxu0 0.0
        %1246 = vmatmul.mubr.f32.gmra.mrb[0].mxu0 %v957
        %v1247 = vpop.f32.mrb[0].mxu0
        %v1248 = vadd.f32 0.0, %v1247
        %v1249 = vpop.f32.mrb[0].mxu0
        %1250 = vmatprep.mubr.f32.mxu0 0.0
        %1251 = vmatmul.mubr.f32.gmra.mrb[0].mxu0 %v958
        %v1252 = vpop.f32.mrb[0].mxu0
        %v1253 = vadd.f32 0.0, %v1252
        %v1254 = vpop.f32.mrb[0].mxu0
        %1255 = vmatprep.mubr.f32.mxu0 0.0
        %1256 = vmatmul.mubr.f32.gmra.mrb[0].mxu0 %v959
        %v1257 = vpop.f32.mrb[0].mxu0
        %v1258 = vadd.f32 0.0, %v1257
        %v1259 = vpop.f32.mrb[0].mxu0
        %1260 = vmatprep.mubr.f32.mxu0 0.0
        %1261 = vmatmul.mubr.f32.gmra.mrb[0].mxu0 %v960
        %v1262 = vpop.f32.mrb[0].mxu0
        %v1263 = vadd.f32 0.0, %v1262
        %v1264 = vpop.f32.mrb[0].mxu0
        %1265 = vmatprep.mubr.f32.mxu0 0.0
        %1266 = vmatmul.mubr.f32.gmra.mrb[0].mxu0 %v961
        %v1267 = vpop.f32.mrb[0].mxu0
        %v1268 = vadd.f32 0.0, %v1267
        %v1269 = vpop.f32.mrb[0].mxu0
        %1270 = vmatprep.mubr.f32.mxu0 0.0
        %1271 = vmatmul.mubr.f32.gmra.mrb[0].mxu0 %v962
        %v1272 = vpop.f32.mrb[0].mxu0
        %v1273 = vadd.f32 0.0, %v1272
        %v1274 = vpop.f32.mrb[0].mxu0
        %1275 = vmatprep.mubr.f32.mxu0 0.0
        %1276 = vmatmul.mubr.f32.gmra.mrb[0].mxu0 %v963
        %v1277 = vpop.f32.mrb[0].mxu0
        %v1278 = vadd.f32 0.0, %v1277
        %v1279 = vpop.f32.mrb[0].mxu0
        %1280 = vmatprep.mubr.f32.mxu0 0.0
        %1281 = vmatmul.mubr.f32.gmra.mrb[0].mxu0 %v964
        %v1282 = vpop.f32.mrb[0].mxu0
        %v1283 = vadd.f32 0.0, %v1282
        %v1284 = vpop.f32.mrb[0].mxu0
        %1285 = vmatprep.mubr.f32.mxu0 0.0
        %1286 = vmatmul.mubr.f32.gmra.mrb[0].mxu0 %v965
        %v1287 = vpop.f32.mrb[0].mxu0
        %v1288 = vadd.f32 0.0, %v1287
        %v1289 = vpop.f32.mrb[0].mxu0
        %1290 = vmatprep.mubr.f32.mxu0 0.0
        %1291 = vmatmul.mubr.f32.gmra.mrb[0].mxu0 %v966
        %v1292 = vpop.f32.mrb[0].mxu0
        %v1293 = vadd.f32 0.0, %v1292
        %v1294 = vpop.f32.mrb[0].mxu0
        %1295 = vmatprep.mubr.f32.mxu0 0.0
        %1296 = vmatmul.mubr.f32.gmra.mrb[0].mxu0 %v967
        %v1297 = vpop.f32.mrb[0].mxu0
        %v1298 = vadd.f32 0.0, %v1297
        %v1299 = vpop.f32.mrb[0].mxu0
        %1300 = vmatprep.mubr.f32.mxu0 0.0
        %1301 = vmatmul.mubr.f32.gmra.mrb[0].mxu0 %v968
        %v1302 = vpop.f32.mrb[0].mxu0
        %v1303 = vadd.f32 0.0, %v1302
        %v1304 = vpop.f32.mrb[0].mxu0
        %1305 = vmatprep.mubr.f32.mxu0 0.0
        %1306 = vmatmul.mubr.f32.gmra.mrb[0].mxu0 %v969
        %v1307 = vpop.f32.mrb[0].mxu0
        %v1308 = vadd.f32 0.0, %v1307
        %v1309 = vpop.f32.mrb[0].mxu0
        %1310 = vmatprep.mubr.f32.mxu0 0.0
        %1311 = vmatmul.mubr.f32.gmra.mrb[0].mxu0 %v970
        %v1312 = vpop.f32.mrb[0].mxu0
        %v1313 = vadd.f32 0.0, %v1312
        %v1314 = vpop.f32.mrb[0].mxu0
        %1315 = vmatprep.mubr.f32.mxu0 0.0
        %1316 = vmatmul.mubr.f32.gmra.mrb[0].mxu0 %v971
        %v1317 = vpop.f32.mrb[0].mxu0
        %v1318 = vadd.f32 0.0, %v1317
        %v1319 = vpop.f32.mrb[0].mxu0
        %1320 = vmatprep.mubr.f32.mxu0 0.0
        %1321 = vmatmul.mubr.f32.gmra.mrb[0].mxu0 %v972
        %v1322 = vpop.f32.mrb[0].mxu0
        %v1323 = vadd.f32 0.0, %v1322
        %v1324 = vpop.f32.mrb[0].mxu0
        %1325 = vmatprep.mubr.f32.mxu0 0.0
        %1326 = vmatmul.mubr.f32.gmra.mrb[0].mxu0 %v973
        %v1327 = vpop.f32.mrb[0].mxu0
        %v1328 = vadd.f32 0.0, %v1327
        %v1329 = vpop.f32.mrb[0].mxu0
        %1330 = vmatprep.mubr.f32.mxu0 0.0
        %1331 = vmatmul.mubr.f32.gmra.mrb[0].mxu0 %v974
        %v1332 = vpop.f32.mrb[0].mxu0
        %v1333 = vadd.f32 0.0, %v1332
        %v1334 = vpop.f32.mrb[0].mxu0
        %1335 = vmatprep.mubr.f32.mxu0 0.0
        %1336 = vmatmul.mubr.f32.gmra.mrb[0].mxu0 %v975
        %v1337 = vpop.f32.mrb[0].mxu0
        %v1338 = vadd.f32 0.0, %v1337
        %v1339 = vpop.f32.mrb[0].mxu0
        %1340 = vmatprep.mubr.f32.mxu0 0.0
        %1341 = vmatmul.mubr.f32.gmra.mrb[0].mxu0 %v976
        %v1342 = vpop.f32.mrb[0].mxu0
        %v1343 = vadd.f32 0.0, %v1342
        %v1344 = vpop.f32.mrb[0].mxu0
        %1345 = vmatprep.mubr.f32.mxu0 0.0
        %1346 = vmatmul.mubr.f32.gmra.mrb[0].mxu0 %v977
        %v1347 = vpop.f32.mrb[0].mxu0
        %v1348 = vadd.f32 0.0, %v1347
        %v1349 = vpop.f32.mrb[0].mxu0
        %1350 = vmatprep.mubr.f32.mxu0 0.0
        %1351 = vmatmul.mubr.f32.gmra.mrb[0].mxu0 %v978
        %v1352 = vpop.f32.mrb[0].mxu0
        %v1353 = vadd.f32 0.0, %v1352
        %v1354 = vpop.f32.mrb[0].mxu0
        %1355 = vmatprep.mubr.f32.mxu0 0.0
        %1356 = vmatmul.mubr.f32.gmra.mrb[0].mxu0 %v979
        %v1357 = vpop.f32.mrb[0].mxu0
        %v1358 = vadd.f32 0.0, %v1357
        %v1359 = vpop.f32.mrb[0].mxu0
        %1360 = vmatprep.mubr.f32.mxu0 0.0
        %1361 = vmatmul.mubr.f32.gmra.mrb[0].mxu0 %v980
        %v1362 = vpop.f32.mrb[0].mxu0
        %v1363 = vadd.f32 0.0, %v1362
        %v1364 = vpop.f32.mrb[0].mxu0
        %1365 = vmatprep.mubr.f32.mxu0 0.0
        %1366 = vmatmul.mubr.f32.gmra.mrb[0].mxu0 %v981
        %v1367 = vpop.f32.mrb[0].mxu0
        %v1368 = vadd.f32 0.0, %v1367
        %v1369 = vpop.f32.mrb[0].mxu0
        %1370 = vmatprep.mubr.f32.mxu0 0.0
        %1371 = vmatmul.mubr.f32.gmra.mrb[0].mxu0 %v982
        %v1372 = vpop.f32.mrb[0].mxu0
        %v1373 = vadd.f32 0.0, %v1372
        %v1374 = vpop.f32.mrb[0].mxu0
        %1375 = vmatprep.mubr.f32.mxu0 0.0
        %1376 = vmatmul.mubr.f32.gmra.mrb[0].mxu0 %v983
        %v1377 = vpop.f32.mrb[0].mxu0
        %v1378 = vadd.f32 0.0, %v1377
        %v1379 = vpop.f32.mrb[0].mxu0
        %1380 = vmatprep.mubr.f32.mxu0 0.0
        %1381 = vmatmul.mubr.f32.gmra.mrb[0].mxu0 %v984
        %v1382 = vpop.f32.mrb[0].mxu0
        %v1383 = vadd.f32 0.0, %v1382
        %v1384 = vpop.f32.mrb[0].mxu0
        %1385 = vmatprep.mubr.f32.mxu0 0.0
        %1386 = vmatmul.mubr.f32.gmra.mrb[0].mxu0 %v985
        %v1387 = vpop.f32.mrb[0].mxu0
        %v1388 = vadd.f32 0.0, %v1387
        %v1389 = vpop.f32.mrb[0].mxu0
        %1390 = vmatprep.mubr.f32.mxu0 0.0
        %1391 = vmatmul.mubr.f32.gmra.mrb[0].mxu0 %v986
        %v1392 = vpop.f32.mrb[0].mxu0
        %v1393 = vadd.f32 0.0, %v1392
        %v1394 = vpop.f32.mrb[0].mxu0
        %1395 = vdwg.mxu0
        %v1396 = vld [vmem:[#allocation2] sm:$0xff]
        %v1397 = vld [vmem:[#allocation2 + $0x8] sm:$0xff]
        %v1398 = vld [vmem:[#allocation2 + $0x10] sm:$0xff]
        %v1399 = vld [vmem:[#allocation2 + $0x18] sm:$0xff]
        %v1400 = vld [vmem:[#allocation2 + $0x20] sm:$0xff]
        %v1401 = vld [vmem:[#allocation2 + $0x28] sm:$0xff]
        %v1402 = vld [vmem:[#allocation2 + $0x30] sm:$0xff]
        %v1403 = vld [vmem:[#allocation2 + $0x38] sm:$0xff]
        %v1404 = vld [vmem:[#allocation2 + $0x40] sm:$0xff]
        %v1405 = vld [vmem:[#allocation2 + $0x48] sm:$0xff]
        %v1406 = vld [vmem:[#allocation2 + $0x50] sm:$0xff]
        %v1407 = vld [vmem:[#allocation2 + $0x58] sm:$0xff]
        %v1408 = vld [vmem:[#allocation2 + $0x60] sm:$0xff]
        %v1409 = vld [vmem:[#allocation2 + $0x68] sm:$0xff]
        %v1410 = vld [vmem:[#allocation2 + $0x70] sm:$0xff]
        %v1411 = vld [vmem:[#allocation2 + $0x78] sm:$0xff]
        %v1412 = vld [vmem:[#allocation2 + $0x80] sm:$0xff]
        %v1413 = vld [vmem:[#allocation2 + $0x88] sm:$0xff]
        %v1414 = vld [vmem:[#allocation2 + $0x90] sm:$0xff]
        %v1415 = vld [vmem:[#allocation2 + $0x98] sm:$0xff]
        %v1416 = vld [vmem:[#allocation2 + $0xa0] sm:$0xff]
        %v1417 = vld [vmem:[#allocation2 + $0xa8] sm:$0xff]
        %v1418 = vld [vmem:[#allocation2 + $0xb0] sm:$0xff]
        %v1419 = vld [vmem:[#allocation2 + $0xb8] sm:$0xff]
        %v1420 = vld [vmem:[#allocation2 + $0xc0] sm:$0xff]
        %v1421 = vld [vmem:[#allocation2 + $0xc8] sm:$0xff]
        %v1422 = vld [vmem:[#allocation2 + $0xd0] sm:$0xff]
        %v1423 = vld [vmem:[#allocation2 + $0xd8] sm:$0xff]
        %v1424 = vld [vmem:[#allocation2 + $0xe0] sm:$0xff]
        %v1425 = vld [vmem:[#allocation2 + $0xe8] sm:$0xff]
        %v1426 = vld [vmem:[#allocation2 + $0xf0] sm:$0xff]
        %v1427 = vld [vmem:[#allocation2 + $0xf8] sm:$0xff]
        %v1428 = vadd.f32 %v1396, %v1238
        %v1429 = vadd.f32 %v1397, %v1243
        %v1430 = vadd.f32 %v1398, %v1248
        %v1431 = vadd.f32 %v1399, %v1253
        %v1432 = vadd.f32 %v1400, %v1258
        %v1433 = vadd.f32 %v1401, %v1263
        %v1434 = vadd.f32 %v1402, %v1268
        %v1435 = vadd.f32 %v1403, %v1273
        %v1436 = vadd.f32 %v1404, %v1278
        %v1437 = vadd.f32 %v1405, %v1283
        %v1438 = vadd.f32 %v1406, %v1288
        %v1439 = vadd.f32 %v1407, %v1293
        %v1440 = vadd.f32 %v1408, %v1298
        %v1441 = vadd.f32 %v1409, %v1303
        %v1442 = vadd.f32 %v1410, %v1308
        %v1443 = vadd.f32 %v1411, %v1313
        %v1444 = vadd.f32 %v1412, %v1318
        %v1445 = vadd.f32 %v1413, %v1323
        %v1446 = vadd.f32 %v1414, %v1328
        %v1447 = vadd.f32 %v1415, %v1333
        %v1448 = vadd.f32 %v1416, %v1338
        %v1449 = vadd.f32 %v1417, %v1343
        %v1450 = vadd.f32 %v1418, %v1348
        %v1451 = vadd.f32 %v1419, %v1353
        %v1452 = vadd.f32 %v1420, %v1358
        %v1453 = vadd.f32 %v1421, %v1363
        %v1454 = vadd.f32 %v1422, %v1368
        %v1455 = vadd.f32 %v1423, %v1373
        %v1456 = vadd.f32 %v1424, %v1378
        %v1457 = vadd.f32 %v1425, %v1383
        %v1458 = vadd.f32 %v1426, %v1388
        %v1459 = vadd.f32 %v1427, %v1393
        %vm1460 = vcmask 261120
        %1461 = vst.msk [vmem:[#allocation2] sm:$0xff] %vm1460, %v1428
        %1462 = vst.msk [vmem:[#allocation2 + $0x8] sm:$0xff] %vm1460, %v1429
        %1463 = vst.msk [vmem:[#allocation2 + $0x10] sm:$0xff] %vm1460, %v1430
        %1464 = vst.msk [vmem:[#allocation2 + $0x18] sm:$0xff] %vm1460, %v1431
        %1465 = vst.msk [vmem:[#allocation2 + $0x20] sm:$0xff] %vm1460, %v1432
        %1466 = vst.msk [vmem:[#allocation2 + $0x28] sm:$0xff] %vm1460, %v1433
        %1467 = vst.msk [vmem:[#allocation2 + $0x30] sm:$0xff] %vm1460, %v1434
        %1468 = vst.msk [vmem:[#allocation2 + $0x38] sm:$0xff] %vm1460, %v1435
        %1469 = vst.msk [vmem:[#allocation2 + $0x40] sm:$0xff] %vm1460, %v1436
        %1470 = vst.msk [vmem:[#allocation2 + $0x48] sm:$0xff] %vm1460, %v1437
        %1471 = vst.msk [vmem:[#allocation2 + $0x50] sm:$0xff] %vm1460, %v1438
        %1472 = vst.msk [vmem:[#allocation2 + $0x58] sm:$0xff] %vm1460, %v1439
        %1473 = vst.msk [vmem:[#allocation2 + $0x60] sm:$0xff] %vm1460, %v1440
        %1474 = vst.msk [vmem:[#allocation2 + $0x68] sm:$0xff] %vm1460, %v1441
        %1475 = vst.msk [vmem:[#allocation2 + $0x70] sm:$0xff] %vm1460, %v1442
        %1476 = vst.msk [vmem:[#allocation2 + $0x78] sm:$0xff] %vm1460, %v1443
        %1477 = vst.msk [vmem:[#allocation2 + $0x80] sm:$0xff] %vm1460, %v1444
        %1478 = vst.msk [vmem:[#allocation2 + $0x88] sm:$0xff] %vm1460, %v1445
        %1479 = vst.msk [vmem:[#allocation2 + $0x90] sm:$0xff] %vm1460, %v1446
        %1480 = vst.msk [vmem:[#allocation2 + $0x98] sm:$0xff] %vm1460, %v1447
        %1481 = vst.msk [vmem:[#allocation2 + $0xa0] sm:$0xff] %vm1460, %v1448
        %1482 = vst.msk [vmem:[#allocation2 + $0xa8] sm:$0xff] %vm1460, %v1449
        %1483 = vst.msk [vmem:[#allocation2 + $0xb0] sm:$0xff] %vm1460, %v1450
        %1484 = vst.msk [vmem:[#allocation2 + $0xb8] sm:$0xff] %vm1460, %v1451
        %1485 = vst.msk [vmem:[#allocation2 + $0xc0] sm:$0xff] %vm1460, %v1452
        %1486 = vst.msk [vmem:[#allocation2 + $0xc8] sm:$0xff] %vm1460, %v1453
        %1487 = vst.msk [vmem:[#allocation2 + $0xd0] sm:$0xff] %vm1460, %v1454
        %1488 = vst.msk [vmem:[#allocation2 + $0xd8] sm:$0xff] %vm1460, %v1455
        %1489 = vst.msk [vmem:[#allocation2 + $0xe0] sm:$0xff] %vm1460, %v1456
        %1490 = vst.msk [vmem:[#allocation2 + $0xe8] sm:$0xff] %vm1460, %v1457
        %1491 = vst.msk [vmem:[#allocation2 + $0xf0] sm:$0xff] %vm1460, %v1458
        %1492 = vst.msk [vmem:[#allocation2 + $0xf8] sm:$0xff] %vm1460, %v1459
        %s1493 = scalar_lea.vmem [#allocation8], 256
        %v1494 = vld [vmem:[%s1493] sm:$0xff]
        %v1495 = vld [vmem:[%s1493 + $0x8] sm:$0xff]
        %v1496 = vld [vmem:[%s1493 + $0x10] sm:$0xff]
        %v1497 = vld [vmem:[%s1493 + $0x18] sm:$0xff]
        %v1498 = vld [vmem:[%s1493 + $0x20] sm:$0xff]
        %v1499 = vld [vmem:[%s1493 + $0x28] sm:$0xff]
        %v1500 = vld [vmem:[%s1493 + $0x30] sm:$0xff]
        %v1501 = vld [vmem:[%s1493 + $0x38] sm:$0xff]
        %v1502 = vld [vmem:[%s1493 + $0x40] sm:$0xff]
        %v1503 = vld [vmem:[%s1493 + $0x48] sm:$0xff]
        %v1504 = vld [vmem:[%s1493 + $0x50] sm:$0xff]
        %v1505 = vld [vmem:[%s1493 + $0x58] sm:$0xff]
        %v1506 = vld [vmem:[%s1493 + $0x60] sm:$0xff]
        %v1507 = vld [vmem:[%s1493 + $0x68] sm:$0xff]
        %v1508 = vld [vmem:[%s1493 + $0x70] sm:$0xff]
        %v1509 = vld [vmem:[%s1493 + $0x78] sm:$0xff]
        %v1510 = vld [vmem:[%s1493 + $0x80] sm:$0xff]
        %v1511 = vld [vmem:[%s1493 + $0x88] sm:$0xff]
        %v1512 = vld [vmem:[%s1493 + $0x90] sm:$0xff]
        %v1513 = vld [vmem:[%s1493 + $0x98] sm:$0xff]
        %v1514 = vld [vmem:[%s1493 + $0xa0] sm:$0xff]
        %v1515 = vld [vmem:[%s1493 + $0xa8] sm:$0xff]
        %v1516 = vld [vmem:[%s1493 + $0xb0] sm:$0xff]
        %v1517 = vld [vmem:[%s1493 + $0xb8] sm:$0xff]
        %v1518 = vld [vmem:[%s1493 + $0xc0] sm:$0xff]
        %v1519 = vld [vmem:[%s1493 + $0xc8] sm:$0xff]
        %v1520 = vld [vmem:[%s1493 + $0xd0] sm:$0xff]
        %v1521 = vld [vmem:[%s1493 + $0xd8] sm:$0xff]
        %v1522 = vld [vmem:[%s1493 + $0xe0] sm:$0xff]
        %v1523 = vld [vmem:[%s1493 + $0xe8] sm:$0xff]
        %v1524 = vld [vmem:[%s1493 + $0xf0] sm:$0xff]
        %v1525 = vld [vmem:[%s1493 + $0xf8] sm:$0xff]
        %s1526 = scalar_lea.vmem %s291, 1 [#allocation9]
        %v1527 = vld [vmem:[%s1526] sm:$0x1]
        %1529 = vset.pattern.permute.xlu0 0
        %1530 = vperm.xlu0 %1529, %v1494
        %v1531 = vpop.permute.xlu0 %1530
        %1534 = vset.pattern.permute.xlu0 0
        %1535 = vperm.xlu0 %1534, %v1495
        %v1536 = vpop.permute.xlu0 %1535
        %1539 = vset.pattern.permute.xlu0 0
        %1540 = vperm.xlu0 %1539, %v1496
        %v1541 = vpop.permute.xlu0 %1540
        %1544 = vset.pattern.permute.xlu0 0
        %1545 = vperm.xlu0 %1544, %v1497
        %v1546 = vpop.permute.xlu0 %1545
        %1549 = vset.pattern.permute.xlu0 0
        %1550 = vperm.xlu0 %1549, %v1498
        %v1551 = vpop.permute.xlu0 %1550
        %1554 = vset.pattern.permute.xlu0 0
        %1555 = vperm.xlu0 %1554, %v1499
        %v1556 = vpop.permute.xlu0 %1555
        %1559 = vset.pattern.permute.xlu0 0
        %1560 = vperm.xlu0 %1559, %v1500
        %v1561 = vpop.permute.xlu0 %1560
        %1564 = vset.pattern.permute.xlu0 0
        %1565 = vperm.xlu0 %1564, %v1501
        %v1566 = vpop.permute.xlu0 %1565
        %1569 = vset.pattern.permute.xlu0 0
        %1570 = vperm.xlu0 %1569, %v1502
        %v1571 = vpop.permute.xlu0 %1570
        %1574 = vset.pattern.permute.xlu0 0
        %1575 = vperm.xlu0 %1574, %v1503
        %v1576 = vpop.permute.xlu0 %1575
        %1579 = vset.pattern.permute.xlu0 0
        %1580 = vperm.xlu0 %1579, %v1504
        %v1581 = vpop.permute.xlu0 %1580
        %1584 = vset.pattern.permute.xlu0 0
        %1585 = vperm.xlu0 %1584, %v1505
        %v1586 = vpop.permute.xlu0 %1585
        %1589 = vset.pattern.permute.xlu0 0
        %1590 = vperm.xlu0 %1589, %v1506
        %v1591 = vpop.permute.xlu0 %1590
        %1594 = vset.pattern.permute.xlu0 0
        %1595 = vperm.xlu0 %1594, %v1507
        %v1596 = vpop.permute.xlu0 %1595
        %1599 = vset.pattern.permute.xlu0 0
        %1600 = vperm.xlu0 %1599, %v1508
        %v1601 = vpop.permute.xlu0 %1600
        %1604 = vset.pattern.permute.xlu0 0
        %1605 = vperm.xlu0 %1604, %v1509
        %v1606 = vpop.permute.xlu0 %1605
        %1609 = vset.pattern.permute.xlu0 0
        %1610 = vperm.xlu0 %1609, %v1510
        %v1611 = vpop.permute.xlu0 %1610
        %1614 = vset.pattern.permute.xlu0 0
        %1615 = vperm.xlu0 %1614, %v1511
        %v1616 = vpop.permute.xlu0 %1615
        %1619 = vset.pattern.permute.xlu0 0
        %1620 = vperm.xlu0 %1619, %v1512
        %v1621 = vpop.permute.xlu0 %1620
        %1624 = vset.pattern.permute.xlu0 0
        %1625 = vperm.xlu0 %1624, %v1513
        %v1626 = vpop.permute.xlu0 %1625
        %1629 = vset.pattern.permute.xlu0 0
        %1630 = vperm.xlu0 %1629, %v1514
        %v1631 = vpop.permute.xlu0 %1630
        %1634 = vset.pattern.permute.xlu0 0
        %1635 = vperm.xlu0 %1634, %v1515
        %v1636 = vpop.permute.xlu0 %1635
        %1639 = vset.pattern.permute.xlu0 0
        %1640 = vperm.xlu0 %1639, %v1516
        %v1641 = vpop.permute.xlu0 %1640
        %1644 = vset.pattern.permute.xlu0 0
        %1645 = vperm.xlu0 %1644, %v1517
        %v1646 = vpop.permute.xlu0 %1645
        %1649 = vset.pattern.permute.xlu0 0
        %1650 = vperm.xlu0 %1649, %v1518
        %v1651 = vpop.permute.xlu0 %1650
        %1654 = vset.pattern.permute.xlu0 0
        %1655 = vperm.xlu0 %1654, %v1519
        %v1656 = vpop.permute.xlu0 %1655
        %1659 = vset.pattern.permute.xlu0 0
        %1660 = vperm.xlu0 %1659, %v1520
        %v1661 = vpop.permute.xlu0 %1660
        %1664 = vset.pattern.permute.xlu0 0
        %1665 = vperm.xlu0 %1664, %v1521
        %v1666 = vpop.permute.xlu0 %1665
        %1669 = vset.pattern.permute.xlu0 0
        %1670 = vperm.xlu0 %1669, %v1522
        %v1671 = vpop.permute.xlu0 %1670
        %1674 = vset.pattern.permute.xlu0 0
        %1675 = vperm.xlu0 %1674, %v1523
        %v1676 = vpop.permute.xlu0 %1675
        %1679 = vset.pattern.permute.xlu0 0
        %1680 = vperm.xlu0 %1679, %v1524
        %v1681 = vpop.permute.xlu0 %1680
        %1684 = vset.pattern.permute.xlu0 0
        %1685 = vperm.xlu0 %1684, %v1525
        %v1686 = vpop.permute.xlu0 %1685
        %v1689 = vlaneseq
        %v1690 = vshrl.u32 %v1689, 7
        %v1691 = vsub.s32 0, %v1690
        %v1692 = vrot.slane %v1527, %v1691
        %v1694 = vadd.f32 %v1531, %v1692
        %v1695 = vadd.f32 %v1536, %v1692
        %v1696 = vadd.f32 %v1541, %v1692
        %v1697 = vadd.f32 %v1546, %v1692
        %v1698 = vadd.f32 %v1551, %v1692
        %v1699 = vadd.f32 %v1556, %v1692
        %v1700 = vadd.f32 %v1561, %v1692
        %v1701 = vadd.f32 %v1566, %v1692
        %v1702 = vadd.f32 %v1571, %v1692
        %v1703 = vadd.f32 %v1576, %v1692
        %v1704 = vadd.f32 %v1581, %v1692
        %v1705 = vadd.f32 %v1586, %v1692
        %v1706 = vadd.f32 %v1591, %v1692
        %v1707 = vadd.f32 %v1596, %v1692
        %v1708 = vadd.f32 %v1601, %v1692
        %v1709 = vadd.f32 %v1606, %v1692
        %v1710 = vadd.f32 %v1611, %v1692
        %v1711 = vadd.f32 %v1616, %v1692
        %v1712 = vadd.f32 %v1621, %v1692
        %v1713 = vadd.f32 %v1626, %v1692
        %v1714 = vadd.f32 %v1631, %v1692
        %v1715 = vadd.f32 %v1636, %v1692
        %v1716 = vadd.f32 %v1641, %v1692
        %v1717 = vadd.f32 %v1646, %v1692
        %v1718 = vadd.f32 %v1651, %v1692
        %v1719 = vadd.f32 %v1656, %v1692
        %v1720 = vadd.f32 %v1661, %v1692
        %v1721 = vadd.f32 %v1666, %v1692
        %v1722 = vadd.f32 %v1671, %v1692
        %v1723 = vadd.f32 %v1676, %v1692
        %v1724 = vadd.f32 %v1681, %v1692
        %v1725 = vadd.f32 %v1686, %v1692
        %v1726 = vmul.f32 %v1694, 0.2
        %v1727 = vmul.f32 %v1695, 0.2
        %v1728 = vmul.f32 %v1696, 0.2
        %v1729 = vmul.f32 %v1697, 0.2
        %v1730 = vmul.f32 %v1698, 0.2
        %v1731 = vmul.f32 %v1699, 0.2
        %v1732 = vmul.f32 %v1700, 0.2
        %v1733 = vmul.f32 %v1701, 0.2
        %v1734 = vmul.f32 %v1702, 0.2
        %v1735 = vmul.f32 %v1703, 0.2
        %v1736 = vmul.f32 %v1704, 0.2
        %v1737 = vmul.f32 %v1705, 0.2
        %v1738 = vmul.f32 %v1706, 0.2
        %v1739 = vmul.f32 %v1707, 0.2
        %v1740 = vmul.f32 %v1708, 0.2
        %v1741 = vmul.f32 %v1709, 0.2
        %v1742 = vmul.f32 %v1710, 0.2
        %v1743 = vmul.f32 %v1711, 0.2
        %v1744 = vmul.f32 %v1712, 0.2
        %v1745 = vmul.f32 %v1713, 0.2
        %v1746 = vmul.f32 %v1714, 0.2
        %v1747 = vmul.f32 %v1715, 0.2
        %v1748 = vmul.f32 %v1716, 0.2
        %v1749 = vmul.f32 %v1717, 0.2
        %v1750 = vmul.f32 %v1718, 0.2
        %v1751 = vmul.f32 %v1719, 0.2
        %v1752 = vmul.f32 %v1720, 0.2
        %v1753 = vmul.f32 %v1721, 0.2
        %v1754 = vmul.f32 %v1722, 0.2
        %v1755 = vmul.f32 %v1723, 0.2
        %v1756 = vmul.f32 %v1724, 0.2
        %v1757 = vmul.f32 %v1725, 0.2
        %v1758 = vmax.f32 %v1694, %v1726
        %v1759 = vmax.f32 %v1695, %v1727
        %v1760 = vmax.f32 %v1696, %v1728
        %v1761 = vmax.f32 %v1697, %v1729
        %v1762 = vmax.f32 %v1698, %v1730
        %v1763 = vmax.f32 %v1699, %v1731
        %v1764 = vmax.f32 %v1700, %v1732
        %v1765 = vmax.f32 %v1701, %v1733
        %v1766 = vmax.f32 %v1702, %v1734
        %v1767 = vmax.f32 %v1703, %v1735
        %v1768 = vmax.f32 %v1704, %v1736
        %v1769 = vmax.f32 %v1705, %v1737
        %v1770 = vmax.f32 %v1706, %v1738
        %v1771 = vmax.f32 %v1707, %v1739
        %v1772 = vmax.f32 %v1708, %v1740
        %v1773 = vmax.f32 %v1709, %v1741
        %v1774 = vmax.f32 %v1710, %v1742
        %v1775 = vmax.f32 %v1711, %v1743
        %v1776 = vmax.f32 %v1712, %v1744
        %v1777 = vmax.f32 %v1713, %v1745
        %v1778 = vmax.f32 %v1714, %v1746
        %v1779 = vmax.f32 %v1715, %v1747
        %v1780 = vmax.f32 %v1716, %v1748
        %v1781 = vmax.f32 %v1717, %v1749
        %v1782 = vmax.f32 %v1718, %v1750
        %v1783 = vmax.f32 %v1719, %v1751
        %v1784 = vmax.f32 %v1720, %v1752
        %v1785 = vmax.f32 %v1721, %v1753
        %v1786 = vmax.f32 %v1722, %v1754
        %v1787 = vmax.f32 %v1723, %v1755
        %v1788 = vmax.f32 %v1724, %v1756
        %v1789 = vmax.f32 %v1725, %v1757
        %v1790 = vadd.f32 %v1758, %v462
        %v1791 = vadd.f32 %v1759, %v463
        %v1792 = vadd.f32 %v1760, %v464
        %v1793 = vadd.f32 %v1761, %v465
        %v1794 = vadd.f32 %v1762, %v466
        %v1795 = vadd.f32 %v1763, %v467
        %v1796 = vadd.f32 %v1764, %v468
        %v1797 = vadd.f32 %v1765, %v469
        %v1798 = vadd.f32 %v1766, %v470
        %v1799 = vadd.f32 %v1767, %v471
        %v1800 = vadd.f32 %v1768, %v472
        %v1801 = vadd.f32 %v1769, %v473
        %v1802 = vadd.f32 %v1770, %v474
        %v1803 = vadd.f32 %v1771, %v475
        %v1804 = vadd.f32 %v1772, %v476
        %v1805 = vadd.f32 %v1773, %v477
        %v1806 = vadd.f32 %v1774, %v478
        %v1807 = vadd.f32 %v1775, %v479
        %v1808 = vadd.f32 %v1776, %v480
        %v1809 = vadd.f32 %v1777, %v481
        %v1810 = vadd.f32 %v1778, %v482
        %v1811 = vadd.f32 %v1779, %v483
        %v1812 = vadd.f32 %v1780, %v484
        %v1813 = vadd.f32 %v1781, %v485
        %v1814 = vadd.f32 %v1782, %v486
        %v1815 = vadd.f32 %v1783, %v487
        %v1816 = vadd.f32 %v1784, %v488
        %v1817 = vadd.f32 %v1785, %v489
        %v1818 = vadd.f32 %v1786, %v490
        %v1819 = vadd.f32 %v1787, %v491
        %v1820 = vadd.f32 %v1788, %v492
        %v1821 = vadd.f32 %v1789, %v493
        %v1822 = vmax.f32 %v1790, %v1794
        %v1823 = vmax.f32 %v1791, %v1795
        %v1824 = vmax.f32 %v1792, %v1796
        %v1825 = vmax.f32 %v1793, %v1797
        %v1826 = vmax.f32 %v1822, %v1798
        %v1827 = vmax.f32 %v1823, %v1799
        %v1828 = vmax.f32 %v1824, %v1800
        %v1829 = vmax.f32 %v1825, %v1801
        %v1830 = vmax.f32 %v1826, %v1802
        %v1831 = vmax.f32 %v1827, %v1803
        %v1832 = vmax.f32 %v1828, %v1804
        %v1833 = vmax.f32 %v1829, %v1805
        %v1834 = vmax.f32 %v1830, %v1806
        %v1835 = vmax.f32 %v1831, %v1807
        %v1836 = vmax.f32 %v1832, %v1808
        %v1837 = vmax.f32 %v1833, %v1809
        %v1838 = vmax.f32 %v1834, %v1810
        %v1839 = vmax.f32 %v1835, %v1811
        %v1840 = vmax.f32 %v1836, %v1812
        %v1841 = vmax.f32 %v1837, %v1813
        %v1842 = vmax.f32 %v1838, %v1814
        %v1843 = vmax.f32 %v1839, %v1815
        %v1844 = vmax.f32 %v1840, %v1816
        %v1845 = vmax.f32 %v1841, %v1817
        %v1846 = vmax.f32 %v1842, %v1818
        %v1847 = vmax.f32 %v1843, %v1819
        %v1848 = vmax.f32 %v1844, %v1820
        %v1849 = vmax.f32 %v1845, %v1821
        %v1850 = vmax.f32 %v1846, %v1847
        %v1851 = vmax.f32 %v1848, %v1849
        %v1852 = vmax.f32 %v1850, %v1851
        %v1853 = vrot.slane %v1852, 4
        %v1854 = vmax.f32 %v1852, %v1853
        %v1855 = vrot.slane %v1854, 2
        %v1856 = vmax.f32 %v1854, %v1855
        %v1857 = vrot.slane %v1856, 1
        %v1858 = vmax.f32 %v1856, %v1857
        %v1859 = vmax.f32 %v1858, 0.0
        %v1860 = vsub.f32 %v1758, %v1859
        %v1861 = vsub.f32 %v1759, %v1859
        %v1862 = vsub.f32 %v1760, %v1859
        %v1863 = vsub.f32 %v1761, %v1859
        %v1864 = vsub.f32 %v1762, %v1859
        %v1865 = vsub.f32 %v1763, %v1859
        %v1866 = vsub.f32 %v1764, %v1859
        %v1867 = vsub.f32 %v1765, %v1859
        %v1868 = vsub.f32 %v1766, %v1859
        %v1869 = vsub.f32 %v1767, %v1859
        %v1870 = vsub.f32 %v1768, %v1859
        %v1871 = vsub.f32 %v1769, %v1859
        %v1872 = vsub.f32 %v1770, %v1859
        %v1873 = vsub.f32 %v1771, %v1859
        %v1874 = vsub.f32 %v1772, %v1859
        %v1875 = vsub.f32 %v1773, %v1859
        %v1876 = vsub.f32 %v1774, %v1859
        %v1877 = vsub.f32 %v1775, %v1859
        %v1878 = vsub.f32 %v1776, %v1859
        %v1879 = vsub.f32 %v1777, %v1859
        %v1880 = vsub.f32 %v1778, %v1859
        %v1881 = vsub.f32 %v1779, %v1859
        %v1882 = vsub.f32 %v1780, %v1859
        %v1883 = vsub.f32 %v1781, %v1859
        %v1884 = vsub.f32 %v1782, %v1859
        %v1885 = vsub.f32 %v1783, %v1859
        %v1886 = vsub.f32 %v1784, %v1859
        %v1887 = vsub.f32 %v1785, %v1859
        %v1888 = vsub.f32 %v1786, %v1859
        %v1889 = vsub.f32 %v1787, %v1859
        %v1890 = vsub.f32 %v1788, %v1859
        %v1891 = vsub.f32 %v1789, %v1859
        %v1892 = vmul.f32 %v1860, 1.442695
        %v1893 = vpow.pop %v1892
        %v1894 = vmul.f32 %v1861, 1.442695
        %v1895 = vpow.pop %v1894
        %v1896 = vmul.f32 %v1862, 1.442695
        %v1897 = vpow.pop %v1896
        %v1898 = vmul.f32 %v1863, 1.442695
        %v1899 = vpow.pop %v1898
        %v1900 = vmul.f32 %v1864, 1.442695
        %v1901 = vpow.pop %v1900
        %v1902 = vmul.f32 %v1865, 1.442695
        %v1903 = vpow.pop %v1902
        %v1904 = vmul.f32 %v1866, 1.442695
        %v1905 = vpow.pop %v1904
        %v1906 = vmul.f32 %v1867, 1.442695
        %v1907 = vpow.pop %v1906
        %v1908 = vmul.f32 %v1868, 1.442695
        %v1909 = vpow.pop %v1908
        %v1910 = vmul.f32 %v1869, 1.442695
        %v1911 = vpow.pop %v1910
        %v1912 = vmul.f32 %v1870, 1.442695
        %v1913 = vpow.pop %v1912
        %v1914 = vmul.f32 %v1871, 1.442695
        %v1915 = vpow.pop %v1914
        %v1916 = vmul.f32 %v1872, 1.442695
        %v1917 = vpow.pop %v1916
        %v1918 = vmul.f32 %v1873, 1.442695
        %v1919 = vpow.pop %v1918
        %v1920 = vmul.f32 %v1874, 1.442695
        %v1921 = vpow.pop %v1920
        %v1922 = vmul.f32 %v1875, 1.442695
        %v1923 = vpow.pop %v1922
        %v1924 = vmul.f32 %v1876, 1.442695
        %v1925 = vpow.pop %v1924
        %v1926 = vmul.f32 %v1877, 1.442695
        %v1927 = vpow.pop %v1926
        %v1928 = vmul.f32 %v1878, 1.442695
        %v1929 = vpow.pop %v1928
        %v1930 = vmul.f32 %v1879, 1.442695
        %v1931 = vpow.pop %v1930
        %v1932 = vmul.f32 %v1880, 1.442695
        %v1933 = vpow.pop %v1932
        %v1934 = vmul.f32 %v1881, 1.442695
        %v1935 = vpow.pop %v1934
        %v1936 = vmul.f32 %v1882, 1.442695
        %v1937 = vpow.pop %v1936
        %v1938 = vmul.f32 %v1883, 1.442695
        %v1939 = vpow.pop %v1938
        %v1940 = vmul.f32 %v1884, 1.442695
        %v1941 = vpow.pop %v1940
        %v1942 = vmul.f32 %v1885, 1.442695
        %v1943 = vpow.pop %v1942
        %v1944 = vmul.f32 %v1886, 1.442695
        %v1945 = vpow.pop %v1944
        %v1946 = vmul.f32 %v1887, 1.442695
        %v1947 = vpow.pop %v1946
        %v1948 = vmul.f32 %v1888, 1.442695
        %v1949 = vpow.pop %v1948
        %v1950 = vmul.f32 %v1889, 1.442695
        %v1951 = vpow.pop %v1950
        %v1952 = vmul.f32 %v1890, 1.442695
        %v1953 = vpow.pop %v1952
        %v1954 = vmul.f32 %v1891, 1.442695
        %v1955 = vpow.pop %v1954
        %v1956 = vmul.f32 %v398, %v1893
        %v1957 = vmul.f32 %v399, %v1895
        %v1958 = vmul.f32 %v400, %v1897
        %v1959 = vmul.f32 %v401, %v1899
        %v1960 = vmul.f32 %v402, %v1901
        %v1961 = vmul.f32 %v403, %v1903
        %v1962 = vmul.f32 %v404, %v1905
        %v1963 = vmul.f32 %v405, %v1907
        %v1964 = vmul.f32 %v406, %v1909
        %v1965 = vmul.f32 %v407, %v1911
        %v1966 = vmul.f32 %v408, %v1913
        %v1967 = vmul.f32 %v409, %v1915
        %v1968 = vmul.f32 %v410, %v1917
        %v1969 = vmul.f32 %v411, %v1919
        %v1970 = vmul.f32 %v412, %v1921
        %v1971 = vmul.f32 %v413, %v1923
        %v1972 = vmul.f32 %v414, %v1925
        %v1973 = vmul.f32 %v415, %v1927
        %v1974 = vmul.f32 %v416, %v1929
        %v1975 = vmul.f32 %v417, %v1931
        %v1976 = vmul.f32 %v418, %v1933
        %v1977 = vmul.f32 %v419, %v1935
        %v1978 = vmul.f32 %v420, %v1937
        %v1979 = vmul.f32 %v421, %v1939
        %v1980 = vmul.f32 %v422, %v1941
        %v1981 = vmul.f32 %v423, %v1943
        %v1982 = vmul.f32 %v424, %v1945
        %v1983 = vmul.f32 %v425, %v1947
        %v1984 = vmul.f32 %v426, %v1949
        %v1985 = vmul.f32 %v427, %v1951
        %v1986 = vmul.f32 %v428, %v1953
        %v1987 = vmul.f32 %v429, %v1955
        %v1988 = vadd.f32 %v1956, %v1957
        %v1989 = vadd.f32 %v1988, %v1958
        %v1990 = vadd.f32 %v1989, %v1959
        %v1991 = vadd.f32 %v1990, %v1960
        %v1992 = vadd.f32 %v1991, %v1961
        %v1993 = vadd.f32 %v1992, %v1962
        %v1994 = vadd.f32 %v1993, %v1963
        %v1995 = vadd.f32 %v1994, %v1964
        %v1996 = vadd.f32 %v1995, %v1965
        %v1997 = vadd.f32 %v1996, %v1966
        %v1998 = vadd.f32 %v1997, %v1967
        %v1999 = vadd.f32 %v1998, %v1968
        %v2000 = vadd.f32 %v1999, %v1969
        %v2001 = vadd.f32 %v2000, %v1970
        %v2002 = vadd.f32 %v2001, %v1971
        %v2003 = vadd.f32 %v2002, %v1972
        %v2004 = vadd.f32 %v2003, %v1973
        %v2005 = vadd.f32 %v2004, %v1974
        %v2006 = vadd.f32 %v2005, %v1975
        %v2007 = vadd.f32 %v2006, %v1976
        %v2008 = vadd.f32 %v2007, %v1977
        %v2009 = vadd.f32 %v2008, %v1978
        %v2010 = vadd.f32 %v2009, %v1979
        %v2011 = vadd.f32 %v2010, %v1980
        %v2012 = vadd.f32 %v2011, %v1981
        %v2013 = vadd.f32 %v2012, %v1982
        %v2014 = vadd.f32 %v2013, %v1983
        %v2015 = vadd.f32 %v2014, %v1984
        %v2016 = vadd.f32 %v2015, %v1985
        %v2017 = vadd.f32 %v2016, %v1986
        %v2018 = vadd.f32 %v2017, %v1987
        %v2019 = vrot.slane %v2018, 4
        %v2020 = vadd.f32 %v2018, %v2019
        %v2021 = vrot.slane %v2020, 2
        %v2022 = vadd.f32 %v2020, %v2021
        %v2023 = vrot.slane %v2022, 1
        %v2024 = vadd.f32 %v2022, %v2023
        %vm2025 = vcmp.gt.f32.partialorder %v2024, 0.0
        %v2026 = vsel %vm2025, %v2024, 1.0
        %v2027 = vrcp.pop %v2026
        %s2028 = scalar_lea.vmem %s278, 128 [#allocation6]
        %v2029 = vld [vmem:[%s2028] sm:$0xff]
        %v2030 = vld [vmem:[%s2028 + $0x8] sm:$0xff]
        %v2031 = vld [vmem:[%s2028 + $0x10] sm:$0xff]
        %v2032 = vld [vmem:[%s2028 + $0x18] sm:$0xff]
        %v2033 = vld [vmem:[%s2028 + $0x20] sm:$0xff]
        %v2034 = vld [vmem:[%s2028 + $0x28] sm:$0xff]
        %v2035 = vld [vmem:[%s2028 + $0x30] sm:$0xff]
        %v2036 = vld [vmem:[%s2028 + $0x38] sm:$0xff]
        %v2037 = vld [vmem:[%s2028 + $0x40] sm:$0xff]
        %v2038 = vld [vmem:[%s2028 + $0x48] sm:$0xff]
        %v2039 = vld [vmem:[%s2028 + $0x50] sm:$0xff]
        %v2040 = vld [vmem:[%s2028 + $0x58] sm:$0xff]
        %v2041 = vld [vmem:[%s2028 + $0x60] sm:$0xff]
        %v2042 = vld [vmem:[%s2028 + $0x68] sm:$0xff]
        %v2043 = vld [vmem:[%s2028 + $0x70] sm:$0xff]
        %v2044 = vld [vmem:[%s2028 + $0x78] sm:$0xff]
        %2045 = vxpose.xlu0.b32.start [1/16] %v2027, 128
        %2046 = vxpose.xlu0.b32.cont [2/16] 0.0, 128
        %2047 = vxpose.xlu0.b32.cont [3/16] 0.0, 128
        %2048 = vxpose.xlu0.b32.cont [4/16] 0.0, 128
        %2049 = vxpose.xlu0.b32.cont [5/16] 0.0, 128
        %2050 = vxpose.xlu0.b32.cont [6/16] 0.0, 128
        %2051 = vxpose.xlu0.b32.cont [7/16] 0.0, 128
        %2052 = vxpose.xlu0.b32.cont [8/16] 0.0, 128
        %2053 = vxpose.xlu0.b32.cont [9/16] 0.0, 128
        %2054 = vxpose.xlu0.b32.cont [10/16] 0.0, 128
        %2055 = vxpose.xlu0.b32.cont [11/16] 0.0, 128
        %2056 = vxpose.xlu0.b32.cont [12/16] 0.0, 128
        %2057 = vxpose.xlu0.b32.cont [13/16] 0.0, 128
        %2058 = vxpose.xlu0.b32.cont [14/16] 0.0, 128
        %2059 = vxpose.xlu0.b32.cont [15/16] 0.0, 128
        %2060 = vxpose.xlu0.b32.end [16/16] 0.0, 128
        %v2061 = vpop.trf.xlu0
        %v2062 = vpop.trf.xlu0
        %v2063 = vpop.trf.xlu0
        %v2064 = vpop.trf.xlu0
        %v2065 = vpop.trf.xlu0
        %v2066 = vpop.trf.xlu0
        %v2067 = vpop.trf.xlu0
        %v2068 = vpop.trf.xlu0
        %v2069 = vpop.trf.xlu0
        %v2070 = vpop.trf.xlu0
        %v2071 = vpop.trf.xlu0
        %v2072 = vpop.trf.xlu0
        %v2073 = vpop.trf.xlu0
        %v2074 = vpop.trf.xlu0
        %v2075 = vpop.trf.xlu0
        %v2076 = vpop.trf.xlu0
        %2078 = vset.pattern.permute.xlu0 0
        %2079 = vperm.xlu0 %2078, %v2061
        %v2080 = vpop.permute.xlu0 %2079
        %2083 = vset.pattern.permute.xlu0 0
        %2084 = vperm.xlu0 %2083, %v2062
        %v2085 = vpop.permute.xlu0 %2084
        %2088 = vset.pattern.permute.xlu0 0
        %2089 = vperm.xlu0 %2088, %v2063
        %v2090 = vpop.permute.xlu0 %2089
        %2093 = vset.pattern.permute.xlu0 0
        %2094 = vperm.xlu0 %2093, %v2064
        %v2095 = vpop.permute.xlu0 %2094
        %2098 = vset.pattern.permute.xlu0 0
        %2099 = vperm.xlu0 %2098, %v2065
        %v2100 = vpop.permute.xlu0 %2099
        %2103 = vset.pattern.permute.xlu0 0
        %2104 = vperm.xlu0 %2103, %v2066
        %v2105 = vpop.permute.xlu0 %2104
        %2108 = vset.pattern.permute.xlu0 0
        %2109 = vperm.xlu0 %2108, %v2067
        %v2110 = vpop.permute.xlu0 %2109
        %2113 = vset.pattern.permute.xlu0 0
        %2114 = vperm.xlu0 %2113, %v2068
        %v2115 = vpop.permute.xlu0 %2114
        %2118 = vset.pattern.permute.xlu0 0
        %2119 = vperm.xlu0 %2118, %v2069
        %v2120 = vpop.permute.xlu0 %2119
        %2123 = vset.pattern.permute.xlu0 0
        %2124 = vperm.xlu0 %2123, %v2070
        %v2125 = vpop.permute.xlu0 %2124
        %2128 = vset.pattern.permute.xlu0 0
        %2129 = vperm.xlu0 %2128, %v2071
        %v2130 = vpop.permute.xlu0 %2129
        %2133 = vset.pattern.permute.xlu0 0
        %2134 = vperm.xlu0 %2133, %v2072
        %v2135 = vpop.permute.xlu0 %2134
        %2138 = vset.pattern.permute.xlu0 0
        %2139 = vperm.xlu0 %2138, %v2073
        %v2140 = vpop.permute.xlu0 %2139
        %2143 = vset.pattern.permute.xlu0 0
        %2144 = vperm.xlu0 %2143, %v2074
        %v2145 = vpop.permute.xlu0 %2144
        %2148 = vset.pattern.permute.xlu0 0
        %2149 = vperm.xlu0 %2148, %v2075
        %v2150 = vpop.permute.xlu0 %2149
        %2153 = vset.pattern.permute.xlu0 0
        %2154 = vperm.xlu0 %2153, %v2076
        %v2155 = vpop.permute.xlu0 %2154
        %v2157 = vmul.f32 %v2029, %v2080
        %v2158 = vmul.f32 %v2030, %v2085
        %v2159 = vmul.f32 %v2031, %v2090
        %v2160 = vmul.f32 %v2032, %v2095
        %v2161 = vmul.f32 %v2033, %v2100
        %v2162 = vmul.f32 %v2034, %v2105
        %v2163 = vmul.f32 %v2035, %v2110
        %v2164 = vmul.f32 %v2036, %v2115
        %v2165 = vmul.f32 %v2037, %v2120
        %v2166 = vmul.f32 %v2038, %v2125
        %v2167 = vmul.f32 %v2039, %v2130
        %v2168 = vmul.f32 %v2040, %v2135
        %v2169 = vmul.f32 %v2041, %v2140
        %v2170 = vmul.f32 %v2042, %v2145
        %v2171 = vmul.f32 %v2043, %v2150
        %v2172 = vmul.f32 %v2044, %v2155
        %2173 = vmatprep.subr.mxu0 0.0
        %2174 = vmatpush1.msra.mxu0 %v2157
        %2175 = vmatprep.subr.mxu0 0.0
        %2176 = vmatpush1.msra.mxu0 %v2158
        %2177 = vmatprep.subr.mxu0 0.0
        %2178 = vmatpush1.msra.mxu0 %v2159
        %2179 = vmatprep.subr.mxu0 0.0
        %2180 = vmatpush1.msra.mxu0 %v2160
        %2181 = vmatprep.subr.mxu0 0.0
        %2182 = vmatpush1.msra.mxu0 %v2161
        %2183 = vmatprep.subr.mxu0 0.0
        %2184 = vmatpush1.msra.mxu0 %v2162
        %2185 = vmatprep.subr.mxu0 0.0
        %2186 = vmatpush1.msra.mxu0 %v2163
        %2187 = vmatprep.subr.mxu0 0.0
        %2188 = vmatpush1.msra.mxu0 %v2164
        %2189 = vmatprep.subr.mxu0 0.0
        %2190 = vmatpush1.msra.mxu0 %v2165
        %2191 = vmatprep.subr.mxu0 0.0
        %2192 = vmatpush1.msra.mxu0 %v2166
        %2193 = vmatprep.subr.mxu0 0.0
        %2194 = vmatpush1.msra.mxu0 %v2167
        %2195 = vmatprep.subr.mxu0 0.0
        %2196 = vmatpush1.msra.mxu0 %v2168
        %2197 = vmatprep.subr.mxu0 0.0
        %2198 = vmatpush1.msra.mxu0 %v2169
        %2199 = vmatprep.subr.mxu0 0.0
        %2200 = vmatpush1.msra.mxu0 %v2170
        %2201 = vmatprep.subr.mxu0 0.0
        %2202 = vmatpush1.msra.mxu0 %v2171
        %2203 = vmatprep.subr.mxu0 0.0
        %2204 = vmatpush1.msra.mxu0 %v2172
        %2205 = vmatprep.subr.mxu0 0.0
        %2206 = vmatpush1.msra.mxu0 0.0
        %2207 = vmatprep.subr.mxu0 0.0
        %2208 = vmatpush1.msra.mxu0 0.0
        %2209 = vmatprep.subr.mxu0 0.0
        %2210 = vmatpush1.msra.mxu0 0.0
        %2211 = vmatprep.subr.mxu0 0.0
        %2212 = vmatpush1.msra.mxu0 0.0
        %2213 = vmatprep.subr.mxu0 0.0
        %2214 = vmatpush1.msra.mxu0 0.0
        %2215 = vmatprep.subr.mxu0 0.0
        %2216 = vmatpush1.msra.mxu0 0.0
        %2217 = vmatprep.subr.mxu0 0.0
        %2218 = vmatpush1.msra.mxu0 0.0
        %2219 = vmatprep.subr.mxu0 0.0
        %2220 = vmatpush1.msra.mxu0 0.0
        %2221 = vmatprep.subr.mxu0 0.0
        %2222 = vmatpush1.msra.mxu0 0.0
        %2223 = vmatprep.subr.mxu0 0.0
        %2224 = vmatpush1.msra.mxu0 0.0
        %2225 = vmatprep.subr.mxu0 0.0
        %2226 = vmatpush1.msra.mxu0 0.0
        %2227 = vmatprep.subr.mxu0 0.0
        %2228 = vmatpush1.msra.mxu0 0.0
        %2229 = vmatprep.subr.mxu0 0.0
        %2230 = vmatpush1.msra.mxu0 0.0
        %2231 = vmatprep.subr.mxu0 0.0
        %2232 = vmatpush1.msra.mxu0 0.0
        %2233 = vmatprep.subr.mxu0 0.0
        %2234 = vmatpush1.msra.mxu0 0.0
        %2235 = vmatprep.subr.mxu0 0.0
        %2236 = vmatpush1.msra.mxu0 0.0
        %2237 = vmatprep.mubr.f32.mxu0 0.0
        %2238 = vmatmul.mubr.f32.gmra.mrb[0].mxu0 %v1956
        %v2239 = vpop.f32.mrb[0].mxu0
        %v2240 = vadd.f32 0.0, %v2239
        %v2241 = vpop.f32.mrb[0].mxu0
        %2242 = vmatprep.mubr.f32.mxu0 0.0
        %2243 = vmatmul.mubr.f32.gmra.mrb[0].mxu0 %v1957
        %v2244 = vpop.f32.mrb[0].mxu0
        %v2245 = vadd.f32 0.0, %v2244
        %v2246 = vpop.f32.mrb[0].mxu0
        %2247 = vmatprep.mubr.f32.mxu0 0.0
        %2248 = vmatmul.mubr.f32.gmra.mrb[0].mxu0 %v1958
        %v2249 = vpop.f32.mrb[0].mxu0
        %v2250 = vadd.f32 0.0, %v2249
        %v2251 = vpop.f32.mrb[0].mxu0
        %2252 = vmatprep.mubr.f32.mxu0 0.0
        %2253 = vmatmul.mubr.f32.gmra.mrb[0].mxu0 %v1959
        %v2254 = vpop.f32.mrb[0].mxu0
        %v2255 = vadd.f32 0.0, %v2254
        %v2256 = vpop.f32.mrb[0].mxu0
        %2257 = vmatprep.mubr.f32.mxu0 0.0
        %2258 = vmatmul.mubr.f32.gmra.mrb[0].mxu0 %v1960
        %v2259 = vpop.f32.mrb[0].mxu0
        %v2260 = vadd.f32 0.0, %v2259
        %v2261 = vpop.f32.mrb[0].mxu0
        %2262 = vmatprep.mubr.f32.mxu0 0.0
        %2263 = vmatmul.mubr.f32.gmra.mrb[0].mxu0 %v1961
        %v2264 = vpop.f32.mrb[0].mxu0
        %v2265 = vadd.f32 0.0, %v2264
        %v2266 = vpop.f32.mrb[0].mxu0
        %2267 = vmatprep.mubr.f32.mxu0 0.0
        %2268 = vmatmul.mubr.f32.gmra.mrb[0].mxu0 %v1962
        %v2269 = vpop.f32.mrb[0].mxu0
        %v2270 = vadd.f32 0.0, %v2269
        %v2271 = vpop.f32.mrb[0].mxu0
        %2272 = vmatprep.mubr.f32.mxu0 0.0
        %2273 = vmatmul.mubr.f32.gmra.mrb[0].mxu0 %v1963
        %v2274 = vpop.f32.mrb[0].mxu0
        %v2275 = vadd.f32 0.0, %v2274
        %v2276 = vpop.f32.mrb[0].mxu0
        %2277 = vmatprep.mubr.f32.mxu0 0.0
        %2278 = vmatmul.mubr.f32.gmra.mrb[0].mxu0 %v1964
        %v2279 = vpop.f32.mrb[0].mxu0
        %v2280 = vadd.f32 0.0, %v2279
        %v2281 = vpop.f32.mrb[0].mxu0
        %2282 = vmatprep.mubr.f32.mxu0 0.0
        %2283 = vmatmul.mubr.f32.gmra.mrb[0].mxu0 %v1965
        %v2284 = vpop.f32.mrb[0].mxu0
        %v2285 = vadd.f32 0.0, %v2284
        %v2286 = vpop.f32.mrb[0].mxu0
        %2287 = vmatprep.mubr.f32.mxu0 0.0
        %2288 = vmatmul.mubr.f32.gmra.mrb[0].mxu0 %v1966
        %v2289 = vpop.f32.mrb[0].mxu0
        %v2290 = vadd.f32 0.0, %v2289
        %v2291 = vpop.f32.mrb[0].mxu0
        %2292 = vmatprep.mubr.f32.mxu0 0.0
        %2293 = vmatmul.mubr.f32.gmra.mrb[0].mxu0 %v1967
        %v2294 = vpop.f32.mrb[0].mxu0
        %v2295 = vadd.f32 0.0, %v2294
        %v2296 = vpop.f32.mrb[0].mxu0
        %2297 = vmatprep.mubr.f32.mxu0 0.0
        %2298 = vmatmul.mubr.f32.gmra.mrb[0].mxu0 %v1968
        %v2299 = vpop.f32.mrb[0].mxu0
        %v2300 = vadd.f32 0.0, %v2299
        %v2301 = vpop.f32.mrb[0].mxu0
        %2302 = vmatprep.mubr.f32.mxu0 0.0
        %2303 = vmatmul.mubr.f32.gmra.mrb[0].mxu0 %v1969
        %v2304 = vpop.f32.mrb[0].mxu0
        %v2305 = vadd.f32 0.0, %v2304
        %v2306 = vpop.f32.mrb[0].mxu0
        %2307 = vmatprep.mubr.f32.mxu0 0.0
        %2308 = vmatmul.mubr.f32.gmra.mrb[0].mxu0 %v1970
        %v2309 = vpop.f32.mrb[0].mxu0
        %v2310 = vadd.f32 0.0, %v2309
        %v2311 = vpop.f32.mrb[0].mxu0
        %2312 = vmatprep.mubr.f32.mxu0 0.0
        %2313 = vmatmul.mubr.f32.gmra.mrb[0].mxu0 %v1971
        %v2314 = vpop.f32.mrb[0].mxu0
        %v2315 = vadd.f32 0.0, %v2314
        %v2316 = vpop.f32.mrb[0].mxu0
        %2317 = vmatprep.mubr.f32.mxu0 0.0
        %2318 = vmatmul.mubr.f32.gmra.mrb[0].mxu0 %v1972
        %v2319 = vpop.f32.mrb[0].mxu0
        %v2320 = vadd.f32 0.0, %v2319
        %v2321 = vpop.f32.mrb[0].mxu0
        %2322 = vmatprep.mubr.f32.mxu0 0.0
        %2323 = vmatmul.mubr.f32.gmra.mrb[0].mxu0 %v1973
        %v2324 = vpop.f32.mrb[0].mxu0
        %v2325 = vadd.f32 0.0, %v2324
        %v2326 = vpop.f32.mrb[0].mxu0
        %2327 = vmatprep.mubr.f32.mxu0 0.0
        %2328 = vmatmul.mubr.f32.gmra.mrb[0].mxu0 %v1974
        %v2329 = vpop.f32.mrb[0].mxu0
        %v2330 = vadd.f32 0.0, %v2329
        %v2331 = vpop.f32.mrb[0].mxu0
        %2332 = vmatprep.mubr.f32.mxu0 0.0
        %2333 = vmatmul.mubr.f32.gmra.mrb[0].mxu0 %v1975
        %v2334 = vpop.f32.mrb[0].mxu0
        %v2335 = vadd.f32 0.0, %v2334
        %v2336 = vpop.f32.mrb[0].mxu0
        %2337 = vmatprep.mubr.f32.mxu0 0.0
        %2338 = vmatmul.mubr.f32.gmra.mrb[0].mxu0 %v1976
        %v2339 = vpop.f32.mrb[0].mxu0
        %v2340 = vadd.f32 0.0, %v2339
        %v2341 = vpop.f32.mrb[0].mxu0
        %2342 = vmatprep.mubr.f32.mxu0 0.0
        %2343 = vmatmul.mubr.f32.gmra.mrb[0].mxu0 %v1977
        %v2344 = vpop.f32.mrb[0].mxu0
        %v2345 = vadd.f32 0.0, %v2344
        %v2346 = vpop.f32.mrb[0].mxu0
        %2347 = vmatprep.mubr.f32.mxu0 0.0
        %2348 = vmatmul.mubr.f32.gmra.mrb[0].mxu0 %v1978
        %v2349 = vpop.f32.mrb[0].mxu0
        %v2350 = vadd.f32 0.0, %v2349
        %v2351 = vpop.f32.mrb[0].mxu0
        %2352 = vmatprep.mubr.f32.mxu0 0.0
        %2353 = vmatmul.mubr.f32.gmra.mrb[0].mxu0 %v1979
        %v2354 = vpop.f32.mrb[0].mxu0
        %v2355 = vadd.f32 0.0, %v2354
        %v2356 = vpop.f32.mrb[0].mxu0
        %2357 = vmatprep.mubr.f32.mxu0 0.0
        %2358 = vmatmul.mubr.f32.gmra.mrb[0].mxu0 %v1980
        %v2359 = vpop.f32.mrb[0].mxu0
        %v2360 = vadd.f32 0.0, %v2359
        %v2361 = vpop.f32.mrb[0].mxu0
        %2362 = vmatprep.mubr.f32.mxu0 0.0
        %2363 = vmatmul.mubr.f32.gmra.mrb[0].mxu0 %v1981
        %v2364 = vpop.f32.mrb[0].mxu0
        %v2365 = vadd.f32 0.0, %v2364
        %v2366 = vpop.f32.mrb[0].mxu0
        %2367 = vmatprep.mubr.f32.mxu0 0.0
        %2368 = vmatmul.mubr.f32.gmra.mrb[0].mxu0 %v1982
        %v2369 = vpop.f32.mrb[0].mxu0
        %v2370 = vadd.f32 0.0, %v2369
        %v2371 = vpop.f32.mrb[0].mxu0
        %2372 = vmatprep.mubr.f32.mxu0 0.0
        %2373 = vmatmul.mubr.f32.gmra.mrb[0].mxu0 %v1983
        %v2374 = vpop.f32.mrb[0].mxu0
        %v2375 = vadd.f32 0.0, %v2374
        %v2376 = vpop.f32.mrb[0].mxu0
        %2377 = vmatprep.mubr.f32.mxu0 0.0
        %2378 = vmatmul.mubr.f32.gmra.mrb[0].mxu0 %v1984
        %v2379 = vpop.f32.mrb[0].mxu0
        %v2380 = vadd.f32 0.0, %v2379
        %v2381 = vpop.f32.mrb[0].mxu0
        %2382 = vmatprep.mubr.f32.mxu0 0.0
        %2383 = vmatmul.mubr.f32.gmra.mrb[0].mxu0 %v1985
        %v2384 = vpop.f32.mrb[0].mxu0
        %v2385 = vadd.f32 0.0, %v2384
        %v2386 = vpop.f32.mrb[0].mxu0
        %2387 = vmatprep.mubr.f32.mxu0 0.0
        %2388 = vmatmul.mubr.f32.gmra.mrb[0].mxu0 %v1986
        %v2389 = vpop.f32.mrb[0].mxu0
        %v2390 = vadd.f32 0.0, %v2389
        %v2391 = vpop.f32.mrb[0].mxu0
        %2392 = vmatprep.mubr.f32.mxu0 0.0
        %2393 = vmatmul.mubr.f32.gmra.mrb[0].mxu0 %v1987
        %v2394 = vpop.f32.mrb[0].mxu0
        %v2395 = vadd.f32 0.0, %v2394
        %v2396 = vpop.f32.mrb[0].mxu0
        %2397 = vdwg.mxu0
        %v2398 = vld [vmem:[#allocation2] sm:$0xff]
        %v2399 = vld [vmem:[#allocation2 + $0x8] sm:$0xff]
        %v2400 = vld [vmem:[#allocation2 + $0x10] sm:$0xff]
        %v2401 = vld [vmem:[#allocation2 + $0x18] sm:$0xff]
        %v2402 = vld [vmem:[#allocation2 + $0x20] sm:$0xff]
        %v2403 = vld [vmem:[#allocation2 + $0x28] sm:$0xff]
        %v2404 = vld [vmem:[#allocation2 + $0x30] sm:$0xff]
        %v2405 = vld [vmem:[#allocation2 + $0x38] sm:$0xff]
        %v2406 = vld [vmem:[#allocation2 + $0x40] sm:$0xff]
        %v2407 = vld [vmem:[#allocation2 + $0x48] sm:$0xff]
        %v2408 = vld [vmem:[#allocation2 + $0x50] sm:$0xff]
        %v2409 = vld [vmem:[#allocation2 + $0x58] sm:$0xff]
        %v2410 = vld [vmem:[#allocation2 + $0x60] sm:$0xff]
        %v2411 = vld [vmem:[#allocation2 + $0x68] sm:$0xff]
        %v2412 = vld [vmem:[#allocation2 + $0x70] sm:$0xff]
        %v2413 = vld [vmem:[#allocation2 + $0x78] sm:$0xff]
        %v2414 = vld [vmem:[#allocation2 + $0x80] sm:$0xff]
        %v2415 = vld [vmem:[#allocation2 + $0x88] sm:$0xff]
        %v2416 = vld [vmem:[#allocation2 + $0x90] sm:$0xff]
        %v2417 = vld [vmem:[#allocation2 + $0x98] sm:$0xff]
        %v2418 = vld [vmem:[#allocation2 + $0xa0] sm:$0xff]
        %v2419 = vld [vmem:[#allocation2 + $0xa8] sm:$0xff]
        %v2420 = vld [vmem:[#allocation2 + $0xb0] sm:$0xff]
        %v2421 = vld [vmem:[#allocation2 + $0xb8] sm:$0xff]
        %v2422 = vld [vmem:[#allocation2 + $0xc0] sm:$0xff]
        %v2423 = vld [vmem:[#allocation2 + $0xc8] sm:$0xff]
        %v2424 = vld [vmem:[#allocation2 + $0xd0] sm:$0xff]
        %v2425 = vld [vmem:[#allocation2 + $0xd8] sm:$0xff]
        %v2426 = vld [vmem:[#allocation2 + $0xe0] sm:$0xff]
        %v2427 = vld [vmem:[#allocation2 + $0xe8] sm:$0xff]
        %v2428 = vld [vmem:[#allocation2 + $0xf0] sm:$0xff]
        %v2429 = vld [vmem:[#allocation2 + $0xf8] sm:$0xff]
        %2462 = vrot.lane.b32.xlu0 %v2240, 32
        %v2463 = vpop.permute.xlu0 %2462
        %2464 = vrot.lane.b32.xlu0 %v2245, 32
        %v2465 = vpop.permute.xlu0 %2464
        %2466 = vrot.lane.b32.xlu0 %v2250, 32
        %v2467 = vpop.permute.xlu0 %2466
        %2468 = vrot.lane.b32.xlu0 %v2255, 32
        %v2469 = vpop.permute.xlu0 %2468
        %2470 = vrot.lane.b32.xlu0 %v2260, 32
        %v2471 = vpop.permute.xlu0 %2470
        %2472 = vrot.lane.b32.xlu0 %v2265, 32
        %v2473 = vpop.permute.xlu0 %2472
        %2474 = vrot.lane.b32.xlu0 %v2270, 32
        %v2475 = vpop.permute.xlu0 %2474
        %2476 = vrot.lane.b32.xlu0 %v2275, 32
        %v2477 = vpop.permute.xlu0 %2476
        %2478 = vrot.lane.b32.xlu0 %v2280, 32
        %v2479 = vpop.permute.xlu0 %2478
        %2480 = vrot.lane.b32.xlu0 %v2285, 32
        %v2481 = vpop.permute.xlu0 %2480
        %2482 = vrot.lane.b32.xlu0 %v2290, 32
        %v2483 = vpop.permute.xlu0 %2482
        %2484 = vrot.lane.b32.xlu0 %v2295, 32
        %v2485 = vpop.permute.xlu0 %2484
        %2486 = vrot.lane.b32.xlu0 %v2300, 32
        %v2487 = vpop.permute.xlu0 %2486
        %2488 = vrot.lane.b32.xlu0 %v2305, 32
        %v2489 = vpop.permute.xlu0 %2488
        %2490 = vrot.lane.b32.xlu0 %v2310, 32
        %v2491 = vpop.permute.xlu0 %2490
        %2492 = vrot.lane.b32.xlu0 %v2315, 32
        %v2493 = vpop.permute.xlu0 %2492
        %2494 = vrot.lane.b32.xlu0 %v2320, 32
        %v2495 = vpop.permute.xlu0 %2494
        %2496 = vrot.lane.b32.xlu0 %v2325, 32
        %v2497 = vpop.permute.xlu0 %2496
        %2498 = vrot.lane.b32.xlu0 %v2330, 32
        %v2499 = vpop.permute.xlu0 %2498
        %2500 = vrot.lane.b32.xlu0 %v2335, 32
        %v2501 = vpop.permute.xlu0 %2500
        %2502 = vrot.lane.b32.xlu0 %v2340, 32
        %v2503 = vpop.permute.xlu0 %2502
        %2504 = vrot.lane.b32.xlu0 %v2345, 32
        %v2505 = vpop.permute.xlu0 %2504
        %2506 = vrot.lane.b32.xlu0 %v2350, 32
        %v2507 = vpop.permute.xlu0 %2506
        %2508 = vrot.lane.b32.xlu0 %v2355, 32
        %v2509 = vpop.permute.xlu0 %2508
        %2510 = vrot.lane.b32.xlu0 %v2360, 32
        %v2511 = vpop.permute.xlu0 %2510
        %2512 = vrot.lane.b32.xlu0 %v2365, 32
        %v2513 = vpop.permute.xlu0 %2512
        %2514 = vrot.lane.b32.xlu0 %v2370, 32
        %v2515 = vpop.permute.xlu0 %2514
        %2516 = vrot.lane.b32.xlu0 %v2375, 32
        %v2517 = vpop.permute.xlu0 %2516
        %2518 = vrot.lane.b32.xlu0 %v2380, 32
        %v2519 = vpop.permute.xlu0 %2518
        %2520 = vrot.lane.b32.xlu0 %v2385, 32
        %v2521 = vpop.permute.xlu0 %2520
        %2522 = vrot.lane.b32.xlu0 %v2390, 32
        %v2523 = vpop.permute.xlu0 %2522
        %2524 = vrot.lane.b32.xlu0 %v2395, 32
        %v2525 = vpop.permute.xlu0 %2524
        %v2558 = vadd.f32 %v2398, %v2463
        %v2559 = vadd.f32 %v2399, %v2465
        %v2560 = vadd.f32 %v2400, %v2467
        %v2561 = vadd.f32 %v2401, %v2469
        %v2562 = vadd.f32 %v2402, %v2471
        %v2563 = vadd.f32 %v2403, %v2473
        %v2564 = vadd.f32 %v2404, %v2475
        %v2565 = vadd.f32 %v2405, %v2477
        %v2566 = vadd.f32 %v2406, %v2479
        %v2567 = vadd.f32 %v2407, %v2481
        %v2568 = vadd.f32 %v2408, %v2483
        %v2569 = vadd.f32 %v2409, %v2485
        %v2570 = vadd.f32 %v2410, %v2487
        %v2571 = vadd.f32 %v2411, %v2489
        %v2572 = vadd.f32 %v2412, %v2491
        %v2573 = vadd.f32 %v2413, %v2493
        %v2574 = vadd.f32 %v2414, %v2495
        %v2575 = vadd.f32 %v2415, %v2497
        %v2576 = vadd.f32 %v2416, %v2499
        %v2577 = vadd.f32 %v2417, %v2501
        %v2578 = vadd.f32 %v2418, %v2503
        %v2579 = vadd.f32 %v2419, %v2505
        %v2580 = vadd.f32 %v2420, %v2507
        %v2581 = vadd.f32 %v2421, %v2509
        %v2582 = vadd.f32 %v2422, %v2511
        %v2583 = vadd.f32 %v2423, %v2513
        %v2584 = vadd.f32 %v2424, %v2515
        %v2585 = vadd.f32 %v2425, %v2517
        %v2586 = vadd.f32 %v2426, %v2519
        %v2587 = vadd.f32 %v2427, %v2521
        %v2588 = vadd.f32 %v2428, %v2523
        %v2589 = vadd.f32 %v2429, %v2525
        %vm2590 = vcmask 523520
        %2591 = vst.msk [vmem:[#allocation2] sm:$0xff] %vm2590, %v2558
        %2592 = vst.msk [vmem:[#allocation2 + $0x8] sm:$0xff] %vm2590, %v2559
        %2593 = vst.msk [vmem:[#allocation2 + $0x10] sm:$0xff] %vm2590, %v2560
        %2594 = vst.msk [vmem:[#allocation2 + $0x18] sm:$0xff] %vm2590, %v2561
        %2595 = vst.msk [vmem:[#allocation2 + $0x20] sm:$0xff] %vm2590, %v2562
        %2596 = vst.msk [vmem:[#allocation2 + $0x28] sm:$0xff] %vm2590, %v2563
        %2597 = vst.msk [vmem:[#allocation2 + $0x30] sm:$0xff] %vm2590, %v2564
        %2598 = vst.msk [vmem:[#allocation2 + $0x38] sm:$0xff] %vm2590, %v2565
        %2599 = vst.msk [vmem:[#allocation2 + $0x40] sm:$0xff] %vm2590, %v2566
        %2600 = vst.msk [vmem:[#allocation2 + $0x48] sm:$0xff] %vm2590, %v2567
        %2601 = vst.msk [vmem:[#allocation2 + $0x50] sm:$0xff] %vm2590, %v2568
        %2602 = vst.msk [vmem:[#allocation2 + $0x58] sm:$0xff] %vm2590, %v2569
        %2603 = vst.msk [vmem:[#allocation2 + $0x60] sm:$0xff] %vm2590, %v2570
        %2604 = vst.msk [vmem:[#allocation2 + $0x68] sm:$0xff] %vm2590, %v2571
        %2605 = vst.msk [vmem:[#allocation2 + $0x70] sm:$0xff] %vm2590, %v2572
        %2606 = vst.msk [vmem:[#allocation2 + $0x78] sm:$0xff] %vm2590, %v2573
        %2607 = vst.msk [vmem:[#allocation2 + $0x80] sm:$0xff] %vm2590, %v2574
        %2608 = vst.msk [vmem:[#allocation2 + $0x88] sm:$0xff] %vm2590, %v2575
        %2609 = vst.msk [vmem:[#allocation2 + $0x90] sm:$0xff] %vm2590, %v2576
        %2610 = vst.msk [vmem:[#allocation2 + $0x98] sm:$0xff] %vm2590, %v2577
        %2611 = vst.msk [vmem:[#allocation2 + $0xa0] sm:$0xff] %vm2590, %v2578
        %2612 = vst.msk [vmem:[#allocation2 + $0xa8] sm:$0xff] %vm2590, %v2579
        %2613 = vst.msk [vmem:[#allocation2 + $0xb0] sm:$0xff] %vm2590, %v2580
        %2614 = vst.msk [vmem:[#allocation2 + $0xb8] sm:$0xff] %vm2590, %v2581
        %2615 = vst.msk [vmem:[#allocation2 + $0xc0] sm:$0xff] %vm2590, %v2582
        %2616 = vst.msk [vmem:[#allocation2 + $0xc8] sm:$0xff] %vm2590, %v2583
        %2617 = vst.msk [vmem:[#allocation2 + $0xd0] sm:$0xff] %vm2590, %v2584
        %2618 = vst.msk [vmem:[#allocation2 + $0xd8] sm:$0xff] %vm2590, %v2585
        %2619 = vst.msk [vmem:[#allocation2 + $0xe0] sm:$0xff] %vm2590, %v2586
        %2620 = vst.msk [vmem:[#allocation2 + $0xe8] sm:$0xff] %vm2590, %v2587
        %2621 = vst.msk [vmem:[#allocation2 + $0xf0] sm:$0xff] %vm2590, %v2588
        %2622 = vst.msk [vmem:[#allocation2 + $0xf8] sm:$0xff] %vm2590, %v2589
        %s2623 = scalar_lea.vmem [#allocation8], 512
        %v2624 = vld [vmem:[%s2623] sm:$0xff]
        %v2625 = vld [vmem:[%s2623 + $0x8] sm:$0xff]
        %v2626 = vld [vmem:[%s2623 + $0x10] sm:$0xff]
        %v2627 = vld [vmem:[%s2623 + $0x18] sm:$0xff]
        %v2628 = vld [vmem:[%s2623 + $0x20] sm:$0xff]
        %v2629 = vld [vmem:[%s2623 + $0x28] sm:$0xff]
        %v2630 = vld [vmem:[%s2623 + $0x30] sm:$0xff]
        %v2631 = vld [vmem:[%s2623 + $0x38] sm:$0xff]
        %v2632 = vld [vmem:[%s2623 + $0x40] sm:$0xff]
        %v2633 = vld [vmem:[%s2623 + $0x48] sm:$0xff]
        %v2634 = vld [vmem:[%s2623 + $0x50] sm:$0xff]
        %v2635 = vld [vmem:[%s2623 + $0x58] sm:$0xff]
        %v2636 = vld [vmem:[%s2623 + $0x60] sm:$0xff]
        %v2637 = vld [vmem:[%s2623 + $0x68] sm:$0xff]
        %v2638 = vld [vmem:[%s2623 + $0x70] sm:$0xff]
        %v2639 = vld [vmem:[%s2623 + $0x78] sm:$0xff]
        %v2640 = vld [vmem:[%s2623 + $0x80] sm:$0xff]
        %v2641 = vld [vmem:[%s2623 + $0x88] sm:$0xff]
        %v2642 = vld [vmem:[%s2623 + $0x90] sm:$0xff]
        %v2643 = vld [vmem:[%s2623 + $0x98] sm:$0xff]
        %v2644 = vld [vmem:[%s2623 + $0xa0] sm:$0xff]
        %v2645 = vld [vmem:[%s2623 + $0xa8] sm:$0xff]
        %v2646 = vld [vmem:[%s2623 + $0xb0] sm:$0xff]
        %v2647 = vld [vmem:[%s2623 + $0xb8] sm:$0xff]
        %v2648 = vld [vmem:[%s2623 + $0xc0] sm:$0xff]
        %v2649 = vld [vmem:[%s2623 + $0xc8] sm:$0xff]
        %v2650 = vld [vmem:[%s2623 + $0xd0] sm:$0xff]
        %v2651 = vld [vmem:[%s2623 + $0xd8] sm:$0xff]
        %v2652 = vld [vmem:[%s2623 + $0xe0] sm:$0xff]
        %v2653 = vld [vmem:[%s2623 + $0xe8] sm:$0xff]
        %v2654 = vld [vmem:[%s2623 + $0xf0] sm:$0xff]
        %v2655 = vld [vmem:[%s2623 + $0xf8] sm:$0xff]
        %s2656 = scalar_lea.vmem %s291, 2 [#allocation9]
        %v2657 = vld [vmem:[%s2656] sm:$0x1]
        %2659 = vset.pattern.permute.xlu0 0
        %2660 = vperm.xlu0 %2659, %v2624
        %v2661 = vpop.permute.xlu0 %2660
        %2664 = vset.pattern.permute.xlu0 0
        %2665 = vperm.xlu0 %2664, %v2625
        %v2666 = vpop.permute.xlu0 %2665
        %2669 = vset.pattern.permute.xlu0 0
        %2670 = vperm.xlu0 %2669, %v2626
        %v2671 = vpop.permute.xlu0 %2670
        %2674 = vset.pattern.permute.xlu0 0
        %2675 = vperm.xlu0 %2674, %v2627
        %v2676 = vpop.permute.xlu0 %2675
        %2679 = vset.pattern.permute.xlu0 0
        %2680 = vperm.xlu0 %2679, %v2628
        %v2681 = vpop.permute.xlu0 %2680
        %2684 = vset.pattern.permute.xlu0 0
        %2685 = vperm.xlu0 %2684, %v2629
        %v2686 = vpop.permute.xlu0 %2685
        %2689 = vset.pattern.permute.xlu0 0
        %2690 = vperm.xlu0 %2689, %v2630
        %v2691 = vpop.permute.xlu0 %2690
        %2694 = vset.pattern.permute.xlu0 0
        %2695 = vperm.xlu0 %2694, %v2631
        %v2696 = vpop.permute.xlu0 %2695
        %2699 = vset.pattern.permute.xlu0 0
        %2700 = vperm.xlu0 %2699, %v2632
        %v2701 = vpop.permute.xlu0 %2700
        %2704 = vset.pattern.permute.xlu0 0
        %2705 = vperm.xlu0 %2704, %v2633
        %v2706 = vpop.permute.xlu0 %2705
        %2709 = vset.pattern.permute.xlu0 0
        %2710 = vperm.xlu0 %2709, %v2634
        %v2711 = vpop.permute.xlu0 %2710
        %2714 = vset.pattern.permute.xlu0 0
        %2715 = vperm.xlu0 %2714, %v2635
        %v2716 = vpop.permute.xlu0 %2715
        %2719 = vset.pattern.permute.xlu0 0
        %2720 = vperm.xlu0 %2719, %v2636
        %v2721 = vpop.permute.xlu0 %2720
        %2724 = vset.pattern.permute.xlu0 0
        %2725 = vperm.xlu0 %2724, %v2637
        %v2726 = vpop.permute.xlu0 %2725
        %2729 = vset.pattern.permute.xlu0 0
        %2730 = vperm.xlu0 %2729, %v2638
        %v2731 = vpop.permute.xlu0 %2730
        %2734 = vset.pattern.permute.xlu0 0
        %2735 = vperm.xlu0 %2734, %v2639
        %v2736 = vpop.permute.xlu0 %2735
        %2739 = vset.pattern.permute.xlu0 0
        %2740 = vperm.xlu0 %2739, %v2640
        %v2741 = vpop.permute.xlu0 %2740
        %2744 = vset.pattern.permute.xlu0 0
        %2745 = vperm.xlu0 %2744, %v2641
        %v2746 = vpop.permute.xlu0 %2745
        %2749 = vset.pattern.permute.xlu0 0
        %2750 = vperm.xlu0 %2749, %v2642
        %v2751 = vpop.permute.xlu0 %2750
        %2754 = vset.pattern.permute.xlu0 0
        %2755 = vperm.xlu0 %2754, %v2643
        %v2756 = vpop.permute.xlu0 %2755
        %2759 = vset.pattern.permute.xlu0 0
        %2760 = vperm.xlu0 %2759, %v2644
        %v2761 = vpop.permute.xlu0 %2760
        %2764 = vset.pattern.permute.xlu0 0
        %2765 = vperm.xlu0 %2764, %v2645
        %v2766 = vpop.permute.xlu0 %2765
        %2769 = vset.pattern.permute.xlu0 0
        %2770 = vperm.xlu0 %2769, %v2646
        %v2771 = vpop.permute.xlu0 %2770
        %2774 = vset.pattern.permute.xlu0 0
        %2775 = vperm.xlu0 %2774, %v2647
        %v2776 = vpop.permute.xlu0 %2775
        %2779 = vset.pattern.permute.xlu0 0
        %2780 = vperm.xlu0 %2779, %v2648
        %v2781 = vpop.permute.xlu0 %2780
        %2784 = vset.pattern.permute.xlu0 0
        %2785 = vperm.xlu0 %2784, %v2649
        %v2786 = vpop.permute.xlu0 %2785
        %2789 = vset.pattern.permute.xlu0 0
        %2790 = vperm.xlu0 %2789, %v2650
        %v2791 = vpop.permute.xlu0 %2790
        %2794 = vset.pattern.permute.xlu0 0
        %2795 = vperm.xlu0 %2794, %v2651
        %v2796 = vpop.permute.xlu0 %2795
        %2799 = vset.pattern.permute.xlu0 0
        %2800 = vperm.xlu0 %2799, %v2652
        %v2801 = vpop.permute.xlu0 %2800
        %2804 = vset.pattern.permute.xlu0 0
        %2805 = vperm.xlu0 %2804, %v2653
        %v2806 = vpop.permute.xlu0 %2805
        %2809 = vset.pattern.permute.xlu0 0
        %2810 = vperm.xlu0 %2809, %v2654
        %v2811 = vpop.permute.xlu0 %2810
        %2814 = vset.pattern.permute.xlu0 0
        %2815 = vperm.xlu0 %2814, %v2655
        %v2816 = vpop.permute.xlu0 %2815
        %v2819 = vlaneseq
        %v2820 = vshrl.u32 %v2819, 7
        %v2821 = vsub.s32 0, %v2820
        %v2822 = vrot.slane %v2657, %v2821
        %v2824 = vadd.f32 %v2661, %v2822
        %v2825 = vadd.f32 %v2666, %v2822
        %v2826 = vadd.f32 %v2671, %v2822
        %v2827 = vadd.f32 %v2676, %v2822
        %v2828 = vadd.f32 %v2681, %v2822
        %v2829 = vadd.f32 %v2686, %v2822
        %v2830 = vadd.f32 %v2691, %v2822
        %v2831 = vadd.f32 %v2696, %v2822
        %v2832 = vadd.f32 %v2701, %v2822
        %v2833 = vadd.f32 %v2706, %v2822
        %v2834 = vadd.f32 %v2711, %v2822
        %v2835 = vadd.f32 %v2716, %v2822
        %v2836 = vadd.f32 %v2721, %v2822
        %v2837 = vadd.f32 %v2726, %v2822
        %v2838 = vadd.f32 %v2731, %v2822
        %v2839 = vadd.f32 %v2736, %v2822
        %v2840 = vadd.f32 %v2741, %v2822
        %v2841 = vadd.f32 %v2746, %v2822
        %v2842 = vadd.f32 %v2751, %v2822
        %v2843 = vadd.f32 %v2756, %v2822
        %v2844 = vadd.f32 %v2761, %v2822
        %v2845 = vadd.f32 %v2766, %v2822
        %v2846 = vadd.f32 %v2771, %v2822
        %v2847 = vadd.f32 %v2776, %v2822
        %v2848 = vadd.f32 %v2781, %v2822
        %v2849 = vadd.f32 %v2786, %v2822
        %v2850 = vadd.f32 %v2791, %v2822
        %v2851 = vadd.f32 %v2796, %v2822
        %v2852 = vadd.f32 %v2801, %v2822
        %v2853 = vadd.f32 %v2806, %v2822
        %v2854 = vadd.f32 %v2811, %v2822
        %v2855 = vadd.f32 %v2816, %v2822
        %v2856 = vmul.f32 %v2824, 0.2
        %v2857 = vmul.f32 %v2825, 0.2
        %v2858 = vmul.f32 %v2826, 0.2
        %v2859 = vmul.f32 %v2827, 0.2
        %v2860 = vmul.f32 %v2828, 0.2
        %v2861 = vmul.f32 %v2829, 0.2
        %v2862 = vmul.f32 %v2830, 0.2
        %v2863 = vmul.f32 %v2831, 0.2
        %v2864 = vmul.f32 %v2832, 0.2
        %v2865 = vmul.f32 %v2833, 0.2
        %v2866 = vmul.f32 %v2834, 0.2
        %v2867 = vmul.f32 %v2835, 0.2
        %v2868 = vmul.f32 %v2836, 0.2
        %v2869 = vmul.f32 %v2837, 0.2
        %v2870 = vmul.f32 %v2838, 0.2
        %v2871 = vmul.f32 %v2839, 0.2
        %v2872 = vmul.f32 %v2840, 0.2
        %v2873 = vmul.f32 %v2841, 0.2
        %v2874 = vmul.f32 %v2842, 0.2
        %v2875 = vmul.f32 %v2843, 0.2
        %v2876 = vmul.f32 %v2844, 0.2
        %v2877 = vmul.f32 %v2845, 0.2
        %v2878 = vmul.f32 %v2846, 0.2
        %v2879 = vmul.f32 %v2847, 0.2
        %v2880 = vmul.f32 %v2848, 0.2
        %v2881 = vmul.f32 %v2849, 0.2
        %v2882 = vmul.f32 %v2850, 0.2
        %v2883 = vmul.f32 %v2851, 0.2
        %v2884 = vmul.f32 %v2852, 0.2
        %v2885 = vmul.f32 %v2853, 0.2
        %v2886 = vmul.f32 %v2854, 0.2
        %v2887 = vmul.f32 %v2855, 0.2
        %v2888 = vmax.f32 %v2824, %v2856
        %v2889 = vmax.f32 %v2825, %v2857
        %v2890 = vmax.f32 %v2826, %v2858
        %v2891 = vmax.f32 %v2827, %v2859
        %v2892 = vmax.f32 %v2828, %v2860
        %v2893 = vmax.f32 %v2829, %v2861
        %v2894 = vmax.f32 %v2830, %v2862
        %v2895 = vmax.f32 %v2831, %v2863
        %v2896 = vmax.f32 %v2832, %v2864
        %v2897 = vmax.f32 %v2833, %v2865
        %v2898 = vmax.f32 %v2834, %v2866
        %v2899 = vmax.f32 %v2835, %v2867
        %v2900 = vmax.f32 %v2836, %v2868
        %v2901 = vmax.f32 %v2837, %v2869
        %v2902 = vmax.f32 %v2838, %v2870
        %v2903 = vmax.f32 %v2839, %v2871
        %v2904 = vmax.f32 %v2840, %v2872
        %v2905 = vmax.f32 %v2841, %v2873
        %v2906 = vmax.f32 %v2842, %v2874
        %v2907 = vmax.f32 %v2843, %v2875
        %v2908 = vmax.f32 %v2844, %v2876
        %v2909 = vmax.f32 %v2845, %v2877
        %v2910 = vmax.f32 %v2846, %v2878
        %v2911 = vmax.f32 %v2847, %v2879
        %v2912 = vmax.f32 %v2848, %v2880
        %v2913 = vmax.f32 %v2849, %v2881
        %v2914 = vmax.f32 %v2850, %v2882
        %v2915 = vmax.f32 %v2851, %v2883
        %v2916 = vmax.f32 %v2852, %v2884
        %v2917 = vmax.f32 %v2853, %v2885
        %v2918 = vmax.f32 %v2854, %v2886
        %v2919 = vmax.f32 %v2855, %v2887
        %v2920 = vadd.f32 %v2888, %v462
        %v2921 = vadd.f32 %v2889, %v463
        %v2922 = vadd.f32 %v2890, %v464
        %v2923 = vadd.f32 %v2891, %v465
        %v2924 = vadd.f32 %v2892, %v466
        %v2925 = vadd.f32 %v2893, %v467
        %v2926 = vadd.f32 %v2894, %v468
        %v2927 = vadd.f32 %v2895, %v469
        %v2928 = vadd.f32 %v2896, %v470
        %v2929 = vadd.f32 %v2897, %v471
        %v2930 = vadd.f32 %v2898, %v472
        %v2931 = vadd.f32 %v2899, %v473
        %v2932 = vadd.f32 %v2900, %v474
        %v2933 = vadd.f32 %v2901, %v475
        %v2934 = vadd.f32 %v2902, %v476
        %v2935 = vadd.f32 %v2903, %v477
        %v2936 = vadd.f32 %v2904, %v478
        %v2937 = vadd.f32 %v2905, %v479
        %v2938 = vadd.f32 %v2906, %v480
        %v2939 = vadd.f32 %v2907, %v481
        %v2940 = vadd.f32 %v2908, %v482
        %v2941 = vadd.f32 %v2909, %v483
        %v2942 = vadd.f32 %v2910, %v484
        %v2943 = vadd.f32 %v2911, %v485
        %v2944 = vadd.f32 %v2912, %v486
        %v2945 = vadd.f32 %v2913, %v487
        %v2946 = vadd.f32 %v2914, %v488
        %v2947 = vadd.f32 %v2915, %v489
        %v2948 = vadd.f32 %v2916, %v490
        %v2949 = vadd.f32 %v2917, %v491
        %v2950 = vadd.f32 %v2918, %v492
        %v2951 = vadd.f32 %v2919, %v493
        %v2952 = vmax.f32 %v2920, %v2924
        %v2953 = vmax.f32 %v2921, %v2925
        %v2954 = vmax.f32 %v2922, %v2926
        %v2955 = vmax.f32 %v2923, %v2927
        %v2956 = vmax.f32 %v2952, %v2928
        %v2957 = vmax.f32 %v2953, %v2929
        %v2958 = vmax.f32 %v2954, %v2930
        %v2959 = vmax.f32 %v2955, %v2931
        %v2960 = vmax.f32 %v2956, %v2932
        %v2961 = vmax.f32 %v2957, %v2933
        %v2962 = vmax.f32 %v2958, %v2934
        %v2963 = vmax.f32 %v2959, %v2935
        %v2964 = vmax.f32 %v2960, %v2936
        %v2965 = vmax.f32 %v2961, %v2937
        %v2966 = vmax.f32 %v2962, %v2938
        %v2967 = vmax.f32 %v2963, %v2939
        %v2968 = vmax.f32 %v2964, %v2940
        %v2969 = vmax.f32 %v2965, %v2941
        %v2970 = vmax.f32 %v2966, %v2942
        %v2971 = vmax.f32 %v2967, %v2943
        %v2972 = vmax.f32 %v2968, %v2944
        %v2973 = vmax.f32 %v2969, %v2945
        %v2974 = vmax.f32 %v2970, %v2946
        %v2975 = vmax.f32 %v2971, %v2947
        %v2976 = vmax.f32 %v2972, %v2948
        %v2977 = vmax.f32 %v2973, %v2949
        %v2978 = vmax.f32 %v2974, %v2950
        %v2979 = vmax.f32 %v2975, %v2951
        %v2980 = vmax.f32 %v2976, %v2977
        %v2981 = vmax.f32 %v2978, %v2979
        %v2982 = vmax.f32 %v2980, %v2981
        %v2983 = vrot.slane %v2982, 4
        %v2984 = vmax.f32 %v2982, %v2983
        %v2985 = vrot.slane %v2984, 2
        %v2986 = vmax.f32 %v2984, %v2985
        %v2987 = vrot.slane %v2986, 1
        %v2988 = vmax.f32 %v2986, %v2987
        %v2989 = vmax.f32 %v2988, 0.0
        %v2990 = vsub.f32 %v2888, %v2989
        %v2991 = vsub.f32 %v2889, %v2989
        %v2992 = vsub.f32 %v2890, %v2989
        %v2993 = vsub.f32 %v2891, %v2989
        %v2994 = vsub.f32 %v2892, %v2989
        %v2995 = vsub.f32 %v2893, %v2989
        %v2996 = vsub.f32 %v2894, %v2989
        %v2997 = vsub.f32 %v2895, %v2989
        %v2998 = vsub.f32 %v2896, %v2989
        %v2999 = vsub.f32 %v2897, %v2989
        %v3000 = vsub.f32 %v2898, %v2989
        %v3001 = vsub.f32 %v2899, %v2989
        %v3002 = vsub.f32 %v2900, %v2989
        %v3003 = vsub.f32 %v2901, %v2989
        %v3004 = vsub.f32 %v2902, %v2989
        %v3005 = vsub.f32 %v2903, %v2989
        %v3006 = vsub.f32 %v2904, %v2989
        %v3007 = vsub.f32 %v2905, %v2989
        %v3008 = vsub.f32 %v2906, %v2989
        %v3009 = vsub.f32 %v2907, %v2989
        %v3010 = vsub.f32 %v2908, %v2989
        %v3011 = vsub.f32 %v2909, %v2989
        %v3012 = vsub.f32 %v2910, %v2989
        %v3013 = vsub.f32 %v2911, %v2989
        %v3014 = vsub.f32 %v2912, %v2989
        %v3015 = vsub.f32 %v2913, %v2989
        %v3016 = vsub.f32 %v2914, %v2989
        %v3017 = vsub.f32 %v2915, %v2989
        %v3018 = vsub.f32 %v2916, %v2989
        %v3019 = vsub.f32 %v2917, %v2989
        %v3020 = vsub.f32 %v2918, %v2989
        %v3021 = vsub.f32 %v2919, %v2989
        %v3022 = vmul.f32 %v2990, 1.442695
        %v3023 = vpow.pop %v3022
        %v3024 = vmul.f32 %v2991, 1.442695
        %v3025 = vpow.pop %v3024
        %v3026 = vmul.f32 %v2992, 1.442695
        %v3027 = vpow.pop %v3026
        %v3028 = vmul.f32 %v2993, 1.442695
        %v3029 = vpow.pop %v3028
        %v3030 = vmul.f32 %v2994, 1.442695
        %v3031 = vpow.pop %v3030
        %v3032 = vmul.f32 %v2995, 1.442695
        %v3033 = vpow.pop %v3032
        %v3034 = vmul.f32 %v2996, 1.442695
        %v3035 = vpow.pop %v3034
        %v3036 = vmul.f32 %v2997, 1.442695
        %v3037 = vpow.pop %v3036
        %v3038 = vmul.f32 %v2998, 1.442695
        %v3039 = vpow.pop %v3038
        %v3040 = vmul.f32 %v2999, 1.442695
        %v3041 = vpow.pop %v3040
        %v3042 = vmul.f32 %v3000, 1.442695
        %v3043 = vpow.pop %v3042
        %v3044 = vmul.f32 %v3001, 1.442695
        %v3045 = vpow.pop %v3044
        %v3046 = vmul.f32 %v3002, 1.442695
        %v3047 = vpow.pop %v3046
        %v3048 = vmul.f32 %v3003, 1.442695
        %v3049 = vpow.pop %v3048
        %v3050 = vmul.f32 %v3004, 1.442695
        %v3051 = vpow.pop %v3050
        %v3052 = vmul.f32 %v3005, 1.442695
        %v3053 = vpow.pop %v3052
        %v3054 = vmul.f32 %v3006, 1.442695
        %v3055 = vpow.pop %v3054
        %v3056 = vmul.f32 %v3007, 1.442695
        %v3057 = vpow.pop %v3056
        %v3058 = vmul.f32 %v3008, 1.442695
        %v3059 = vpow.pop %v3058
        %v3060 = vmul.f32 %v3009, 1.442695
        %v3061 = vpow.pop %v3060
        %v3062 = vmul.f32 %v3010, 1.442695
        %v3063 = vpow.pop %v3062
        %v3064 = vmul.f32 %v3011, 1.442695
        %v3065 = vpow.pop %v3064
        %v3066 = vmul.f32 %v3012, 1.442695
        %v3067 = vpow.pop %v3066
        %v3068 = vmul.f32 %v3013, 1.442695
        %v3069 = vpow.pop %v3068
        %v3070 = vmul.f32 %v3014, 1.442695
        %v3071 = vpow.pop %v3070
        %v3072 = vmul.f32 %v3015, 1.442695
        %v3073 = vpow.pop %v3072
        %v3074 = vmul.f32 %v3016, 1.442695
        %v3075 = vpow.pop %v3074
        %v3076 = vmul.f32 %v3017, 1.442695
        %v3077 = vpow.pop %v3076
        %v3078 = vmul.f32 %v3018, 1.442695
        %v3079 = vpow.pop %v3078
        %v3080 = vmul.f32 %v3019, 1.442695
        %v3081 = vpow.pop %v3080
        %v3082 = vmul.f32 %v3020, 1.442695
        %v3083 = vpow.pop %v3082
        %v3084 = vmul.f32 %v3021, 1.442695
        %v3085 = vpow.pop %v3084
        %v3086 = vmul.f32 %v398, %v3023
        %v3087 = vmul.f32 %v399, %v3025
        %v3088 = vmul.f32 %v400, %v3027
        %v3089 = vmul.f32 %v401, %v3029
        %v3090 = vmul.f32 %v402, %v3031
        %v3091 = vmul.f32 %v403, %v3033
        %v3092 = vmul.f32 %v404, %v3035
        %v3093 = vmul.f32 %v405, %v3037
        %v3094 = vmul.f32 %v406, %v3039
        %v3095 = vmul.f32 %v407, %v3041
        %v3096 = vmul.f32 %v408, %v3043
        %v3097 = vmul.f32 %v409, %v3045
        %v3098 = vmul.f32 %v410, %v3047
        %v3099 = vmul.f32 %v411, %v3049
        %v3100 = vmul.f32 %v412, %v3051
        %v3101 = vmul.f32 %v413, %v3053
        %v3102 = vmul.f32 %v414, %v3055
        %v3103 = vmul.f32 %v415, %v3057
        %v3104 = vmul.f32 %v416, %v3059
        %v3105 = vmul.f32 %v417, %v3061
        %v3106 = vmul.f32 %v418, %v3063
        %v3107 = vmul.f32 %v419, %v3065
        %v3108 = vmul.f32 %v420, %v3067
        %v3109 = vmul.f32 %v421, %v3069
        %v3110 = vmul.f32 %v422, %v3071
        %v3111 = vmul.f32 %v423, %v3073
        %v3112 = vmul.f32 %v424, %v3075
        %v3113 = vmul.f32 %v425, %v3077
        %v3114 = vmul.f32 %v426, %v3079
        %v3115 = vmul.f32 %v427, %v3081
        %v3116 = vmul.f32 %v428, %v3083
        %v3117 = vmul.f32 %v429, %v3085
        %v3118 = vadd.f32 %v3086, %v3087
        %v3119 = vadd.f32 %v3118, %v3088
        %v3120 = vadd.f32 %v3119, %v3089
        %v3121 = vadd.f32 %v3120, %v3090
        %v3122 = vadd.f32 %v3121, %v3091
        %v3123 = vadd.f32 %v3122, %v3092
        %v3124 = vadd.f32 %v3123, %v3093
        %v3125 = vadd.f32 %v3124, %v3094
        %v3126 = vadd.f32 %v3125, %v3095
        %v3127 = vadd.f32 %v3126, %v3096
        %v3128 = vadd.f32 %v3127, %v3097
        %v3129 = vadd.f32 %v3128, %v3098
        %v3130 = vadd.f32 %v3129, %v3099
        %v3131 = vadd.f32 %v3130, %v3100
        %v3132 = vadd.f32 %v3131, %v3101
        %v3133 = vadd.f32 %v3132, %v3102
        %v3134 = vadd.f32 %v3133, %v3103
        %v3135 = vadd.f32 %v3134, %v3104
        %v3136 = vadd.f32 %v3135, %v3105
        %v3137 = vadd.f32 %v3136, %v3106
        %v3138 = vadd.f32 %v3137, %v3107
        %v3139 = vadd.f32 %v3138, %v3108
        %v3140 = vadd.f32 %v3139, %v3109
        %v3141 = vadd.f32 %v3140, %v3110
        %v3142 = vadd.f32 %v3141, %v3111
        %v3143 = vadd.f32 %v3142, %v3112
        %v3144 = vadd.f32 %v3143, %v3113
        %v3145 = vadd.f32 %v3144, %v3114
        %v3146 = vadd.f32 %v3145, %v3115
        %v3147 = vadd.f32 %v3146, %v3116
        %v3148 = vadd.f32 %v3147, %v3117
        %v3149 = vrot.slane %v3148, 4
        %v3150 = vadd.f32 %v3148, %v3149
        %v3151 = vrot.slane %v3150, 2
        %v3152 = vadd.f32 %v3150, %v3151
        %v3153 = vrot.slane %v3152, 1
        %v3154 = vadd.f32 %v3152, %v3153
        %vm3155 = vcmp.gt.f32.partialorder %v3154, 0.0
        %v3156 = vsel %vm3155, %v3154, 1.0
        %v3157 = vrcp.pop %v3156
        %s3158 = scalar_lea.vmem %s278, 256 [#allocation6]
        %v3159 = vld [vmem:[%s3158] sm:$0xff]
        %v3160 = vld [vmem:[%s3158 + $0x8] sm:$0xff]
        %v3161 = vld [vmem:[%s3158 + $0x10] sm:$0xff]
        %v3162 = vld [vmem:[%s3158 + $0x18] sm:$0xff]
        %v3163 = vld [vmem:[%s3158 + $0x20] sm:$0xff]
        %v3164 = vld [vmem:[%s3158 + $0x28] sm:$0xff]
        %v3165 = vld [vmem:[%s3158 + $0x30] sm:$0xff]
        %v3166 = vld [vmem:[%s3158 + $0x38] sm:$0xff]
        %v3167 = vld [vmem:[%s3158 + $0x40] sm:$0xff]
        %v3168 = vld [vmem:[%s3158 + $0x48] sm:$0xff]
        %v3169 = vld [vmem:[%s3158 + $0x50] sm:$0xff]
        %v3170 = vld [vmem:[%s3158 + $0x58] sm:$0xff]
        %v3171 = vld [vmem:[%s3158 + $0x60] sm:$0xff]
        %v3172 = vld [vmem:[%s3158 + $0x68] sm:$0xff]
        %v3173 = vld [vmem:[%s3158 + $0x70] sm:$0xff]
        %v3174 = vld [vmem:[%s3158 + $0x78] sm:$0xff]
        %3175 = vxpose.xlu0.b32.start [1/16] %v3157, 128
        %3176 = vxpose.xlu0.b32.cont [2/16] 0.0, 128
        %3177 = vxpose.xlu0.b32.cont [3/16] 0.0, 128
        %3178 = vxpose.xlu0.b32.cont [4/16] 0.0, 128
        %3179 = vxpose.xlu0.b32.cont [5/16] 0.0, 128
        %3180 = vxpose.xlu0.b32.cont [6/16] 0.0, 128
        %3181 = vxpose.xlu0.b32.cont [7/16] 0.0, 128
        %3182 = vxpose.xlu0.b32.cont [8/16] 0.0, 128
        %3183 = vxpose.xlu0.b32.cont [9/16] 0.0, 128
        %3184 = vxpose.xlu0.b32.cont [10/16] 0.0, 128
        %3185 = vxpose.xlu0.b32.cont [11/16] 0.0, 128
        %3186 = vxpose.xlu0.b32.cont [12/16] 0.0, 128
        %3187 = vxpose.xlu0.b32.cont [13/16] 0.0, 128
        %3188 = vxpose.xlu0.b32.cont [14/16] 0.0, 128
        %3189 = vxpose.xlu0.b32.cont [15/16] 0.0, 128
        %3190 = vxpose.xlu0.b32.end [16/16] 0.0, 128
        %v3191 = vpop.trf.xlu0
        %v3192 = vpop.trf.xlu0
        %v3193 = vpop.trf.xlu0
        %v3194 = vpop.trf.xlu0
        %v3195 = vpop.trf.xlu0
        %v3196 = vpop.trf.xlu0
        %v3197 = vpop.trf.xlu0
        %v3198 = vpop.trf.xlu0
        %v3199 = vpop.trf.xlu0
        %v3200 = vpop.trf.xlu0
        %v3201 = vpop.trf.xlu0
        %v3202 = vpop.trf.xlu0
        %v3203 = vpop.trf.xlu0
        %v3204 = vpop.trf.xlu0
        %v3205 = vpop.trf.xlu0
        %v3206 = vpop.trf.xlu0
        %3208 = vset.pattern.permute.xlu0 0
        %3209 = vperm.xlu0 %3208, %v3191
        %v3210 = vpop.permute.xlu0 %3209
        %3213 = vset.pattern.permute.xlu0 0
        %3214 = vperm.xlu0 %3213, %v3192
        %v3215 = vpop.permute.xlu0 %3214
        %3218 = vset.pattern.permute.xlu0 0
        %3219 = vperm.xlu0 %3218, %v3193
        %v3220 = vpop.permute.xlu0 %3219
        %3223 = vset.pattern.permute.xlu0 0
        %3224 = vperm.xlu0 %3223, %v3194
        %v3225 = vpop.permute.xlu0 %3224
        %3228 = vset.pattern.permute.xlu0 0
        %3229 = vperm.xlu0 %3228, %v3195
        %v3230 = vpop.permute.xlu0 %3229
        %3233 = vset.pattern.permute.xlu0 0
        %3234 = vperm.xlu0 %3233, %v3196
        %v3235 = vpop.permute.xlu0 %3234
        %3238 = vset.pattern.permute.xlu0 0
        %3239 = vperm.xlu0 %3238, %v3197
        %v3240 = vpop.permute.xlu0 %3239
        %3243 = vset.pattern.permute.xlu0 0
        %3244 = vperm.xlu0 %3243, %v3198
        %v3245 = vpop.permute.xlu0 %3244
        %3248 = vset.pattern.permute.xlu0 0
        %3249 = vperm.xlu0 %3248, %v3199
        %v3250 = vpop.permute.xlu0 %3249
        %3253 = vset.pattern.permute.xlu0 0
        %3254 = vperm.xlu0 %3253, %v3200
        %v3255 = vpop.permute.xlu0 %3254
        %3258 = vset.pattern.permute.xlu0 0
        %3259 = vperm.xlu0 %3258, %v3201
        %v3260 = vpop.permute.xlu0 %3259
        %3263 = vset.pattern.permute.xlu0 0
        %3264 = vperm.xlu0 %3263, %v3202
        %v3265 = vpop.permute.xlu0 %3264
        %3268 = vset.pattern.permute.xlu0 0
        %3269 = vperm.xlu0 %3268, %v3203
        %v3270 = vpop.permute.xlu0 %3269
        %3273 = vset.pattern.permute.xlu0 0
        %3274 = vperm.xlu0 %3273, %v3204
        %v3275 = vpop.permute.xlu0 %3274
        %3278 = vset.pattern.permute.xlu0 0
        %3279 = vperm.xlu0 %3278, %v3205
        %v3280 = vpop.permute.xlu0 %3279
        %3283 = vset.pattern.permute.xlu0 0
        %3284 = vperm.xlu0 %3283, %v3206
        %v3285 = vpop.permute.xlu0 %3284
        %v3287 = vmul.f32 %v3159, %v3210
        %v3288 = vmul.f32 %v3160, %v3215
        %v3289 = vmul.f32 %v3161, %v3220
        %v3290 = vmul.f32 %v3162, %v3225
        %v3291 = vmul.f32 %v3163, %v3230
        %v3292 = vmul.f32 %v3164, %v3235
        %v3293 = vmul.f32 %v3165, %v3240
        %v3294 = vmul.f32 %v3166, %v3245
        %v3295 = vmul.f32 %v3167, %v3250
        %v3296 = vmul.f32 %v3168, %v3255
        %v3297 = vmul.f32 %v3169, %v3260
        %v3298 = vmul.f32 %v3170, %v3265
        %v3299 = vmul.f32 %v3171, %v3270
        %v3300 = vmul.f32 %v3172, %v3275
        %v3301 = vmul.f32 %v3173, %v3280
        %v3302 = vmul.f32 %v3174, %v3285
        %3303 = vmatprep.subr.mxu0 0.0
        %3304 = vmatpush1.msra.mxu0 %v3287
        %3305 = vmatprep.subr.mxu0 0.0
        %3306 = vmatpush1.msra.mxu0 %v3288
        %3307 = vmatprep.subr.mxu0 0.0
        %3308 = vmatpush1.msra.mxu0 %v3289
        %3309 = vmatprep.subr.mxu0 0.0
        %3310 = vmatpush1.msra.mxu0 %v3290
        %3311 = vmatprep.subr.mxu0 0.0
        %3312 = vmatpush1.msra.mxu0 %v3291
        %3313 = vmatprep.subr.mxu0 0.0
        %3314 = vmatpush1.msra.mxu0 %v3292
        %3315 = vmatprep.subr.mxu0 0.0
        %3316 = vmatpush1.msra.mxu0 %v3293
        %3317 = vmatprep.subr.mxu0 0.0
        %3318 = vmatpush1.msra.mxu0 %v3294
        %3319 = vmatprep.subr.mxu0 0.0
        %3320 = vmatpush1.msra.mxu0 %v3295
        %3321 = vmatprep.subr.mxu0 0.0
        %3322 = vmatpush1.msra.mxu0 %v3296
        %3323 = vmatprep.subr.mxu0 0.0
        %3324 = vmatpush1.msra.mxu0 %v3297
        %3325 = vmatprep.subr.mxu0 0.0
        %3326 = vmatpush1.msra.mxu0 %v3298
        %3327 = vmatprep.subr.mxu0 0.0
        %3328 = vmatpush1.msra.mxu0 %v3299
        %3329 = vmatprep.subr.mxu0 0.0
        %3330 = vmatpush1.msra.mxu0 %v3300
        %3331 = vmatprep.subr.mxu0 0.0
        %3332 = vmatpush1.msra.mxu0 %v3301
        %3333 = vmatprep.subr.mxu0 0.0
        %3334 = vmatpush1.msra.mxu0 %v3302
        %3335 = vmatprep.subr.mxu0 0.0
        %3336 = vmatpush1.msra.mxu0 0.0
        %3337 = vmatprep.subr.mxu0 0.0
        %3338 = vmatpush1.msra.mxu0 0.0
        %3339 = vmatprep.subr.mxu0 0.0
        %3340 = vmatpush1.msra.mxu0 0.0
        %3341 = vmatprep.subr.mxu0 0.0
        %3342 = vmatpush1.msra.mxu0 0.0
        %3343 = vmatprep.subr.mxu0 0.0
        %3344 = vmatpush1.msra.mxu0 0.0
        %3345 = vmatprep.subr.mxu0 0.0
        %3346 = vmatpush1.msra.mxu0 0.0
        %3347 = vmatprep.subr.mxu0 0.0
        %3348 = vmatpush1.msra.mxu0 0.0
        %3349 = vmatprep.subr.mxu0 0.0
        %3350 = vmatpush1.msra.mxu0 0.0
        %3351 = vmatprep.subr.mxu0 0.0
        %3352 = vmatpush1.msra.mxu0 0.0
        %3353 = vmatprep.subr.mxu0 0.0
        %3354 = vmatpush1.msra.mxu0 0.0
        %3355 = vmatprep.subr.mxu0 0.0
        %3356 = vmatpush1.msra.mxu0 0.0
        %3357 = vmatprep.subr.mxu0 0.0
        %3358 = vmatpush1.msra.mxu0 0.0
        %3359 = vmatprep.subr.mxu0 0.0
        %3360 = vmatpush1.msra.mxu0 0.0
        %3361 = vmatprep.subr.mxu0 0.0
        %3362 = vmatpush1.msra.mxu0 0.0
        %3363 = vmatprep.subr.mxu0 0.0
        %3364 = vmatpush1.msra.mxu0 0.0
        %3365 = vmatprep.subr.mxu0 0.0
        %3366 = vmatpush1.msra.mxu0 0.0
        %3367 = vmatprep.mubr.f32.mxu0 0.0
        %3368 = vmatmul.mubr.f32.gmra.mrb[0].mxu0 %v3086
        %v3369 = vpop.f32.mrb[0].mxu0
        %v3370 = vadd.f32 0.0, %v3369
        %v3371 = vpop.f32.mrb[0].mxu0
        %3372 = vmatprep.mubr.f32.mxu0 0.0
        %3373 = vmatmul.mubr.f32.gmra.mrb[0].mxu0 %v3087
        %v3374 = vpop.f32.mrb[0].mxu0
        %v3375 = vadd.f32 0.0, %v3374
        %v3376 = vpop.f32.mrb[0].mxu0
        %3377 = vmatprep.mubr.f32.mxu0 0.0
        %3378 = vmatmul.mubr.f32.gmra.mrb[0].mxu0 %v3088
        %v3379 = vpop.f32.mrb[0].mxu0
        %v3380 = vadd.f32 0.0, %v3379
        %v3381 = vpop.f32.mrb[0].mxu0
        %3382 = vmatprep.mubr.f32.mxu0 0.0
        %3383 = vmatmul.mubr.f32.gmra.mrb[0].mxu0 %v3089
        %v3384 = vpop.f32.mrb[0].mxu0
        %v3385 = vadd.f32 0.0, %v3384
        %v3386 = vpop.f32.mrb[0].mxu0
        %3387 = vmatprep.mubr.f32.mxu0 0.0
        %3388 = vmatmul.mubr.f32.gmra.mrb[0].mxu0 %v3090
        %v3389 = vpop.f32.mrb[0].mxu0
        %v3390 = vadd.f32 0.0, %v3389
        %v3391 = vpop.f32.mrb[0].mxu0
        %3392 = vmatprep.mubr.f32.mxu0 0.0
        %3393 = vmatmul.mubr.f32.gmra.mrb[0].mxu0 %v3091
        %v3394 = vpop.f32.mrb[0].mxu0
        %v3395 = vadd.f32 0.0, %v3394
        %v3396 = vpop.f32.mrb[0].mxu0
        %3397 = vmatprep.mubr.f32.mxu0 0.0
        %3398 = vmatmul.mubr.f32.gmra.mrb[0].mxu0 %v3092
        %v3399 = vpop.f32.mrb[0].mxu0
        %v3400 = vadd.f32 0.0, %v3399
        %v3401 = vpop.f32.mrb[0].mxu0
        %3402 = vmatprep.mubr.f32.mxu0 0.0
        %3403 = vmatmul.mubr.f32.gmra.mrb[0].mxu0 %v3093
        %v3404 = vpop.f32.mrb[0].mxu0
        %v3405 = vadd.f32 0.0, %v3404
        %v3406 = vpop.f32.mrb[0].mxu0
        %3407 = vmatprep.mubr.f32.mxu0 0.0
        %3408 = vmatmul.mubr.f32.gmra.mrb[0].mxu0 %v3094
        %v3409 = vpop.f32.mrb[0].mxu0
        %v3410 = vadd.f32 0.0, %v3409
        %v3411 = vpop.f32.mrb[0].mxu0
        %3412 = vmatprep.mubr.f32.mxu0 0.0
        %3413 = vmatmul.mubr.f32.gmra.mrb[0].mxu0 %v3095
        %v3414 = vpop.f32.mrb[0].mxu0
        %v3415 = vadd.f32 0.0, %v3414
        %v3416 = vpop.f32.mrb[0].mxu0
        %3417 = vmatprep.mubr.f32.mxu0 0.0
        %3418 = vmatmul.mubr.f32.gmra.mrb[0].mxu0 %v3096
        %v3419 = vpop.f32.mrb[0].mxu0
        %v3420 = vadd.f32 0.0, %v3419
        %v3421 = vpop.f32.mrb[0].mxu0
        %3422 = vmatprep.mubr.f32.mxu0 0.0
        %3423 = vmatmul.mubr.f32.gmra.mrb[0].mxu0 %v3097
        %v3424 = vpop.f32.mrb[0].mxu0
        %v3425 = vadd.f32 0.0, %v3424
        %v3426 = vpop.f32.mrb[0].mxu0
        %3427 = vmatprep.mubr.f32.mxu0 0.0
        %3428 = vmatmul.mubr.f32.gmra.mrb[0].mxu0 %v3098
        %v3429 = vpop.f32.mrb[0].mxu0
        %v3430 = vadd.f32 0.0, %v3429
        %v3431 = vpop.f32.mrb[0].mxu0
        %3432 = vmatprep.mubr.f32.mxu0 0.0
        %3433 = vmatmul.mubr.f32.gmra.mrb[0].mxu0 %v3099
        %v3434 = vpop.f32.mrb[0].mxu0
        %v3435 = vadd.f32 0.0, %v3434
        %v3436 = vpop.f32.mrb[0].mxu0
        %3437 = vmatprep.mubr.f32.mxu0 0.0
        %3438 = vmatmul.mubr.f32.gmra.mrb[0].mxu0 %v3100
        %v3439 = vpop.f32.mrb[0].mxu0
        %v3440 = vadd.f32 0.0, %v3439
        %v3441 = vpop.f32.mrb[0].mxu0
        %3442 = vmatprep.mubr.f32.mxu0 0.0
        %3443 = vmatmul.mubr.f32.gmra.mrb[0].mxu0 %v3101
        %v3444 = vpop.f32.mrb[0].mxu0
        %v3445 = vadd.f32 0.0, %v3444
        %v3446 = vpop.f32.mrb[0].mxu0
        %3447 = vmatprep.mubr.f32.mxu0 0.0
        %3448 = vmatmul.mubr.f32.gmra.mrb[0].mxu0 %v3102
        %v3449 = vpop.f32.mrb[0].mxu0
        %v3450 = vadd.f32 0.0, %v3449
        %v3451 = vpop.f32.mrb[0].mxu0
        %3452 = vmatprep.mubr.f32.mxu0 0.0
        %3453 = vmatmul.mubr.f32.gmra.mrb[0].mxu0 %v3103
        %v3454 = vpop.f32.mrb[0].mxu0
        %v3455 = vadd.f32 0.0, %v3454
        %v3456 = vpop.f32.mrb[0].mxu0
        %3457 = vmatprep.mubr.f32.mxu0 0.0
        %3458 = vmatmul.mubr.f32.gmra.mrb[0].mxu0 %v3104
        %v3459 = vpop.f32.mrb[0].mxu0
        %v3460 = vadd.f32 0.0, %v3459
        %v3461 = vpop.f32.mrb[0].mxu0
        %3462 = vmatprep.mubr.f32.mxu0 0.0
        %3463 = vmatmul.mubr.f32.gmra.mrb[0].mxu0 %v3105
        %v3464 = vpop.f32.mrb[0].mxu0
        %v3465 = vadd.f32 0.0, %v3464
        %v3466 = vpop.f32.mrb[0].mxu0
        %3467 = vmatprep.mubr.f32.mxu0 0.0
        %3468 = vmatmul.mubr.f32.gmra.mrb[0].mxu0 %v3106
        %v3469 = vpop.f32.mrb[0].mxu0
        %v3470 = vadd.f32 0.0, %v3469
        %v3471 = vpop.f32.mrb[0].mxu0
        %3472 = vmatprep.mubr.f32.mxu0 0.0
        %3473 = vmatmul.mubr.f32.gmra.mrb[0].mxu0 %v3107
        %v3474 = vpop.f32.mrb[0].mxu0
        %v3475 = vadd.f32 0.0, %v3474
        %v3476 = vpop.f32.mrb[0].mxu0
        %3477 = vmatprep.mubr.f32.mxu0 0.0
        %3478 = vmatmul.mubr.f32.gmra.mrb[0].mxu0 %v3108
        %v3479 = vpop.f32.mrb[0].mxu0
        %v3480 = vadd.f32 0.0, %v3479
        %v3481 = vpop.f32.mrb[0].mxu0
        %3482 = vmatprep.mubr.f32.mxu0 0.0
        %3483 = vmatmul.mubr.f32.gmra.mrb[0].mxu0 %v3109
        %v3484 = vpop.f32.mrb[0].mxu0
        %v3485 = vadd.f32 0.0, %v3484
        %v3486 = vpop.f32.mrb[0].mxu0
        %3487 = vmatprep.mubr.f32.mxu0 0.0
        %3488 = vmatmul.mubr.f32.gmra.mrb[0].mxu0 %v3110
        %v3489 = vpop.f32.mrb[0].mxu0
        %v3490 = vadd.f32 0.0, %v3489
        %v3491 = vpop.f32.mrb[0].mxu0
        %3492 = vmatprep.mubr.f32.mxu0 0.0
        %3493 = vmatmul.mubr.f32.gmra.mrb[0].mxu0 %v3111
        %v3494 = vpop.f32.mrb[0].mxu0
        %v3495 = vadd.f32 0.0, %v3494
        %v3496 = vpop.f32.mrb[0].mxu0
        %3497 = vmatprep.mubr.f32.mxu0 0.0
        %3498 = vmatmul.mubr.f32.gmra.mrb[0].mxu0 %v3112
        %v3499 = vpop.f32.mrb[0].mxu0
        %v3500 = vadd.f32 0.0, %v3499
        %v3501 = vpop.f32.mrb[0].mxu0
        %3502 = vmatprep.mubr.f32.mxu0 0.0
        %3503 = vmatmul.mubr.f32.gmra.mrb[0].mxu0 %v3113
        %v3504 = vpop.f32.mrb[0].mxu0
        %v3505 = vadd.f32 0.0, %v3504
        %v3506 = vpop.f32.mrb[0].mxu0
        %3507 = vmatprep.mubr.f32.mxu0 0.0
        %3508 = vmatmul.mubr.f32.gmra.mrb[0].mxu0 %v3114
        %v3509 = vpop.f32.mrb[0].mxu0
        %v3510 = vadd.f32 0.0, %v3509
        %v3511 = vpop.f32.mrb[0].mxu0
        %3512 = vmatprep.mubr.f32.mxu0 0.0
        %3513 = vmatmul.mubr.f32.gmra.mrb[0].mxu0 %v3115
        %v3514 = vpop.f32.mrb[0].mxu0
        %v3515 = vadd.f32 0.0, %v3514
        %v3516 = vpop.f32.mrb[0].mxu0
        %3517 = vmatprep.mubr.f32.mxu0 0.0
        %3518 = vmatmul.mubr.f32.gmra.mrb[0].mxu0 %v3116
        %v3519 = vpop.f32.mrb[0].mxu0
        %v3520 = vadd.f32 0.0, %v3519
        %v3521 = vpop.f32.mrb[0].mxu0
        %3522 = vmatprep.mubr.f32.mxu0 0.0
        %3523 = vmatmul.mubr.f32.gmra.mrb[0].mxu0 %v3117
        %v3524 = vpop.f32.mrb[0].mxu0
        %v3525 = vadd.f32 0.0, %v3524
        %v3526 = vpop.f32.mrb[0].mxu0
        %3527 = vdwg.mxu0
        %v3528 = vld [vmem:[#allocation2] sm:$0xff]
        %v3529 = vld [vmem:[#allocation2 + $0x8] sm:$0xff]
        %v3530 = vld [vmem:[#allocation2 + $0x10] sm:$0xff]
        %v3531 = vld [vmem:[#allocation2 + $0x18] sm:$0xff]
        %v3532 = vld [vmem:[#allocation2 + $0x20] sm:$0xff]
        %v3533 = vld [vmem:[#allocation2 + $0x28] sm:$0xff]
        %v3534 = vld [vmem:[#allocation2 + $0x30] sm:$0xff]
        %v3535 = vld [vmem:[#allocation2 + $0x38] sm:$0xff]
        %v3536 = vld [vmem:[#allocation2 + $0x40] sm:$0xff]
        %v3537 = vld [vmem:[#allocation2 + $0x48] sm:$0xff]
        %v3538 = vld [vmem:[#allocation2 + $0x50] sm:$0xff]
        %v3539 = vld [vmem:[#allocation2 + $0x58] sm:$0xff]
        %v3540 = vld [vmem:[#allocation2 + $0x60] sm:$0xff]
        %v3541 = vld [vmem:[#allocation2 + $0x68] sm:$0xff]
        %v3542 = vld [vmem:[#allocation2 + $0x70] sm:$0xff]
        %v3543 = vld [vmem:[#allocation2 + $0x78] sm:$0xff]
        %v3544 = vld [vmem:[#allocation2 + $0x80] sm:$0xff]
        %v3545 = vld [vmem:[#allocation2 + $0x88] sm:$0xff]
        %v3546 = vld [vmem:[#allocation2 + $0x90] sm:$0xff]
        %v3547 = vld [vmem:[#allocation2 + $0x98] sm:$0xff]
        %v3548 = vld [vmem:[#allocation2 + $0xa0] sm:$0xff]
        %v3549 = vld [vmem:[#allocation2 + $0xa8] sm:$0xff]
        %v3550 = vld [vmem:[#allocation2 + $0xb0] sm:$0xff]
        %v3551 = vld [vmem:[#allocation2 + $0xb8] sm:$0xff]
        %v3552 = vld [vmem:[#allocation2 + $0xc0] sm:$0xff]
        %v3553 = vld [vmem:[#allocation2 + $0xc8] sm:$0xff]
        %v3554 = vld [vmem:[#allocation2 + $0xd0] sm:$0xff]
        %v3555 = vld [vmem:[#allocation2 + $0xd8] sm:$0xff]
        %v3556 = vld [vmem:[#allocation2 + $0xe0] sm:$0xff]
        %v3557 = vld [vmem:[#allocation2 + $0xe8] sm:$0xff]
        %v3558 = vld [vmem:[#allocation2 + $0xf0] sm:$0xff]
        %v3559 = vld [vmem:[#allocation2 + $0xf8] sm:$0xff]
        %3592 = vrot.lane.b32.xlu0 %v3370, 64
        %v3593 = vpop.permute.xlu0 %3592
        %3594 = vrot.lane.b32.xlu0 %v3375, 64
        %v3595 = vpop.permute.xlu0 %3594
        %3596 = vrot.lane.b32.xlu0 %v3380, 64
        %v3597 = vpop.permute.xlu0 %3596
        %3598 = vrot.lane.b32.xlu0 %v3385, 64
        %v3599 = vpop.permute.xlu0 %3598
        %3600 = vrot.lane.b32.xlu0 %v3390, 64
        %v3601 = vpop.permute.xlu0 %3600
        %3602 = vrot.lane.b32.xlu0 %v3395, 64
        %v3603 = vpop.permute.xlu0 %3602
        %3604 = vrot.lane.b32.xlu0 %v3400, 64
        %v3605 = vpop.permute.xlu0 %3604
        %3606 = vrot.lane.b32.xlu0 %v3405, 64
        %v3607 = vpop.permute.xlu0 %3606
        %3608 = vrot.lane.b32.xlu0 %v3410, 64
        %v3609 = vpop.permute.xlu0 %3608
        %3610 = vrot.lane.b32.xlu0 %v3415, 64
        %v3611 = vpop.permute.xlu0 %3610
        %3612 = vrot.lane.b32.xlu0 %v3420, 64
        %v3613 = vpop.permute.xlu0 %3612
        %3614 = vrot.lane.b32.xlu0 %v3425, 64
        %v3615 = vpop.permute.xlu0 %3614
        %3616 = vrot.lane.b32.xlu0 %v3430, 64
        %v3617 = vpop.permute.xlu0 %3616
        %3618 = vrot.lane.b32.xlu0 %v3435, 64
        %v3619 = vpop.permute.xlu0 %3618
        %3620 = vrot.lane.b32.xlu0 %v3440, 64
        %v3621 = vpop.permute.xlu0 %3620
        %3622 = vrot.lane.b32.xlu0 %v3445, 64
        %v3623 = vpop.permute.xlu0 %3622
        %3624 = vrot.lane.b32.xlu0 %v3450, 64
        %v3625 = vpop.permute.xlu0 %3624
        %3626 = vrot.lane.b32.xlu0 %v3455, 64
        %v3627 = vpop.permute.xlu0 %3626
        %3628 = vrot.lane.b32.xlu0 %v3460, 64
        %v3629 = vpop.permute.xlu0 %3628
        %3630 = vrot.lane.b32.xlu0 %v3465, 64
        %v3631 = vpop.permute.xlu0 %3630
        %3632 = vrot.lane.b32.xlu0 %v3470, 64
        %v3633 = vpop.permute.xlu0 %3632
        %3634 = vrot.lane.b32.xlu0 %v3475, 64
        %v3635 = vpop.permute.xlu0 %3634
        %3636 = vrot.lane.b32.xlu0 %v3480, 64
        %v3637 = vpop.permute.xlu0 %3636
        %3638 = vrot.lane.b32.xlu0 %v3485, 64
        %v3639 = vpop.permute.xlu0 %3638
        %3640 = vrot.lane.b32.xlu0 %v3490, 64
        %v3641 = vpop.permute.xlu0 %3640
        %3642 = vrot.lane.b32.xlu0 %v3495, 64
        %v3643 = vpop.permute.xlu0 %3642
        %3644 = vrot.lane.b32.xlu0 %v3500, 64
        %v3645 = vpop.permute.xlu0 %3644
        %3646 = vrot.lane.b32.xlu0 %v3505, 64
        %v3647 = vpop.permute.xlu0 %3646
        %3648 = vrot.lane.b32.xlu0 %v3510, 64
        %v3649 = vpop.permute.xlu0 %3648
        %3650 = vrot.lane.b32.xlu0 %v3515, 64
        %v3651 = vpop.permute.xlu0 %3650
        %3652 = vrot.lane.b32.xlu0 %v3520, 64
        %v3653 = vpop.permute.xlu0 %3652
        %3654 = vrot.lane.b32.xlu0 %v3525, 64
        %v3655 = vpop.permute.xlu0 %3654
        %v3688 = vadd.f32 %v3528, %v3593
        %v3689 = vadd.f32 %v3529, %v3595
        %v3690 = vadd.f32 %v3530, %v3597
        %v3691 = vadd.f32 %v3531, %v3599
        %v3692 = vadd.f32 %v3532, %v3601
        %v3693 = vadd.f32 %v3533, %v3603
        %v3694 = vadd.f32 %v3534, %v3605
        %v3695 = vadd.f32 %v3535, %v3607
        %v3696 = vadd.f32 %v3536, %v3609
        %v3697 = vadd.f32 %v3537, %v3611
        %v3698 = vadd.f32 %v3538, %v3613
        %v3699 = vadd.f32 %v3539, %v3615
        %v3700 = vadd.f32 %v3540, %v3617
        %v3701 = vadd.f32 %v3541, %v3619
        %v3702 = vadd.f32 %v3542, %v3621
        %v3703 = vadd.f32 %v3543, %v3623
        %v3704 = vadd.f32 %v3544, %v3625
        %v3705 = vadd.f32 %v3545, %v3627
        %v3706 = vadd.f32 %v3546, %v3629
        %v3707 = vadd.f32 %v3547, %v3631
        %v3708 = vadd.f32 %v3548, %v3633
        %v3709 = vadd.f32 %v3549, %v3635
        %v3710 = vadd.f32 %v3550, %v3637
        %v3711 = vadd.f32 %v3551, %v3639
        %v3712 = vadd.f32 %v3552, %v3641
        %v3713 = vadd.f32 %v3553, %v3643
        %v3714 = vadd.f32 %v3554, %v3645
        %v3715 = vadd.f32 %v3555, %v3647
        %v3716 = vadd.f32 %v3556, %v3649
        %v3717 = vadd.f32 %v3557, %v3651
        %v3718 = vadd.f32 %v3558, %v3653
        %v3719 = vadd.f32 %v3559, %v3655
        %vm3720 = vcmask 785920
        %3721 = vst.msk [vmem:[#allocation2] sm:$0xff] %vm3720, %v3688
        %3722 = vst.msk [vmem:[#allocation2 + $0x8] sm:$0xff] %vm3720, %v3689
        %3723 = vst.msk [vmem:[#allocation2 + $0x10] sm:$0xff] %vm3720, %v3690
        %3724 = vst.msk [vmem:[#allocation2 + $0x18] sm:$0xff] %vm3720, %v3691
        %3725 = vst.msk [vmem:[#allocation2 + $0x20] sm:$0xff] %vm3720, %v3692
        %3726 = vst.msk [vmem:[#allocation2 + $0x28] sm:$0xff] %vm3720, %v3693
        %3727 = vst.msk [vmem:[#allocation2 + $0x30] sm:$0xff] %vm3720, %v3694
        %3728 = vst.msk [vmem:[#allocation2 + $0x38] sm:$0xff] %vm3720, %v3695
        %3729 = vst.msk [vmem:[#allocation2 + $0x40] sm:$0xff] %vm3720, %v3696
        %3730 = vst.msk [vmem:[#allocation2 + $0x48] sm:$0xff] %vm3720, %v3697
        %3731 = vst.msk [vmem:[#allocation2 + $0x50] sm:$0xff] %vm3720, %v3698
        %3732 = vst.msk [vmem:[#allocation2 + $0x58] sm:$0xff] %vm3720, %v3699
        %3733 = vst.msk [vmem:[#allocation2 + $0x60] sm:$0xff] %vm3720, %v3700
        %3734 = vst.msk [vmem:[#allocation2 + $0x68] sm:$0xff] %vm3720, %v3701
        %3735 = vst.msk [vmem:[#allocation2 + $0x70] sm:$0xff] %vm3720, %v3702
        %3736 = vst.msk [vmem:[#allocation2 + $0x78] sm:$0xff] %vm3720, %v3703
        %3737 = vst.msk [vmem:[#allocation2 + $0x80] sm:$0xff] %vm3720, %v3704
        %3738 = vst.msk [vmem:[#allocation2 + $0x88] sm:$0xff] %vm3720, %v3705
        %3739 = vst.msk [vmem:[#allocation2 + $0x90] sm:$0xff] %vm3720, %v3706
        %3740 = vst.msk [vmem:[#allocation2 + $0x98] sm:$0xff] %vm3720, %v3707
        %3741 = vst.msk [vmem:[#allocation2 + $0xa0] sm:$0xff] %vm3720, %v3708
        %3742 = vst.msk [vmem:[#allocation2 + $0xa8] sm:$0xff] %vm3720, %v3709
        %3743 = vst.msk [vmem:[#allocation2 + $0xb0] sm:$0xff] %vm3720, %v3710
        %3744 = vst.msk [vmem:[#allocation2 + $0xb8] sm:$0xff] %vm3720, %v3711
        %3745 = vst.msk [vmem:[#allocation2 + $0xc0] sm:$0xff] %vm3720, %v3712
        %3746 = vst.msk [vmem:[#allocation2 + $0xc8] sm:$0xff] %vm3720, %v3713
        %3747 = vst.msk [vmem:[#allocation2 + $0xd0] sm:$0xff] %vm3720, %v3714
        %3748 = vst.msk [vmem:[#allocation2 + $0xd8] sm:$0xff] %vm3720, %v3715
        %3749 = vst.msk [vmem:[#allocation2 + $0xe0] sm:$0xff] %vm3720, %v3716
        %3750 = vst.msk [vmem:[#allocation2 + $0xe8] sm:$0xff] %vm3720, %v3717
        %3751 = vst.msk [vmem:[#allocation2 + $0xf0] sm:$0xff] %vm3720, %v3718
        %3752 = vst.msk [vmem:[#allocation2 + $0xf8] sm:$0xff] %vm3720, %v3719
        %s3753 = scalar_lea.vmem [#allocation8], 768
        %v3754 = vld [vmem:[%s3753] sm:$0xff]
        %v3755 = vld [vmem:[%s3753 + $0x8] sm:$0xff]
        %v3756 = vld [vmem:[%s3753 + $0x10] sm:$0xff]
        %v3757 = vld [vmem:[%s3753 + $0x18] sm:$0xff]
        %v3758 = vld [vmem:[%s3753 + $0x20] sm:$0xff]
        %v3759 = vld [vmem:[%s3753 + $0x28] sm:$0xff]
        %v3760 = vld [vmem:[%s3753 + $0x30] sm:$0xff]
        %v3761 = vld [vmem:[%s3753 + $0x38] sm:$0xff]
        %v3762 = vld [vmem:[%s3753 + $0x40] sm:$0xff]
        %v3763 = vld [vmem:[%s3753 + $0x48] sm:$0xff]
        %v3764 = vld [vmem:[%s3753 + $0x50] sm:$0xff]
        %v3765 = vld [vmem:[%s3753 + $0x58] sm:$0xff]
        %v3766 = vld [vmem:[%s3753 + $0x60] sm:$0xff]
        %v3767 = vld [vmem:[%s3753 + $0x68] sm:$0xff]
        %v3768 = vld [vmem:[%s3753 + $0x70] sm:$0xff]
        %v3769 = vld [vmem:[%s3753 + $0x78] sm:$0xff]
        %v3770 = vld [vmem:[%s3753 + $0x80] sm:$0xff]
        %v3771 = vld [vmem:[%s3753 + $0x88] sm:$0xff]
        %v3772 = vld [vmem:[%s3753 + $0x90] sm:$0xff]
        %v3773 = vld [vmem:[%s3753 + $0x98] sm:$0xff]
        %v3774 = vld [vmem:[%s3753 + $0xa0] sm:$0xff]
        %v3775 = vld [vmem:[%s3753 + $0xa8] sm:$0xff]
        %v3776 = vld [vmem:[%s3753 + $0xb0] sm:$0xff]
        %v3777 = vld [vmem:[%s3753 + $0xb8] sm:$0xff]
        %v3778 = vld [vmem:[%s3753 + $0xc0] sm:$0xff]
        %v3779 = vld [vmem:[%s3753 + $0xc8] sm:$0xff]
        %v3780 = vld [vmem:[%s3753 + $0xd0] sm:$0xff]
        %v3781 = vld [vmem:[%s3753 + $0xd8] sm:$0xff]
        %v3782 = vld [vmem:[%s3753 + $0xe0] sm:$0xff]
        %v3783 = vld [vmem:[%s3753 + $0xe8] sm:$0xff]
        %v3784 = vld [vmem:[%s3753 + $0xf0] sm:$0xff]
        %v3785 = vld [vmem:[%s3753 + $0xf8] sm:$0xff]
        %s3786 = scalar_lea.vmem %s291, 3 [#allocation9]
        %v3787 = vld [vmem:[%s3786] sm:$0x1]
        %3789 = vset.pattern.permute.xlu0 0
        %3790 = vperm.xlu0 %3789, %v3754
        %v3791 = vpop.permute.xlu0 %3790
        %3794 = vset.pattern.permute.xlu0 0
        %3795 = vperm.xlu0 %3794, %v3755
        %v3796 = vpop.permute.xlu0 %3795
        %3799 = vset.pattern.permute.xlu0 0
        %3800 = vperm.xlu0 %3799, %v3756
        %v3801 = vpop.permute.xlu0 %3800
        %3804 = vset.pattern.permute.xlu0 0
        %3805 = vperm.xlu0 %3804, %v3757
        %v3806 = vpop.permute.xlu0 %3805
        %3809 = vset.pattern.permute.xlu0 0
        %3810 = vperm.xlu0 %3809, %v3758
        %v3811 = vpop.permute.xlu0 %3810
        %3814 = vset.pattern.permute.xlu0 0
        %3815 = vperm.xlu0 %3814, %v3759
        %v3816 = vpop.permute.xlu0 %3815
        %3819 = vset.pattern.permute.xlu0 0
        %3820 = vperm.xlu0 %3819, %v3760
        %v3821 = vpop.permute.xlu0 %3820
        %3824 = vset.pattern.permute.xlu0 0
        %3825 = vperm.xlu0 %3824, %v3761
        %v3826 = vpop.permute.xlu0 %3825
        %3829 = vset.pattern.permute.xlu0 0
        %3830 = vperm.xlu0 %3829, %v3762
        %v3831 = vpop.permute.xlu0 %3830
        %3834 = vset.pattern.permute.xlu0 0
        %3835 = vperm.xlu0 %3834, %v3763
        %v3836 = vpop.permute.xlu0 %3835
        %3839 = vset.pattern.permute.xlu0 0
        %3840 = vperm.xlu0 %3839, %v3764
        %v3841 = vpop.permute.xlu0 %3840
        %3844 = vset.pattern.permute.xlu0 0
        %3845 = vperm.xlu0 %3844, %v3765
        %v3846 = vpop.permute.xlu0 %3845
        %3849 = vset.pattern.permute.xlu0 0
        %3850 = vperm.xlu0 %3849, %v3766
        %v3851 = vpop.permute.xlu0 %3850
        %3854 = vset.pattern.permute.xlu0 0
        %3855 = vperm.xlu0 %3854, %v3767
        %v3856 = vpop.permute.xlu0 %3855
        %3859 = vset.pattern.permute.xlu0 0
        %3860 = vperm.xlu0 %3859, %v3768
        %v3861 = vpop.permute.xlu0 %3860
        %3864 = vset.pattern.permute.xlu0 0
        %3865 = vperm.xlu0 %3864, %v3769
        %v3866 = vpop.permute.xlu0 %3865
        %3869 = vset.pattern.permute.xlu0 0
        %3870 = vperm.xlu0 %3869, %v3770
        %v3871 = vpop.permute.xlu0 %3870
        %3874 = vset.pattern.permute.xlu0 0
        %3875 = vperm.xlu0 %3874, %v3771
        %v3876 = vpop.permute.xlu0 %3875
        %3879 = vset.pattern.permute.xlu0 0
        %3880 = vperm.xlu0 %3879, %v3772
        %v3881 = vpop.permute.xlu0 %3880
        %3884 = vset.pattern.permute.xlu0 0
        %3885 = vperm.xlu0 %3884, %v3773
        %v3886 = vpop.permute.xlu0 %3885
        %3889 = vset.pattern.permute.xlu0 0
        %3890 = vperm.xlu0 %3889, %v3774
        %v3891 = vpop.permute.xlu0 %3890
        %3894 = vset.pattern.permute.xlu0 0
        %3895 = vperm.xlu0 %3894, %v3775
        %v3896 = vpop.permute.xlu0 %3895
        %3899 = vset.pattern.permute.xlu0 0
        %3900 = vperm.xlu0 %3899, %v3776
        %v3901 = vpop.permute.xlu0 %3900
        %3904 = vset.pattern.permute.xlu0 0
        %3905 = vperm.xlu0 %3904, %v3777
        %v3906 = vpop.permute.xlu0 %3905
        %3909 = vset.pattern.permute.xlu0 0
        %3910 = vperm.xlu0 %3909, %v3778
        %v3911 = vpop.permute.xlu0 %3910
        %3914 = vset.pattern.permute.xlu0 0
        %3915 = vperm.xlu0 %3914, %v3779
        %v3916 = vpop.permute.xlu0 %3915
        %3919 = vset.pattern.permute.xlu0 0
        %3920 = vperm.xlu0 %3919, %v3780
        %v3921 = vpop.permute.xlu0 %3920
        %3924 = vset.pattern.permute.xlu0 0
        %3925 = vperm.xlu0 %3924, %v3781
        %v3926 = vpop.permute.xlu0 %3925
        %3929 = vset.pattern.permute.xlu0 0
        %3930 = vperm.xlu0 %3929, %v3782
        %v3931 = vpop.permute.xlu0 %3930
        %3934 = vset.pattern.permute.xlu0 0
        %3935 = vperm.xlu0 %3934, %v3783
        %v3936 = vpop.permute.xlu0 %3935
        %3939 = vset.pattern.permute.xlu0 0
        %3940 = vperm.xlu0 %3939, %v3784
        %v3941 = vpop.permute.xlu0 %3940
        %3944 = vset.pattern.permute.xlu0 0
        %3945 = vperm.xlu0 %3944, %v3785
        %v3946 = vpop.permute.xlu0 %3945
        %v3949 = vlaneseq
        %v3950 = vshrl.u32 %v3949, 7
        %v3951 = vsub.s32 0, %v3950
        %v3952 = vrot.slane %v3787, %v3951
        %v3954 = vadd.f32 %v3791, %v3952
        %v3955 = vadd.f32 %v3796, %v3952
        %v3956 = vadd.f32 %v3801, %v3952
        %v3957 = vadd.f32 %v3806, %v3952
        %v3958 = vadd.f32 %v3811, %v3952
        %v3959 = vadd.f32 %v3816, %v3952
        %v3960 = vadd.f32 %v3821, %v3952
        %v3961 = vadd.f32 %v3826, %v3952
        %v3962 = vadd.f32 %v3831, %v3952
        %v3963 = vadd.f32 %v3836, %v3952
        %v3964 = vadd.f32 %v3841, %v3952
        %v3965 = vadd.f32 %v3846, %v3952
        %v3966 = vadd.f32 %v3851, %v3952
        %v3967 = vadd.f32 %v3856, %v3952
        %v3968 = vadd.f32 %v3861, %v3952
        %v3969 = vadd.f32 %v3866, %v3952
        %v3970 = vadd.f32 %v3871, %v3952
        %v3971 = vadd.f32 %v3876, %v3952
        %v3972 = vadd.f32 %v3881, %v3952
        %v3973 = vadd.f32 %v3886, %v3952
        %v3974 = vadd.f32 %v3891, %v3952
        %v3975 = vadd.f32 %v3896, %v3952
        %v3976 = vadd.f32 %v3901, %v3952
        %v3977 = vadd.f32 %v3906, %v3952
        %v3978 = vadd.f32 %v3911, %v3952
        %v3979 = vadd.f32 %v3916, %v3952
        %v3980 = vadd.f32 %v3921, %v3952
        %v3981 = vadd.f32 %v3926, %v3952
        %v3982 = vadd.f32 %v3931, %v3952
        %v3983 = vadd.f32 %v3936, %v3952
        %v3984 = vadd.f32 %v3941, %v3952
        %v3985 = vadd.f32 %v3946, %v3952
        %v3986 = vmul.f32 %v3954, 0.2
        %v3987 = vmul.f32 %v3955, 0.2
        %v3988 = vmul.f32 %v3956, 0.2
        %v3989 = vmul.f32 %v3957, 0.2
        %v3990 = vmul.f32 %v3958, 0.2
        %v3991 = vmul.f32 %v3959, 0.2
        %v3992 = vmul.f32 %v3960, 0.2
        %v3993 = vmul.f32 %v3961, 0.2
        %v3994 = vmul.f32 %v3962, 0.2
        %v3995 = vmul.f32 %v3963, 0.2
        %v3996 = vmul.f32 %v3964, 0.2
        %v3997 = vmul.f32 %v3965, 0.2
        %v3998 = vmul.f32 %v3966, 0.2
        %v3999 = vmul.f32 %v3967, 0.2
        %v4000 = vmul.f32 %v3968, 0.2
        %v4001 = vmul.f32 %v3969, 0.2
        %v4002 = vmul.f32 %v3970, 0.2
        %v4003 = vmul.f32 %v3971, 0.2
        %v4004 = vmul.f32 %v3972, 0.2
        %v4005 = vmul.f32 %v3973, 0.2
        %v4006 = vmul.f32 %v3974, 0.2
        %v4007 = vmul.f32 %v3975, 0.2
        %v4008 = vmul.f32 %v3976, 0.2
        %v4009 = vmul.f32 %v3977, 0.2
        %v4010 = vmul.f32 %v3978, 0.2
        %v4011 = vmul.f32 %v3979, 0.2
        %v4012 = vmul.f32 %v3980, 0.2
        %v4013 = vmul.f32 %v3981, 0.2
        %v4014 = vmul.f32 %v3982, 0.2
        %v4015 = vmul.f32 %v3983, 0.2
        %v4016 = vmul.f32 %v3984, 0.2
        %v4017 = vmul.f32 %v3985, 0.2
        %v4018 = vmax.f32 %v3954, %v3986
        %v4019 = vmax.f32 %v3955, %v3987
        %v4020 = vmax.f32 %v3956, %v3988
        %v4021 = vmax.f32 %v3957, %v3989
        %v4022 = vmax.f32 %v3958, %v3990
        %v4023 = vmax.f32 %v3959, %v3991
        %v4024 = vmax.f32 %v3960, %v3992
        %v4025 = vmax.f32 %v3961, %v3993
        %v4026 = vmax.f32 %v3962, %v3994
        %v4027 = vmax.f32 %v3963, %v3995
        %v4028 = vmax.f32 %v3964, %v3996
        %v4029 = vmax.f32 %v3965, %v3997
        %v4030 = vmax.f32 %v3966, %v3998
        %v4031 = vmax.f32 %v3967, %v3999
        %v4032 = vmax.f32 %v3968, %v4000
        %v4033 = vmax.f32 %v3969, %v4001
        %v4034 = vmax.f32 %v3970, %v4002
        %v4035 = vmax.f32 %v3971, %v4003
        %v4036 = vmax.f32 %v3972, %v4004
        %v4037 = vmax.f32 %v3973, %v4005
        %v4038 = vmax.f32 %v3974, %v4006
        %v4039 = vmax.f32 %v3975, %v4007
        %v4040 = vmax.f32 %v3976, %v4008
        %v4041 = vmax.f32 %v3977, %v4009
        %v4042 = vmax.f32 %v3978, %v4010
        %v4043 = vmax.f32 %v3979, %v4011
        %v4044 = vmax.f32 %v3980, %v4012
        %v4045 = vmax.f32 %v3981, %v4013
        %v4046 = vmax.f32 %v3982, %v4014
        %v4047 = vmax.f32 %v3983, %v4015
        %v4048 = vmax.f32 %v3984, %v4016
        %v4049 = vmax.f32 %v3985, %v4017
        %v4050 = vadd.f32 %v4018, %v462
        %v4051 = vadd.f32 %v4019, %v463
        %v4052 = vadd.f32 %v4020, %v464
        %v4053 = vadd.f32 %v4021, %v465
        %v4054 = vadd.f32 %v4022, %v466
        %v4055 = vadd.f32 %v4023, %v467
        %v4056 = vadd.f32 %v4024, %v468
        %v4057 = vadd.f32 %v4025, %v469
        %v4058 = vadd.f32 %v4026, %v470
        %v4059 = vadd.f32 %v4027, %v471
        %v4060 = vadd.f32 %v4028, %v472
        %v4061 = vadd.f32 %v4029, %v473
        %v4062 = vadd.f32 %v4030, %v474
        %v4063 = vadd.f32 %v4031, %v475
        %v4064 = vadd.f32 %v4032, %v476
        %v4065 = vadd.f32 %v4033, %v477
        %v4066 = vadd.f32 %v4034, %v478
        %v4067 = vadd.f32 %v4035, %v479
        %v4068 = vadd.f32 %v4036, %v480
        %v4069 = vadd.f32 %v4037, %v481
        %v4070 = vadd.f32 %v4038, %v482
        %v4071 = vadd.f32 %v4039, %v483
        %v4072 = vadd.f32 %v4040, %v484
        %v4073 = vadd.f32 %v4041, %v485
        %v4074 = vadd.f32 %v4042, %v486
        %v4075 = vadd.f32 %v4043, %v487
        %v4076 = vadd.f32 %v4044, %v488
        %v4077 = vadd.f32 %v4045, %v489
        %v4078 = vadd.f32 %v4046, %v490
        %v4079 = vadd.f32 %v4047, %v491
        %v4080 = vadd.f32 %v4048, %v492
        %v4081 = vadd.f32 %v4049, %v493
        %v4082 = vmax.f32 %v4050, %v4054
        %v4083 = vmax.f32 %v4051, %v4055
        %v4084 = vmax.f32 %v4052, %v4056
        %v4085 = vmax.f32 %v4053, %v4057
        %v4086 = vmax.f32 %v4082, %v4058
        %v4087 = vmax.f32 %v4083, %v4059
        %v4088 = vmax.f32 %v4084, %v4060
        %v4089 = vmax.f32 %v4085, %v4061
        %v4090 = vmax.f32 %v4086, %v4062
        %v4091 = vmax.f32 %v4087, %v4063
        %v4092 = vmax.f32 %v4088, %v4064
        %v4093 = vmax.f32 %v4089, %v4065
        %v4094 = vmax.f32 %v4090, %v4066
        %v4095 = vmax.f32 %v4091, %v4067
        %v4096 = vmax.f32 %v4092, %v4068
        %v4097 = vmax.f32 %v4093, %v4069
        %v4098 = vmax.f32 %v4094, %v4070
        %v4099 = vmax.f32 %v4095, %v4071
        %v4100 = vmax.f32 %v4096, %v4072
        %v4101 = vmax.f32 %v4097, %v4073
        %v4102 = vmax.f32 %v4098, %v4074
        %v4103 = vmax.f32 %v4099, %v4075
        %v4104 = vmax.f32 %v4100, %v4076
        %v4105 = vmax.f32 %v4101, %v4077
        %v4106 = vmax.f32 %v4102, %v4078
        %v4107 = vmax.f32 %v4103, %v4079
        %v4108 = vmax.f32 %v4104, %v4080
        %v4109 = vmax.f32 %v4105, %v4081
        %v4110 = vmax.f32 %v4106, %v4107
        %v4111 = vmax.f32 %v4108, %v4109
        %v4112 = vmax.f32 %v4110, %v4111
        %v4113 = vrot.slane %v4112, 4
        %v4114 = vmax.f32 %v4112, %v4113
        %v4115 = vrot.slane %v4114, 2
        %v4116 = vmax.f32 %v4114, %v4115
        %v4117 = vrot.slane %v4116, 1
        %v4118 = vmax.f32 %v4116, %v4117
        %v4119 = vmax.f32 %v4118, 0.0
        %v4120 = vsub.f32 %v4018, %v4119
        %v4121 = vsub.f32 %v4019, %v4119
        %v4122 = vsub.f32 %v4020, %v4119
        %v4123 = vsub.f32 %v4021, %v4119
        %v4124 = vsub.f32 %v4022, %v4119
        %v4125 = vsub.f32 %v4023, %v4119
        %v4126 = vsub.f32 %v4024, %v4119
        %v4127 = vsub.f32 %v4025, %v4119
        %v4128 = vsub.f32 %v4026, %v4119
        %v4129 = vsub.f32 %v4027, %v4119
        %v4130 = vsub.f32 %v4028, %v4119
        %v4131 = vsub.f32 %v4029, %v4119
        %v4132 = vsub.f32 %v4030, %v4119
        %v4133 = vsub.f32 %v4031, %v4119
        %v4134 = vsub.f32 %v4032, %v4119
        %v4135 = vsub.f32 %v4033, %v4119
        %v4136 = vsub.f32 %v4034, %v4119
        %v4137 = vsub.f32 %v4035, %v4119
        %v4138 = vsub.f32 %v4036, %v4119
        %v4139 = vsub.f32 %v4037, %v4119
        %v4140 = vsub.f32 %v4038, %v4119
        %v4141 = vsub.f32 %v4039, %v4119
        %v4142 = vsub.f32 %v4040, %v4119
        %v4143 = vsub.f32 %v4041, %v4119
        %v4144 = vsub.f32 %v4042, %v4119
        %v4145 = vsub.f32 %v4043, %v4119
        %v4146 = vsub.f32 %v4044, %v4119
        %v4147 = vsub.f32 %v4045, %v4119
        %v4148 = vsub.f32 %v4046, %v4119
        %v4149 = vsub.f32 %v4047, %v4119
        %v4150 = vsub.f32 %v4048, %v4119
        %v4151 = vsub.f32 %v4049, %v4119
        %v4152 = vmul.f32 %v4120, 1.442695
        %v4153 = vpow.pop %v4152
        %v4154 = vmul.f32 %v4121, 1.442695
        %v4155 = vpow.pop %v4154
        %v4156 = vmul.f32 %v4122, 1.442695
        %v4157 = vpow.pop %v4156
        %v4158 = vmul.f32 %v4123, 1.442695
        %v4159 = vpow.pop %v4158
        %v4160 = vmul.f32 %v4124, 1.442695
        %v4161 = vpow.pop %v4160
        %v4162 = vmul.f32 %v4125, 1.442695
        %v4163 = vpow.pop %v4162
        %v4164 = vmul.f32 %v4126, 1.442695
        %v4165 = vpow.pop %v4164
        %v4166 = vmul.f32 %v4127, 1.442695
        %v4167 = vpow.pop %v4166
        %v4168 = vmul.f32 %v4128, 1.442695
        %v4169 = vpow.pop %v4168
        %v4170 = vmul.f32 %v4129, 1.442695
        %v4171 = vpow.pop %v4170
        %v4172 = vmul.f32 %v4130, 1.442695
        %v4173 = vpow.pop %v4172
        %v4174 = vmul.f32 %v4131, 1.442695
        %v4175 = vpow.pop %v4174
        %v4176 = vmul.f32 %v4132, 1.442695
        %v4177 = vpow.pop %v4176
        %v4178 = vmul.f32 %v4133, 1.442695
        %v4179 = vpow.pop %v4178
        %v4180 = vmul.f32 %v4134, 1.442695
        %v4181 = vpow.pop %v4180
        %v4182 = vmul.f32 %v4135, 1.442695
        %v4183 = vpow.pop %v4182
        %v4184 = vmul.f32 %v4136, 1.442695
        %v4185 = vpow.pop %v4184
        %v4186 = vmul.f32 %v4137, 1.442695
        %v4187 = vpow.pop %v4186
        %v4188 = vmul.f32 %v4138, 1.442695
        %v4189 = vpow.pop %v4188
        %v4190 = vmul.f32 %v4139, 1.442695
        %v4191 = vpow.pop %v4190
        %v4192 = vmul.f32 %v4140, 1.442695
        %v4193 = vpow.pop %v4192
        %v4194 = vmul.f32 %v4141, 1.442695
        %v4195 = vpow.pop %v4194
        %v4196 = vmul.f32 %v4142, 1.442695
        %v4197 = vpow.pop %v4196
        %v4198 = vmul.f32 %v4143, 1.442695
        %v4199 = vpow.pop %v4198
        %v4200 = vmul.f32 %v4144, 1.442695
        %v4201 = vpow.pop %v4200
        %v4202 = vmul.f32 %v4145, 1.442695
        %v4203 = vpow.pop %v4202
        %v4204 = vmul.f32 %v4146, 1.442695
        %v4205 = vpow.pop %v4204
        %v4206 = vmul.f32 %v4147, 1.442695
        %v4207 = vpow.pop %v4206
        %v4208 = vmul.f32 %v4148, 1.442695
        %v4209 = vpow.pop %v4208
        %v4210 = vmul.f32 %v4149, 1.442695
        %v4211 = vpow.pop %v4210
        %v4212 = vmul.f32 %v4150, 1.442695
        %v4213 = vpow.pop %v4212
        %v4214 = vmul.f32 %v4151, 1.442695
        %v4215 = vpow.pop %v4214
        %v4216 = vmul.f32 %v398, %v4153
        %v4217 = vmul.f32 %v399, %v4155
        %v4218 = vmul.f32 %v400, %v4157
        %v4219 = vmul.f32 %v401, %v4159
        %v4220 = vmul.f32 %v402, %v4161
        %v4221 = vmul.f32 %v403, %v4163
        %v4222 = vmul.f32 %v404, %v4165
        %v4223 = vmul.f32 %v405, %v4167
        %v4224 = vmul.f32 %v406, %v4169
        %v4225 = vmul.f32 %v407, %v4171
        %v4226 = vmul.f32 %v408, %v4173
        %v4227 = vmul.f32 %v409, %v4175
        %v4228 = vmul.f32 %v410, %v4177
        %v4229 = vmul.f32 %v411, %v4179
        %v4230 = vmul.f32 %v412, %v4181
        %v4231 = vmul.f32 %v413, %v4183
        %v4232 = vmul.f32 %v414, %v4185
        %v4233 = vmul.f32 %v415, %v4187
        %v4234 = vmul.f32 %v416, %v4189
        %v4235 = vmul.f32 %v417, %v4191
        %v4236 = vmul.f32 %v418, %v4193
        %v4237 = vmul.f32 %v419, %v4195
        %v4238 = vmul.f32 %v420, %v4197
        %v4239 = vmul.f32 %v421, %v4199
        %v4240 = vmul.f32 %v422, %v4201
        %v4241 = vmul.f32 %v423, %v4203
        %v4242 = vmul.f32 %v424, %v4205
        %v4243 = vmul.f32 %v425, %v4207
        %v4244 = vmul.f32 %v426, %v4209
        %v4245 = vmul.f32 %v427, %v4211
        %v4246 = vmul.f32 %v428, %v4213
        %v4247 = vmul.f32 %v429, %v4215
        %v4248 = vadd.f32 %v4216, %v4217
        %v4249 = vadd.f32 %v4248, %v4218
        %v4250 = vadd.f32 %v4249, %v4219
        %v4251 = vadd.f32 %v4250, %v4220
        %v4252 = vadd.f32 %v4251, %v4221
        %v4253 = vadd.f32 %v4252, %v4222
        %v4254 = vadd.f32 %v4253, %v4223
        %v4255 = vadd.f32 %v4254, %v4224
        %v4256 = vadd.f32 %v4255, %v4225
        %v4257 = vadd.f32 %v4256, %v4226
        %v4258 = vadd.f32 %v4257, %v4227
        %v4259 = vadd.f32 %v4258, %v4228
        %v4260 = vadd.f32 %v4259, %v4229
        %v4261 = vadd.f32 %v4260, %v4230
        %v4262 = vadd.f32 %v4261, %v4231
        %v4263 = vadd.f32 %v4262, %v4232
        %v4264 = vadd.f32 %v4263, %v4233
        %v4265 = vadd.f32 %v4264, %v4234
        %v4266 = vadd.f32 %v4265, %v4235
        %v4267 = vadd.f32 %v4266, %v4236
        %v4268 = vadd.f32 %v4267, %v4237
        %v4269 = vadd.f32 %v4268, %v4238
        %v4270 = vadd.f32 %v4269, %v4239
        %v4271 = vadd.f32 %v4270, %v4240
        %v4272 = vadd.f32 %v4271, %v4241
        %v4273 = vadd.f32 %v4272, %v4242
        %v4274 = vadd.f32 %v4273, %v4243
        %v4275 = vadd.f32 %v4274, %v4244
        %v4276 = vadd.f32 %v4275, %v4245
        %v4277 = vadd.f32 %v4276, %v4246
        %v4278 = vadd.f32 %v4277, %v4247
        %v4279 = vrot.slane %v4278, 4
        %v4280 = vadd.f32 %v4278, %v4279
        %v4281 = vrot.slane %v4280, 2
        %v4282 = vadd.f32 %v4280, %v4281
        %v4283 = vrot.slane %v4282, 1
        %v4284 = vadd.f32 %v4282, %v4283
        %vm4285 = vcmp.gt.f32.partialorder %v4284, 0.0
        %v4286 = vsel %vm4285, %v4284, 1.0
        %v4287 = vrcp.pop %v4286
        %s4288 = scalar_lea.vmem %s278, 384 [#allocation6]
        %v4289 = vld [vmem:[%s4288] sm:$0xff]
        %v4290 = vld [vmem:[%s4288 + $0x8] sm:$0xff]
        %v4291 = vld [vmem:[%s4288 + $0x10] sm:$0xff]
        %v4292 = vld [vmem:[%s4288 + $0x18] sm:$0xff]
        %v4293 = vld [vmem:[%s4288 + $0x20] sm:$0xff]
        %v4294 = vld [vmem:[%s4288 + $0x28] sm:$0xff]
        %v4295 = vld [vmem:[%s4288 + $0x30] sm:$0xff]
        %v4296 = vld [vmem:[%s4288 + $0x38] sm:$0xff]
        %v4297 = vld [vmem:[%s4288 + $0x40] sm:$0xff]
        %v4298 = vld [vmem:[%s4288 + $0x48] sm:$0xff]
        %v4299 = vld [vmem:[%s4288 + $0x50] sm:$0xff]
        %v4300 = vld [vmem:[%s4288 + $0x58] sm:$0xff]
        %v4301 = vld [vmem:[%s4288 + $0x60] sm:$0xff]
        %v4302 = vld [vmem:[%s4288 + $0x68] sm:$0xff]
        %v4303 = vld [vmem:[%s4288 + $0x70] sm:$0xff]
        %v4304 = vld [vmem:[%s4288 + $0x78] sm:$0xff]
        %4305 = vxpose.xlu0.b32.start [1/16] %v4287, 128
        %4306 = vxpose.xlu0.b32.cont [2/16] 0.0, 128
        %4307 = vxpose.xlu0.b32.cont [3/16] 0.0, 128
        %4308 = vxpose.xlu0.b32.cont [4/16] 0.0, 128
        %4309 = vxpose.xlu0.b32.cont [5/16] 0.0, 128
        %4310 = vxpose.xlu0.b32.cont [6/16] 0.0, 128
        %4311 = vxpose.xlu0.b32.cont [7/16] 0.0, 128
        %4312 = vxpose.xlu0.b32.cont [8/16] 0.0, 128
        %4313 = vxpose.xlu0.b32.cont [9/16] 0.0, 128
        %4314 = vxpose.xlu0.b32.cont [10/16] 0.0, 128
        %4315 = vxpose.xlu0.b32.cont [11/16] 0.0, 128
        %4316 = vxpose.xlu0.b32.cont [12/16] 0.0, 128
        %4317 = vxpose.xlu0.b32.cont [13/16] 0.0, 128
        %4318 = vxpose.xlu0.b32.cont [14/16] 0.0, 128
        %4319 = vxpose.xlu0.b32.cont [15/16] 0.0, 128
        %4320 = vxpose.xlu0.b32.end [16/16] 0.0, 128
        %v4321 = vpop.trf.xlu0
        %v4322 = vpop.trf.xlu0
        %v4323 = vpop.trf.xlu0
        %v4324 = vpop.trf.xlu0
        %v4325 = vpop.trf.xlu0
        %v4326 = vpop.trf.xlu0
        %v4327 = vpop.trf.xlu0
        %v4328 = vpop.trf.xlu0
        %v4329 = vpop.trf.xlu0
        %v4330 = vpop.trf.xlu0
        %v4331 = vpop.trf.xlu0
        %v4332 = vpop.trf.xlu0
        %v4333 = vpop.trf.xlu0
        %v4334 = vpop.trf.xlu0
        %v4335 = vpop.trf.xlu0
        %v4336 = vpop.trf.xlu0
        %4338 = vset.pattern.permute.xlu0 0
        %4339 = vperm.xlu0 %4338, %v4321
        %v4340 = vpop.permute.xlu0 %4339
        %4343 = vset.pattern.permute.xlu0 0
        %4344 = vperm.xlu0 %4343, %v4322
        %v4345 = vpop.permute.xlu0 %4344
        %4348 = vset.pattern.permute.xlu0 0
        %4349 = vperm.xlu0 %4348, %v4323
        %v4350 = vpop.permute.xlu0 %4349
        %4353 = vset.pattern.permute.xlu0 0
        %4354 = vperm.xlu0 %4353, %v4324
        %v4355 = vpop.permute.xlu0 %4354
        %4358 = vset.pattern.permute.xlu0 0
        %4359 = vperm.xlu0 %4358, %v4325
        %v4360 = vpop.permute.xlu0 %4359
        %4363 = vset.pattern.permute.xlu0 0
        %4364 = vperm.xlu0 %4363, %v4326
        %v4365 = vpop.permute.xlu0 %4364
        %4368 = vset.pattern.permute.xlu0 0
        %4369 = vperm.xlu0 %4368, %v4327
        %v4370 = vpop.permute.xlu0 %4369
        %4373 = vset.pattern.permute.xlu0 0
        %4374 = vperm.xlu0 %4373, %v4328
        %v4375 = vpop.permute.xlu0 %4374
        %4378 = vset.pattern.permute.xlu0 0
        %4379 = vperm.xlu0 %4378, %v4329
        %v4380 = vpop.permute.xlu0 %4379
        %4383 = vset.pattern.permute.xlu0 0
        %4384 = vperm.xlu0 %4383, %v4330
        %v4385 = vpop.permute.xlu0 %4384
        %4388 = vset.pattern.permute.xlu0 0
        %4389 = vperm.xlu0 %4388, %v4331
        %v4390 = vpop.permute.xlu0 %4389
        %4393 = vset.pattern.permute.xlu0 0
        %4394 = vperm.xlu0 %4393, %v4332
        %v4395 = vpop.permute.xlu0 %4394
        %4398 = vset.pattern.permute.xlu0 0
        %4399 = vperm.xlu0 %4398, %v4333
        %v4400 = vpop.permute.xlu0 %4399
        %4403 = vset.pattern.permute.xlu0 0
        %4404 = vperm.xlu0 %4403, %v4334
        %v4405 = vpop.permute.xlu0 %4404
        %4408 = vset.pattern.permute.xlu0 0
        %4409 = vperm.xlu0 %4408, %v4335
        %v4410 = vpop.permute.xlu0 %4409
        %4413 = vset.pattern.permute.xlu0 0
        %4414 = vperm.xlu0 %4413, %v4336
        %v4415 = vpop.permute.xlu0 %4414
        %v4417 = vmul.f32 %v4289, %v4340
        %v4418 = vmul.f32 %v4290, %v4345
        %v4419 = vmul.f32 %v4291, %v4350
        %v4420 = vmul.f32 %v4292, %v4355
        %v4421 = vmul.f32 %v4293, %v4360
        %v4422 = vmul.f32 %v4294, %v4365
        %v4423 = vmul.f32 %v4295, %v4370
        %v4424 = vmul.f32 %v4296, %v4375
        %v4425 = vmul.f32 %v4297, %v4380
        %v4426 = vmul.f32 %v4298, %v4385
        %v4427 = vmul.f32 %v4299, %v4390
        %v4428 = vmul.f32 %v4300, %v4395
        %v4429 = vmul.f32 %v4301, %v4400
        %v4430 = vmul.f32 %v4302, %v4405
        %v4431 = vmul.f32 %v4303, %v4410
        %v4432 = vmul.f32 %v4304, %v4415
        %4433 = vmatprep.subr.mxu0 0.0
        %4434 = vmatpush1.msra.mxu0 %v4417
        %4435 = vmatprep.subr.mxu0 0.0
        %4436 = vmatpush1.msra.mxu0 %v4418
        %4437 = vmatprep.subr.mxu0 0.0
        %4438 = vmatpush1.msra.mxu0 %v4419
        %4439 = vmatprep.subr.mxu0 0.0
        %4440 = vmatpush1.msra.mxu0 %v4420
        %4441 = vmatprep.subr.mxu0 0.0
        %4442 = vmatpush1.msra.mxu0 %v4421
        %4443 = vmatprep.subr.mxu0 0.0
        %4444 = vmatpush1.msra.mxu0 %v4422
        %4445 = vmatprep.subr.mxu0 0.0
        %4446 = vmatpush1.msra.mxu0 %v4423
        %4447 = vmatprep.subr.mxu0 0.0
        %4448 = vmatpush1.msra.mxu0 %v4424
        %4449 = vmatprep.subr.mxu0 0.0
        %4450 = vmatpush1.msra.mxu0 %v4425
        %4451 = vmatprep.subr.mxu0 0.0
        %4452 = vmatpush1.msra.mxu0 %v4426
        %4453 = vmatprep.subr.mxu0 0.0
        %4454 = vmatpush1.msra.mxu0 %v4427
        %4455 = vmatprep.subr.mxu0 0.0
        %4456 = vmatpush1.msra.mxu0 %v4428
        %4457 = vmatprep.subr.mxu0 0.0
        %4458 = vmatpush1.msra.mxu0 %v4429
        %4459 = vmatprep.subr.mxu0 0.0
        %4460 = vmatpush1.msra.mxu0 %v4430
        %4461 = vmatprep.subr.mxu0 0.0
        %4462 = vmatpush1.msra.mxu0 %v4431
        %4463 = vmatprep.subr.mxu0 0.0
        %4464 = vmatpush1.msra.mxu0 %v4432
        %4465 = vmatprep.subr.mxu0 0.0
        %4466 = vmatpush1.msra.mxu0 0.0
        %4467 = vmatprep.subr.mxu0 0.0
        %4468 = vmatpush1.msra.mxu0 0.0
        %4469 = vmatprep.subr.mxu0 0.0
        %4470 = vmatpush1.msra.mxu0 0.0
        %4471 = vmatprep.subr.mxu0 0.0
        %4472 = vmatpush1.msra.mxu0 0.0
        %4473 = vmatprep.subr.mxu0 0.0
        %4474 = vmatpush1.msra.mxu0 0.0
        %4475 = vmatprep.subr.mxu0 0.0
        %4476 = vmatpush1.msra.mxu0 0.0
        %4477 = vmatprep.subr.mxu0 0.0
        %4478 = vmatpush1.msra.mxu0 0.0
        %4479 = vmatprep.subr.mxu0 0.0
        %4480 = vmatpush1.msra.mxu0 0.0
        %4481 = vmatprep.subr.mxu0 0.0
        %4482 = vmatpush1.msra.mxu0 0.0
        %4483 = vmatprep.subr.mxu0 0.0
        %4484 = vmatpush1.msra.mxu0 0.0
        %4485 = vmatprep.subr.mxu0 0.0
        %4486 = vmatpush1.msra.mxu0 0.0
        %4487 = vmatprep.subr.mxu0 0.0
        %4488 = vmatpush1.msra.mxu0 0.0
        %4489 = vmatprep.subr.mxu0 0.0
        %4490 = vmatpush1.msra.mxu0 0.0
        %4491 = vmatprep.subr.mxu0 0.0
        %4492 = vmatpush1.msra.mxu0 0.0
        %4493 = vmatprep.subr.mxu0 0.0
        %4494 = vmatpush1.msra.mxu0 0.0
        %4495 = vmatprep.subr.mxu0 0.0
        %4496 = vmatpush1.msra.mxu0 0.0
        %4497 = vmatprep.mubr.f32.mxu0 0.0
        %4498 = vmatmul.mubr.f32.gmra.mrb[0].mxu0 %v4216
        %v4499 = vpop.f32.mrb[0].mxu0
        %v4500 = vadd.f32 0.0, %v4499
        %v4501 = vpop.f32.mrb[0].mxu0
        %4502 = vmatprep.mubr.f32.mxu0 0.0
        %4503 = vmatmul.mubr.f32.gmra.mrb[0].mxu0 %v4217
        %v4504 = vpop.f32.mrb[0].mxu0
        %v4505 = vadd.f32 0.0, %v4504
        %v4506 = vpop.f32.mrb[0].mxu0
        %4507 = vmatprep.mubr.f32.mxu0 0.0
        %4508 = vmatmul.mubr.f32.gmra.mrb[0].mxu0 %v4218
        %v4509 = vpop.f32.mrb[0].mxu0
        %v4510 = vadd.f32 0.0, %v4509
        %v4511 = vpop.f32.mrb[0].mxu0
        %4512 = vmatprep.mubr.f32.mxu0 0.0
        %4513 = vmatmul.mubr.f32.gmra.mrb[0].mxu0 %v4219
        %v4514 = vpop.f32.mrb[0].mxu0
        %v4515 = vadd.f32 0.0, %v4514
        %v4516 = vpop.f32.mrb[0].mxu0
        %4517 = vmatprep.mubr.f32.mxu0 0.0
        %4518 = vmatmul.mubr.f32.gmra.mrb[0].mxu0 %v4220
        %v4519 = vpop.f32.mrb[0].mxu0
        %v4520 = vadd.f32 0.0, %v4519
        %v4521 = vpop.f32.mrb[0].mxu0
        %4522 = vmatprep.mubr.f32.mxu0 0.0
        %4523 = vmatmul.mubr.f32.gmra.mrb[0].mxu0 %v4221
        %v4524 = vpop.f32.mrb[0].mxu0
        %v4525 = vadd.f32 0.0, %v4524
        %v4526 = vpop.f32.mrb[0].mxu0
        %4527 = vmatprep.mubr.f32.mxu0 0.0
        %4528 = vmatmul.mubr.f32.gmra.mrb[0].mxu0 %v4222
        %v4529 = vpop.f32.mrb[0].mxu0
        %v4530 = vadd.f32 0.0, %v4529
        %v4531 = vpop.f32.mrb[0].mxu0
        %4532 = vmatprep.mubr.f32.mxu0 0.0
        %4533 = vmatmul.mubr.f32.gmra.mrb[0].mxu0 %v4223
        %v4534 = vpop.f32.mrb[0].mxu0
        %v4535 = vadd.f32 0.0, %v4534
        %v4536 = vpop.f32.mrb[0].mxu0
        %4537 = vmatprep.mubr.f32.mxu0 0.0
        %4538 = vmatmul.mubr.f32.gmra.mrb[0].mxu0 %v4224
        %v4539 = vpop.f32.mrb[0].mxu0
        %v4540 = vadd.f32 0.0, %v4539
        %v4541 = vpop.f32.mrb[0].mxu0
        %4542 = vmatprep.mubr.f32.mxu0 0.0
        %4543 = vmatmul.mubr.f32.gmra.mrb[0].mxu0 %v4225
        %v4544 = vpop.f32.mrb[0].mxu0
        %v4545 = vadd.f32 0.0, %v4544
        %v4546 = vpop.f32.mrb[0].mxu0
        %4547 = vmatprep.mubr.f32.mxu0 0.0
        %4548 = vmatmul.mubr.f32.gmra.mrb[0].mxu0 %v4226
        %v4549 = vpop.f32.mrb[0].mxu0
        %v4550 = vadd.f32 0.0, %v4549
        %v4551 = vpop.f32.mrb[0].mxu0
        %4552 = vmatprep.mubr.f32.mxu0 0.0
        %4553 = vmatmul.mubr.f32.gmra.mrb[0].mxu0 %v4227
        %v4554 = vpop.f32.mrb[0].mxu0
        %v4555 = vadd.f32 0.0, %v4554
        %v4556 = vpop.f32.mrb[0].mxu0
        %4557 = vmatprep.mubr.f32.mxu0 0.0
        %4558 = vmatmul.mubr.f32.gmra.mrb[0].mxu0 %v4228
        %v4559 = vpop.f32.mrb[0].mxu0
        %v4560 = vadd.f32 0.0, %v4559
        %v4561 = vpop.f32.mrb[0].mxu0
        %4562 = vmatprep.mubr.f32.mxu0 0.0
        %4563 = vmatmul.mubr.f32.gmra.mrb[0].mxu0 %v4229
        %v4564 = vpop.f32.mrb[0].mxu0
        %v4565 = vadd.f32 0.0, %v4564
        %v4566 = vpop.f32.mrb[0].mxu0
        %4567 = vmatprep.mubr.f32.mxu0 0.0
        %4568 = vmatmul.mubr.f32.gmra.mrb[0].mxu0 %v4230
        %v4569 = vpop.f32.mrb[0].mxu0
        %v4570 = vadd.f32 0.0, %v4569
        %v4571 = vpop.f32.mrb[0].mxu0
        %4572 = vmatprep.mubr.f32.mxu0 0.0
        %4573 = vmatmul.mubr.f32.gmra.mrb[0].mxu0 %v4231
        %v4574 = vpop.f32.mrb[0].mxu0
        %v4575 = vadd.f32 0.0, %v4574
        %v4576 = vpop.f32.mrb[0].mxu0
        %4577 = vmatprep.mubr.f32.mxu0 0.0
        %4578 = vmatmul.mubr.f32.gmra.mrb[0].mxu0 %v4232
        %v4579 = vpop.f32.mrb[0].mxu0
        %v4580 = vadd.f32 0.0, %v4579
        %v4581 = vpop.f32.mrb[0].mxu0
        %4582 = vmatprep.mubr.f32.mxu0 0.0
        %4583 = vmatmul.mubr.f32.gmra.mrb[0].mxu0 %v4233
        %v4584 = vpop.f32.mrb[0].mxu0
        %v4585 = vadd.f32 0.0, %v4584
        %v4586 = vpop.f32.mrb[0].mxu0
        %4587 = vmatprep.mubr.f32.mxu0 0.0
        %4588 = vmatmul.mubr.f32.gmra.mrb[0].mxu0 %v4234
        %v4589 = vpop.f32.mrb[0].mxu0
        %v4590 = vadd.f32 0.0, %v4589
        %v4591 = vpop.f32.mrb[0].mxu0
        %4592 = vmatprep.mubr.f32.mxu0 0.0
        %4593 = vmatmul.mubr.f32.gmra.mrb[0].mxu0 %v4235
        %v4594 = vpop.f32.mrb[0].mxu0
        %v4595 = vadd.f32 0.0, %v4594
        %v4596 = vpop.f32.mrb[0].mxu0
        %4597 = vmatprep.mubr.f32.mxu0 0.0
        %4598 = vmatmul.mubr.f32.gmra.mrb[0].mxu0 %v4236
        %v4599 = vpop.f32.mrb[0].mxu0
        %v4600 = vadd.f32 0.0, %v4599
        %v4601 = vpop.f32.mrb[0].mxu0
        %4602 = vmatprep.mubr.f32.mxu0 0.0
        %4603 = vmatmul.mubr.f32.gmra.mrb[0].mxu0 %v4237
        %v4604 = vpop.f32.mrb[0].mxu0
        %v4605 = vadd.f32 0.0, %v4604
        %v4606 = vpop.f32.mrb[0].mxu0
        %4607 = vmatprep.mubr.f32.mxu0 0.0
        %4608 = vmatmul.mubr.f32.gmra.mrb[0].mxu0 %v4238
        %v4609 = vpop.f32.mrb[0].mxu0
        %v4610 = vadd.f32 0.0, %v4609
        %v4611 = vpop.f32.mrb[0].mxu0
        %4612 = vmatprep.mubr.f32.mxu0 0.0
        %4613 = vmatmul.mubr.f32.gmra.mrb[0].mxu0 %v4239
        %v4614 = vpop.f32.mrb[0].mxu0
        %v4615 = vadd.f32 0.0, %v4614
        %v4616 = vpop.f32.mrb[0].mxu0
        %4617 = vmatprep.mubr.f32.mxu0 0.0
        %4618 = vmatmul.mubr.f32.gmra.mrb[0].mxu0 %v4240
        %v4619 = vpop.f32.mrb[0].mxu0
        %v4620 = vadd.f32 0.0, %v4619
        %v4621 = vpop.f32.mrb[0].mxu0
        %4622 = vmatprep.mubr.f32.mxu0 0.0
        %4623 = vmatmul.mubr.f32.gmra.mrb[0].mxu0 %v4241
        %v4624 = vpop.f32.mrb[0].mxu0
        %v4625 = vadd.f32 0.0, %v4624
        %v4626 = vpop.f32.mrb[0].mxu0
        %4627 = vmatprep.mubr.f32.mxu0 0.0
        %4628 = vmatmul.mubr.f32.gmra.mrb[0].mxu0 %v4242
        %v4629 = vpop.f32.mrb[0].mxu0
        %v4630 = vadd.f32 0.0, %v4629
        %v4631 = vpop.f32.mrb[0].mxu0
        %4632 = vmatprep.mubr.f32.mxu0 0.0
        %4633 = vmatmul.mubr.f32.gmra.mrb[0].mxu0 %v4243
        %v4634 = vpop.f32.mrb[0].mxu0
        %v4635 = vadd.f32 0.0, %v4634
        %v4636 = vpop.f32.mrb[0].mxu0
        %4637 = vmatprep.mubr.f32.mxu0 0.0
        %4638 = vmatmul.mubr.f32.gmra.mrb[0].mxu0 %v4244
        %v4639 = vpop.f32.mrb[0].mxu0
        %v4640 = vadd.f32 0.0, %v4639
        %v4641 = vpop.f32.mrb[0].mxu0
        %4642 = vmatprep.mubr.f32.mxu0 0.0
        %4643 = vmatmul.mubr.f32.gmra.mrb[0].mxu0 %v4245
        %v4644 = vpop.f32.mrb[0].mxu0
        %v4645 = vadd.f32 0.0, %v4644
        %v4646 = vpop.f32.mrb[0].mxu0
        %4647 = vmatprep.mubr.f32.mxu0 0.0
        %4648 = vmatmul.mubr.f32.gmra.mrb[0].mxu0 %v4246
        %v4649 = vpop.f32.mrb[0].mxu0
        %v4650 = vadd.f32 0.0, %v4649
        %v4651 = vpop.f32.mrb[0].mxu0
        %4652 = vmatprep.mubr.f32.mxu0 0.0
        %4653 = vmatmul.mubr.f32.gmra.mrb[0].mxu0 %v4247
        %v4654 = vpop.f32.mrb[0].mxu0
        %v4655 = vadd.f32 0.0, %v4654
        %v4656 = vpop.f32.mrb[0].mxu0
        %4657 = vdwg.mxu0
        %v4658 = vld [vmem:[#allocation2] sm:$0xff]
        %v4659 = vld [vmem:[#allocation2 + $0x8] sm:$0xff]
        %v4660 = vld [vmem:[#allocation2 + $0x10] sm:$0xff]
        %v4661 = vld [vmem:[#allocation2 + $0x18] sm:$0xff]
        %v4662 = vld [vmem:[#allocation2 + $0x20] sm:$0xff]
        %v4663 = vld [vmem:[#allocation2 + $0x28] sm:$0xff]
        %v4664 = vld [vmem:[#allocation2 + $0x30] sm:$0xff]
        %v4665 = vld [vmem:[#allocation2 + $0x38] sm:$0xff]
        %v4666 = vld [vmem:[#allocation2 + $0x40] sm:$0xff]
        %v4667 = vld [vmem:[#allocation2 + $0x48] sm:$0xff]
        %v4668 = vld [vmem:[#allocation2 + $0x50] sm:$0xff]
        %v4669 = vld [vmem:[#allocation2 + $0x58] sm:$0xff]
        %v4670 = vld [vmem:[#allocation2 + $0x60] sm:$0xff]
        %v4671 = vld [vmem:[#allocation2 + $0x68] sm:$0xff]
        %v4672 = vld [vmem:[#allocation2 + $0x70] sm:$0xff]
        %v4673 = vld [vmem:[#allocation2 + $0x78] sm:$0xff]
        %v4674 = vld [vmem:[#allocation2 + $0x80] sm:$0xff]
        %v4675 = vld [vmem:[#allocation2 + $0x88] sm:$0xff]
        %v4676 = vld [vmem:[#allocation2 + $0x90] sm:$0xff]
        %v4677 = vld [vmem:[#allocation2 + $0x98] sm:$0xff]
        %v4678 = vld [vmem:[#allocation2 + $0xa0] sm:$0xff]
        %v4679 = vld [vmem:[#allocation2 + $0xa8] sm:$0xff]
        %v4680 = vld [vmem:[#allocation2 + $0xb0] sm:$0xff]
        %v4681 = vld [vmem:[#allocation2 + $0xb8] sm:$0xff]
        %v4682 = vld [vmem:[#allocation2 + $0xc0] sm:$0xff]
        %v4683 = vld [vmem:[#allocation2 + $0xc8] sm:$0xff]
        %v4684 = vld [vmem:[#allocation2 + $0xd0] sm:$0xff]
        %v4685 = vld [vmem:[#allocation2 + $0xd8] sm:$0xff]
        %v4686 = vld [vmem:[#allocation2 + $0xe0] sm:$0xff]
        %v4687 = vld [vmem:[#allocation2 + $0xe8] sm:$0xff]
        %v4688 = vld [vmem:[#allocation2 + $0xf0] sm:$0xff]
        %v4689 = vld [vmem:[#allocation2 + $0xf8] sm:$0xff]
        %4722 = vrot.lane.b32.xlu0 %v4500, 96
        %v4723 = vpop.permute.xlu0 %4722
        %4724 = vrot.lane.b32.xlu0 %v4505, 96
        %v4725 = vpop.permute.xlu0 %4724
        %4726 = vrot.lane.b32.xlu0 %v4510, 96
        %v4727 = vpop.permute.xlu0 %4726
        %4728 = vrot.lane.b32.xlu0 %v4515, 96
        %v4729 = vpop.permute.xlu0 %4728
        %4730 = vrot.lane.b32.xlu0 %v4520, 96
        %v4731 = vpop.permute.xlu0 %4730
        %4732 = vrot.lane.b32.xlu0 %v4525, 96
        %v4733 = vpop.permute.xlu0 %4732
        %4734 = vrot.lane.b32.xlu0 %v4530, 96
        %v4735 = vpop.permute.xlu0 %4734
        %4736 = vrot.lane.b32.xlu0 %v4535, 96
        %v4737 = vpop.permute.xlu0 %4736
        %4738 = vrot.lane.b32.xlu0 %v4540, 96
        %v4739 = vpop.permute.xlu0 %4738
        %4740 = vrot.lane.b32.xlu0 %v4545, 96
        %v4741 = vpop.permute.xlu0 %4740
        %4742 = vrot.lane.b32.xlu0 %v4550, 96
        %v4743 = vpop.permute.xlu0 %4742
        %4744 = vrot.lane.b32.xlu0 %v4555, 96
        %v4745 = vpop.permute.xlu0 %4744
        %4746 = vrot.lane.b32.xlu0 %v4560, 96
        %v4747 = vpop.permute.xlu0 %4746
        %4748 = vrot.lane.b32.xlu0 %v4565, 96
        %v4749 = vpop.permute.xlu0 %4748
        %4750 = vrot.lane.b32.xlu0 %v4570, 96
        %v4751 = vpop.permute.xlu0 %4750
        %4752 = vrot.lane.b32.xlu0 %v4575, 96
        %v4753 = vpop.permute.xlu0 %4752
        %4754 = vrot.lane.b32.xlu0 %v4580, 96
        %v4755 = vpop.permute.xlu0 %4754
        %4756 = vrot.lane.b32.xlu0 %v4585, 96
        %v4757 = vpop.permute.xlu0 %4756
        %4758 = vrot.lane.b32.xlu0 %v4590, 96
        %v4759 = vpop.permute.xlu0 %4758
        %4760 = vrot.lane.b32.xlu0 %v4595, 96
        %v4761 = vpop.permute.xlu0 %4760
        %4762 = vrot.lane.b32.xlu0 %v4600, 96
        %v4763 = vpop.permute.xlu0 %4762
        %4764 = vrot.lane.b32.xlu0 %v4605, 96
        %v4765 = vpop.permute.xlu0 %4764
        %4766 = vrot.lane.b32.xlu0 %v4610, 96
        %v4767 = vpop.permute.xlu0 %4766
        %4768 = vrot.lane.b32.xlu0 %v4615, 96
        %v4769 = vpop.permute.xlu0 %4768
        %4770 = vrot.lane.b32.xlu0 %v4620, 96
        %v4771 = vpop.permute.xlu0 %4770
        %4772 = vrot.lane.b32.xlu0 %v4625, 96
        %v4773 = vpop.permute.xlu0 %4772
        %4774 = vrot.lane.b32.xlu0 %v4630, 96
        %v4775 = vpop.permute.xlu0 %4774
        %4776 = vrot.lane.b32.xlu0 %v4635, 96
        %v4777 = vpop.permute.xlu0 %4776
        %4778 = vrot.lane.b32.xlu0 %v4640, 96
        %v4779 = vpop.permute.xlu0 %4778
        %4780 = vrot.lane.b32.xlu0 %v4645, 96
        %v4781 = vpop.permute.xlu0 %4780
        %4782 = vrot.lane.b32.xlu0 %v4650, 96
        %v4783 = vpop.permute.xlu0 %4782
        %4784 = vrot.lane.b32.xlu0 %v4655, 96
        %v4785 = vpop.permute.xlu0 %4784
        %v4818 = vadd.f32 %v4658, %v4723
        %v4819 = vadd.f32 %v4659, %v4725
        %v4820 = vadd.f32 %v4660, %v4727
        %v4821 = vadd.f32 %v4661, %v4729
        %v4822 = vadd.f32 %v4662, %v4731
        %v4823 = vadd.f32 %v4663, %v4733
        %v4824 = vadd.f32 %v4664, %v4735
        %v4825 = vadd.f32 %v4665, %v4737
        %v4826 = vadd.f32 %v4666, %v4739
        %v4827 = vadd.f32 %v4667, %v4741
        %v4828 = vadd.f32 %v4668, %v4743
        %v4829 = vadd.f32 %v4669, %v4745
        %v4830 = vadd.f32 %v4670, %v4747
        %v4831 = vadd.f32 %v4671, %v4749
        %v4832 = vadd.f32 %v4672, %v4751
        %v4833 = vadd.f32 %v4673, %v4753
        %v4834 = vadd.f32 %v4674, %v4755
        %v4835 = vadd.f32 %v4675, %v4757
        %v4836 = vadd.f32 %v4676, %v4759
        %v4837 = vadd.f32 %v4677, %v4761
        %v4838 = vadd.f32 %v4678, %v4763
        %v4839 = vadd.f32 %v4679, %v4765
        %v4840 = vadd.f32 %v4680, %v4767
        %v4841 = vadd.f32 %v4681, %v4769
        %v4842 = vadd.f32 %v4682, %v4771
        %v4843 = vadd.f32 %v4683, %v4773
        %v4844 = vadd.f32 %v4684, %v4775
        %v4845 = vadd.f32 %v4685, %v4777
        %v4846 = vadd.f32 %v4686, %v4779
        %v4847 = vadd.f32 %v4687, %v4781
        %v4848 = vadd.f32 %v4688, %v4783
        %v4849 = vadd.f32 %v4689, %v4785
        %vm4850 = vcmask 1048320
        %4851 = vst.msk [vmem:[#allocation2] sm:$0xff] %vm4850, %v4818
        %4852 = vst.msk [vmem:[#allocation2 + $0x8] sm:$0xff] %vm4850, %v4819
        %4853 = vst.msk [vmem:[#allocation2 + $0x10] sm:$0xff] %vm4850, %v4820
        %4854 = vst.msk [vmem:[#allocation2 + $0x18] sm:$0xff] %vm4850, %v4821
        %4855 = vst.msk [vmem:[#allocation2 + $0x20] sm:$0xff] %vm4850, %v4822
        %4856 = vst.msk [vmem:[#allocation2 + $0x28] sm:$0xff] %vm4850, %v4823
        %4857 = vst.msk [vmem:[#allocation2 + $0x30] sm:$0xff] %vm4850, %v4824
        %4858 = vst.msk [vmem:[#allocation2 + $0x38] sm:$0xff] %vm4850, %v4825
        %4859 = vst.msk [vmem:[#allocation2 + $0x40] sm:$0xff] %vm4850, %v4826
        %4860 = vst.msk [vmem:[#allocation2 + $0x48] sm:$0xff] %vm4850, %v4827
        %4861 = vst.msk [vmem:[#allocation2 + $0x50] sm:$0xff] %vm4850, %v4828
        %4862 = vst.msk [vmem:[#allocation2 + $0x58] sm:$0xff] %vm4850, %v4829
        %4863 = vst.msk [vmem:[#allocation2 + $0x60] sm:$0xff] %vm4850, %v4830
        %4864 = vst.msk [vmem:[#allocation2 + $0x68] sm:$0xff] %vm4850, %v4831
        %4865 = vst.msk [vmem:[#allocation2 + $0x70] sm:$0xff] %vm4850, %v4832
        %4866 = vst.msk [vmem:[#allocation2 + $0x78] sm:$0xff] %vm4850, %v4833
        %4867 = vst.msk [vmem:[#allocation2 + $0x80] sm:$0xff] %vm4850, %v4834
        %4868 = vst.msk [vmem:[#allocation2 + $0x88] sm:$0xff] %vm4850, %v4835
        %4869 = vst.msk [vmem:[#allocation2 + $0x90] sm:$0xff] %vm4850, %v4836
        %4870 = vst.msk [vmem:[#allocation2 + $0x98] sm:$0xff] %vm4850, %v4837
        %4871 = vst.msk [vmem:[#allocation2 + $0xa0] sm:$0xff] %vm4850, %v4838
        %4872 = vst.msk [vmem:[#allocation2 + $0xa8] sm:$0xff] %vm4850, %v4839
        %4873 = vst.msk [vmem:[#allocation2 + $0xb0] sm:$0xff] %vm4850, %v4840
        %4874 = vst.msk [vmem:[#allocation2 + $0xb8] sm:$0xff] %vm4850, %v4841
        %4875 = vst.msk [vmem:[#allocation2 + $0xc0] sm:$0xff] %vm4850, %v4842
        %4876 = vst.msk [vmem:[#allocation2 + $0xc8] sm:$0xff] %vm4850, %v4843
        %4877 = vst.msk [vmem:[#allocation2 + $0xd0] sm:$0xff] %vm4850, %v4844
        %4878 = vst.msk [vmem:[#allocation2 + $0xd8] sm:$0xff] %vm4850, %v4845
        %4879 = vst.msk [vmem:[#allocation2 + $0xe0] sm:$0xff] %vm4850, %v4846
        %4880 = vst.msk [vmem:[#allocation2 + $0xe8] sm:$0xff] %vm4850, %v4847
        %4881 = vst.msk [vmem:[#allocation2 + $0xf0] sm:$0xff] %vm4850, %v4848
        %4882 = vst.msk [vmem:[#allocation2 + $0xf8] sm:$0xff] %vm4850, %v4849
        %p4883 = scmp.eq.s32.totalorder %s25, 1
        // Predicated region
        $region57: #{tpu_custom_call.1} parent=35 // pred_check
          %p4884 = pneg %p4883
        $region58: #{tpu_custom_call.1} parent=35 // pred_check_branch
          %4886 = sbr.rel (%p4884) target = $region60
        $region59: #{tpu_custom_call.1} parent=35 // pred_region
          %v4887 = vld [vmem:[#allocation2] sm:$0xff]
          %v4888 = vld [vmem:[#allocation2 + $0x8] sm:$0xff]
          %v4889 = vld [vmem:[#allocation2 + $0x10] sm:$0xff]
          %v4890 = vld [vmem:[#allocation2 + $0x18] sm:$0xff]
          %v4891 = vld [vmem:[#allocation2 + $0x20] sm:$0xff]
          %v4892 = vld [vmem:[#allocation2 + $0x28] sm:$0xff]
          %v4893 = vld [vmem:[#allocation2 + $0x30] sm:$0xff]
          %v4894 = vld [vmem:[#allocation2 + $0x38] sm:$0xff]
          %v4895 = vld [vmem:[#allocation2 + $0x40] sm:$0xff]
          %v4896 = vld [vmem:[#allocation2 + $0x48] sm:$0xff]
          %v4897 = vld [vmem:[#allocation2 + $0x50] sm:$0xff]
          %v4898 = vld [vmem:[#allocation2 + $0x58] sm:$0xff]
          %v4899 = vld [vmem:[#allocation2 + $0x60] sm:$0xff]
          %v4900 = vld [vmem:[#allocation2 + $0x68] sm:$0xff]
          %v4901 = vld [vmem:[#allocation2 + $0x70] sm:$0xff]
          %v4902 = vld [vmem:[#allocation2 + $0x78] sm:$0xff]
          %v4903 = vld [vmem:[#allocation2 + $0x80] sm:$0xff]
          %v4904 = vld [vmem:[#allocation2 + $0x88] sm:$0xff]
          %v4905 = vld [vmem:[#allocation2 + $0x90] sm:$0xff]
          %v4906 = vld [vmem:[#allocation2 + $0x98] sm:$0xff]
          %v4907 = vld [vmem:[#allocation2 + $0xa0] sm:$0xff]
          %v4908 = vld [vmem:[#allocation2 + $0xa8] sm:$0xff]
          %v4909 = vld [vmem:[#allocation2 + $0xb0] sm:$0xff]
          %v4910 = vld [vmem:[#allocation2 + $0xb8] sm:$0xff]
          %v4911 = vld [vmem:[#allocation2 + $0xc0] sm:$0xff]
          %v4912 = vld [vmem:[#allocation2 + $0xc8] sm:$0xff]
          %v4913 = vld [vmem:[#allocation2 + $0xd0] sm:$0xff]
          %v4914 = vld [vmem:[#allocation2 + $0xd8] sm:$0xff]
          %v4915 = vld [vmem:[#allocation2 + $0xe0] sm:$0xff]
          %v4916 = vld [vmem:[#allocation2 + $0xe8] sm:$0xff]
          %v4917 = vld [vmem:[#allocation2 + $0xf0] sm:$0xff]
          %v4918 = vld [vmem:[#allocation2 + $0xf8] sm:$0xff]
          %vm4919 = vcmp.gt.f32.partialorder %v4887, 0.0
          %vm4920 = vcmp.gt.f32.partialorder %v4888, 0.0
          %vm4921 = vcmp.gt.f32.partialorder %v4889, 0.0
          %vm4922 = vcmp.gt.f32.partialorder %v4890, 0.0
          %vm4923 = vcmp.gt.f32.partialorder %v4891, 0.0
          %vm4924 = vcmp.gt.f32.partialorder %v4892, 0.0
          %vm4925 = vcmp.gt.f32.partialorder %v4893, 0.0
          %vm4926 = vcmp.gt.f32.partialorder %v4894, 0.0
          %vm4927 = vcmp.gt.f32.partialorder %v4895, 0.0
          %vm4928 = vcmp.gt.f32.partialorder %v4896, 0.0
          %vm4929 = vcmp.gt.f32.partialorder %v4897, 0.0
          %vm4930 = vcmp.gt.f32.partialorder %v4898, 0.0
          %vm4931 = vcmp.gt.f32.partialorder %v4899, 0.0
          %vm4932 = vcmp.gt.f32.partialorder %v4900, 0.0
          %vm4933 = vcmp.gt.f32.partialorder %v4901, 0.0
          %vm4934 = vcmp.gt.f32.partialorder %v4902, 0.0
          %vm4935 = vcmp.gt.f32.partialorder %v4903, 0.0
          %vm4936 = vcmp.gt.f32.partialorder %v4904, 0.0
          %vm4937 = vcmp.gt.f32.partialorder %v4905, 0.0
          %vm4938 = vcmp.gt.f32.partialorder %v4906, 0.0
          %vm4939 = vcmp.gt.f32.partialorder %v4907, 0.0
          %vm4940 = vcmp.gt.f32.partialorder %v4908, 0.0
          %vm4941 = vcmp.gt.f32.partialorder %v4909, 0.0
          %vm4942 = vcmp.gt.f32.partialorder %v4910, 0.0
          %vm4943 = vcmp.gt.f32.partialorder %v4911, 0.0
          %vm4944 = vcmp.gt.f32.partialorder %v4912, 0.0
          %vm4945 = vcmp.gt.f32.partialorder %v4913, 0.0
          %vm4946 = vcmp.gt.f32.partialorder %v4914, 0.0
          %vm4947 = vcmp.gt.f32.partialorder %v4915, 0.0
          %vm4948 = vcmp.gt.f32.partialorder %v4916, 0.0
          %vm4949 = vcmp.gt.f32.partialorder %v4917, 0.0
          %vm4950 = vcmp.gt.f32.partialorder %v4918, 0.0
          %v4951 = vmin.f32 %v4887, 0.0
          %v4952 = vmin.f32 %v4888, 0.0
          %v4953 = vmin.f32 %v4889, 0.0
          %v4954 = vmin.f32 %v4890, 0.0
          %v4955 = vmin.f32 %v4891, 0.0
          %v4956 = vmin.f32 %v4892, 0.0
          %v4957 = vmin.f32 %v4893, 0.0
          %v4958 = vmin.f32 %v4894, 0.0
          %v4959 = vmin.f32 %v4895, 0.0
          %v4960 = vmin.f32 %v4896, 0.0
          %v4961 = vmin.f32 %v4897, 0.0
          %v4962 = vmin.f32 %v4898, 0.0
          %v4963 = vmin.f32 %v4899, 0.0
          %v4964 = vmin.f32 %v4900, 0.0
          %v4965 = vmin.f32 %v4901, 0.0
          %v4966 = vmin.f32 %v4902, 0.0
          %v4967 = vmin.f32 %v4903, 0.0
          %v4968 = vmin.f32 %v4904, 0.0
          %v4969 = vmin.f32 %v4905, 0.0
          %v4970 = vmin.f32 %v4906, 0.0
          %v4971 = vmin.f32 %v4907, 0.0
          %v4972 = vmin.f32 %v4908, 0.0
          %v4973 = vmin.f32 %v4909, 0.0
          %v4974 = vmin.f32 %v4910, 0.0
          %v4975 = vmin.f32 %v4911, 0.0
          %v4976 = vmin.f32 %v4912, 0.0
          %v4977 = vmin.f32 %v4913, 0.0
          %v4978 = vmin.f32 %v4914, 0.0
          %v4979 = vmin.f32 %v4915, 0.0
          %v4980 = vmin.f32 %v4916, 0.0
          %v4981 = vmin.f32 %v4917, 0.0
          %v4982 = vmin.f32 %v4918, 0.0
          %v4983 = vmul.f32 %v4951, 1.442695
          %v4984 = vpow.pop %v4983
          %v4985 = vmul.f32 %v4952, 1.442695
          %v4986 = vpow.pop %v4985
          %v4987 = vmul.f32 %v4953, 1.442695
          %v4988 = vpow.pop %v4987
          %v4989 = vmul.f32 %v4954, 1.442695
          %v4990 = vpow.pop %v4989
          %v4991 = vmul.f32 %v4955, 1.442695
          %v4992 = vpow.pop %v4991
          %v4993 = vmul.f32 %v4956, 1.442695
          %v4994 = vpow.pop %v4993
          %v4995 = vmul.f32 %v4957, 1.442695
          %v4996 = vpow.pop %v4995
          %v4997 = vmul.f32 %v4958, 1.442695
          %v4998 = vpow.pop %v4997
          %v4999 = vmul.f32 %v4959, 1.442695
          %v5000 = vpow.pop %v4999
          %v5001 = vmul.f32 %v4960, 1.442695
          %v5002 = vpow.pop %v5001
          %v5003 = vmul.f32 %v4961, 1.442695
          %v5004 = vpow.pop %v5003
          %v5005 = vmul.f32 %v4962, 1.442695
          %v5006 = vpow.pop %v5005
          %v5007 = vmul.f32 %v4963, 1.442695
          %v5008 = vpow.pop %v5007
          %v5009 = vmul.f32 %v4964, 1.442695
          %v5010 = vpow.pop %v5009
          %v5011 = vmul.f32 %v4965, 1.442695
          %v5012 = vpow.pop %v5011
          %v5013 = vmul.f32 %v4966, 1.442695
          %v5014 = vpow.pop %v5013
          %v5015 = vmul.f32 %v4967, 1.442695
          %v5016 = vpow.pop %v5015
          %v5017 = vmul.f32 %v4968, 1.442695
          %v5018 = vpow.pop %v5017
          %v5019 = vmul.f32 %v4969, 1.442695
          %v5020 = vpow.pop %v5019
          %v5021 = vmul.f32 %v4970, 1.442695
          %v5022 = vpow.pop %v5021
          %v5023 = vmul.f32 %v4971, 1.442695
          %v5024 = vpow.pop %v5023
          %v5025 = vmul.f32 %v4972, 1.442695
          %v5026 = vpow.pop %v5025
          %v5027 = vmul.f32 %v4973, 1.442695
          %v5028 = vpow.pop %v5027
          %v5029 = vmul.f32 %v4974, 1.442695
          %v5030 = vpow.pop %v5029
          %v5031 = vmul.f32 %v4975, 1.442695
          %v5032 = vpow.pop %v5031
          %v5033 = vmul.f32 %v4976, 1.442695
          %v5034 = vpow.pop %v5033
          %v5035 = vmul.f32 %v4977, 1.442695
          %v5036 = vpow.pop %v5035
          %v5037 = vmul.f32 %v4978, 1.442695
          %v5038 = vpow.pop %v5037
          %v5039 = vmul.f32 %v4979, 1.442695
          %v5040 = vpow.pop %v5039
          %v5041 = vmul.f32 %v4980, 1.442695
          %v5042 = vpow.pop %v5041
          %v5043 = vmul.f32 %v4981, 1.442695
          %v5044 = vpow.pop %v5043
          %v5045 = vmul.f32 %v4982, 1.442695
          %v5046 = vpow.pop %v5045
          %v5047 = vsub.f32 %v4984, 1.0
          %v5048 = vsub.f32 %v4986, 1.0
          %v5049 = vsub.f32 %v4988, 1.0
          %v5050 = vsub.f32 %v4990, 1.0
          %v5051 = vsub.f32 %v4992, 1.0
          %v5052 = vsub.f32 %v4994, 1.0
          %v5053 = vsub.f32 %v4996, 1.0
          %v5054 = vsub.f32 %v4998, 1.0
          %v5055 = vsub.f32 %v5000, 1.0
          %v5056 = vsub.f32 %v5002, 1.0
          %v5057 = vsub.f32 %v5004, 1.0
          %v5058 = vsub.f32 %v5006, 1.0
          %v5059 = vsub.f32 %v5008, 1.0
          %v5060 = vsub.f32 %v5010, 1.0
          %v5061 = vsub.f32 %v5012, 1.0
          %v5062 = vsub.f32 %v5014, 1.0
          %v5063 = vsub.f32 %v5016, 1.0
          %v5064 = vsub.f32 %v5018, 1.0
          %v5065 = vsub.f32 %v5020, 1.0
          %v5066 = vsub.f32 %v5022, 1.0
          %v5067 = vsub.f32 %v5024, 1.0
          %v5068 = vsub.f32 %v5026, 1.0
          %v5069 = vsub.f32 %v5028, 1.0
          %v5070 = vsub.f32 %v5030, 1.0
          %v5071 = vsub.f32 %v5032, 1.0
          %v5072 = vsub.f32 %v5034, 1.0
          %v5073 = vsub.f32 %v5036, 1.0
          %v5074 = vsub.f32 %v5038, 1.0
          %v5075 = vsub.f32 %v5040, 1.0
          %v5076 = vsub.f32 %v5042, 1.0
          %v5077 = vsub.f32 %v5044, 1.0
          %v5078 = vsub.f32 %v5046, 1.0
          %v5079 = vsel %vm4919, %v4887, %v5047
          %v5080 = vsel %vm4920, %v4888, %v5048
          %v5081 = vsel %vm4921, %v4889, %v5049
          %v5082 = vsel %vm4922, %v4890, %v5050
          %v5083 = vsel %vm4923, %v4891, %v5051
          %v5084 = vsel %vm4924, %v4892, %v5052
          %v5085 = vsel %vm4925, %v4893, %v5053
          %v5086 = vsel %vm4926, %v4894, %v5054
          %v5087 = vsel %vm4927, %v4895, %v5055
          %v5088 = vsel %vm4928, %v4896, %v5056
          %v5089 = vsel %vm4929, %v4897, %v5057
          %v5090 = vsel %vm4930, %v4898, %v5058
          %v5091 = vsel %vm4931, %v4899, %v5059
          %v5092 = vsel %vm4932, %v4900, %v5060
          %v5093 = vsel %vm4933, %v4901, %v5061
          %v5094 = vsel %vm4934, %v4902, %v5062
          %v5095 = vsel %vm4935, %v4903, %v5063
          %v5096 = vsel %vm4936, %v4904, %v5064
          %v5097 = vsel %vm4937, %v4905, %v5065
          %v5098 = vsel %vm4938, %v4906, %v5066
          %v5099 = vsel %vm4939, %v4907, %v5067
          %v5100 = vsel %vm4940, %v4908, %v5068
          %v5101 = vsel %vm4941, %v4909, %v5069
          %v5102 = vsel %vm4942, %v4910, %v5070
          %v5103 = vsel %vm4943, %v4911, %v5071
          %v5104 = vsel %vm4944, %v4912, %v5072
          %v5105 = vsel %vm4945, %v4913, %v5073
          %v5106 = vsel %vm4946, %v4914, %v5074
          %v5107 = vsel %vm4947, %v4915, %v5075
          %v5108 = vsel %vm4948, %v4916, %v5076
          %v5109 = vsel %vm4949, %v4917, %v5077
          %v5110 = vsel %vm4950, %v4918, %v5078
          %vm5111 = vcmp.gt.f32.partialorder %v5079, 0.0
          %vm5112 = vcmp.gt.f32.partialorder %v5080, 0.0
          %vm5113 = vcmp.gt.f32.partialorder %v5081, 0.0
          %vm5114 = vcmp.gt.f32.partialorder %v5082, 0.0
          %vm5115 = vcmp.gt.f32.partialorder %v5083, 0.0
          %vm5116 = vcmp.gt.f32.partialorder %v5084, 0.0
          %vm5117 = vcmp.gt.f32.partialorder %v5085, 0.0
          %vm5118 = vcmp.gt.f32.partialorder %v5086, 0.0
          %vm5119 = vcmp.gt.f32.partialorder %v5087, 0.0
          %vm5120 = vcmp.gt.f32.partialorder %v5088, 0.0
          %vm5121 = vcmp.gt.f32.partialorder %v5089, 0.0
          %vm5122 = vcmp.gt.f32.partialorder %v5090, 0.0
          %vm5123 = vcmp.gt.f32.partialorder %v5091, 0.0
          %vm5124 = vcmp.gt.f32.partialorder %v5092, 0.0
          %vm5125 = vcmp.gt.f32.partialorder %v5093, 0.0
          %vm5126 = vcmp.gt.f32.partialorder %v5094, 0.0
          %vm5127 = vcmp.gt.f32.partialorder %v5095, 0.0
          %vm5128 = vcmp.gt.f32.partialorder %v5096, 0.0
          %vm5129 = vcmp.gt.f32.partialorder %v5097, 0.0
          %vm5130 = vcmp.gt.f32.partialorder %v5098, 0.0
          %vm5131 = vcmp.gt.f32.partialorder %v5099, 0.0
          %vm5132 = vcmp.gt.f32.partialorder %v5100, 0.0
          %vm5133 = vcmp.gt.f32.partialorder %v5101, 0.0
          %vm5134 = vcmp.gt.f32.partialorder %v5102, 0.0
          %vm5135 = vcmp.gt.f32.partialorder %v5103, 0.0
          %vm5136 = vcmp.gt.f32.partialorder %v5104, 0.0
          %vm5137 = vcmp.gt.f32.partialorder %v5105, 0.0
          %vm5138 = vcmp.gt.f32.partialorder %v5106, 0.0
          %vm5139 = vcmp.gt.f32.partialorder %v5107, 0.0
          %vm5140 = vcmp.gt.f32.partialorder %v5108, 0.0
          %vm5141 = vcmp.gt.f32.partialorder %v5109, 0.0
          %vm5142 = vcmp.gt.f32.partialorder %v5110, 0.0
          %v5143 = vmin.f32 %v5079, 0.0
          %v5144 = vmin.f32 %v5080, 0.0
          %v5145 = vmin.f32 %v5081, 0.0
          %v5146 = vmin.f32 %v5082, 0.0
          %v5147 = vmin.f32 %v5083, 0.0
          %v5148 = vmin.f32 %v5084, 0.0
          %v5149 = vmin.f32 %v5085, 0.0
          %v5150 = vmin.f32 %v5086, 0.0
          %v5151 = vmin.f32 %v5087, 0.0
          %v5152 = vmin.f32 %v5088, 0.0
          %v5153 = vmin.f32 %v5089, 0.0
          %v5154 = vmin.f32 %v5090, 0.0
          %v5155 = vmin.f32 %v5091, 0.0
          %v5156 = vmin.f32 %v5092, 0.0
          %v5157 = vmin.f32 %v5093, 0.0
          %v5158 = vmin.f32 %v5094, 0.0
          %v5159 = vmin.f32 %v5095, 0.0
          %v5160 = vmin.f32 %v5096, 0.0
          %v5161 = vmin.f32 %v5097, 0.0
          %v5162 = vmin.f32 %v5098, 0.0
          %v5163 = vmin.f32 %v5099, 0.0
          %v5164 = vmin.f32 %v5100, 0.0
          %v5165 = vmin.f32 %v5101, 0.0
          %v5166 = vmin.f32 %v5102, 0.0
          %v5167 = vmin.f32 %v5103, 0.0
          %v5168 = vmin.f32 %v5104, 0.0
          %v5169 = vmin.f32 %v5105, 0.0
          %v5170 = vmin.f32 %v5106, 0.0
          %v5171 = vmin.f32 %v5107, 0.0
          %v5172 = vmin.f32 %v5108, 0.0
          %v5173 = vmin.f32 %v5109, 0.0
          %v5174 = vmin.f32 %v5110, 0.0
          %v5175 = vmul.f32 %v5143, 1.442695
          %v5176 = vpow.pop %v5175
          %v5177 = vmul.f32 %v5144, 1.442695
          %v5178 = vpow.pop %v5177
          %v5179 = vmul.f32 %v5145, 1.442695
          %v5180 = vpow.pop %v5179
          %v5181 = vmul.f32 %v5146, 1.442695
          %v5182 = vpow.pop %v5181
          %v5183 = vmul.f32 %v5147, 1.442695
          %v5184 = vpow.pop %v5183
          %v5185 = vmul.f32 %v5148, 1.442695
          %v5186 = vpow.pop %v5185
          %v5187 = vmul.f32 %v5149, 1.442695
          %v5188 = vpow.pop %v5187
          %v5189 = vmul.f32 %v5150, 1.442695
          %v5190 = vpow.pop %v5189
          %v5191 = vmul.f32 %v5151, 1.442695
          %v5192 = vpow.pop %v5191
          %v5193 = vmul.f32 %v5152, 1.442695
          %v5194 = vpow.pop %v5193
          %v5195 = vmul.f32 %v5153, 1.442695
          %v5196 = vpow.pop %v5195
          %v5197 = vmul.f32 %v5154, 1.442695
          %v5198 = vpow.pop %v5197
          %v5199 = vmul.f32 %v5155, 1.442695
          %v5200 = vpow.pop %v5199
          %v5201 = vmul.f32 %v5156, 1.442695
          %v5202 = vpow.pop %v5201
          %v5203 = vmul.f32 %v5157, 1.442695
          %v5204 = vpow.pop %v5203
          %v5205 = vmul.f32 %v5158, 1.442695
          %v5206 = vpow.pop %v5205
          %v5207 = vmul.f32 %v5159, 1.442695
          %v5208 = vpow.pop %v5207
          %v5209 = vmul.f32 %v5160, 1.442695
          %v5210 = vpow.pop %v5209
          %v5211 = vmul.f32 %v5161, 1.442695
          %v5212 = vpow.pop %v5211
          %v5213 = vmul.f32 %v5162, 1.442695
          %v5214 = vpow.pop %v5213
          %v5215 = vmul.f32 %v5163, 1.442695
          %v5216 = vpow.pop %v5215
          %v5217 = vmul.f32 %v5164, 1.442695
          %v5218 = vpow.pop %v5217
          %v5219 = vmul.f32 %v5165, 1.442695
          %v5220 = vpow.pop %v5219
          %v5221 = vmul.f32 %v5166, 1.442695
          %v5222 = vpow.pop %v5221
          %v5223 = vmul.f32 %v5167, 1.442695
          %v5224 = vpow.pop %v5223
          %v5225 = vmul.f32 %v5168, 1.442695
          %v5226 = vpow.pop %v5225
          %v5227 = vmul.f32 %v5169, 1.442695
          %v5228 = vpow.pop %v5227
          %v5229 = vmul.f32 %v5170, 1.442695
          %v5230 = vpow.pop %v5229
          %v5231 = vmul.f32 %v5171, 1.442695
          %v5232 = vpow.pop %v5231
          %v5233 = vmul.f32 %v5172, 1.442695
          %v5234 = vpow.pop %v5233
          %v5235 = vmul.f32 %v5173, 1.442695
          %v5236 = vpow.pop %v5235
          %v5237 = vmul.f32 %v5174, 1.442695
          %v5238 = vpow.pop %v5237
          %v5239 = vsub.f32 %v5176, 1.0
          %v5240 = vsub.f32 %v5178, 1.0
          %v5241 = vsub.f32 %v5180, 1.0
          %v5242 = vsub.f32 %v5182, 1.0
          %v5243 = vsub.f32 %v5184, 1.0
          %v5244 = vsub.f32 %v5186, 1.0
          %v5245 = vsub.f32 %v5188, 1.0
          %v5246 = vsub.f32 %v5190, 1.0
          %v5247 = vsub.f32 %v5192, 1.0
          %v5248 = vsub.f32 %v5194, 1.0
          %v5249 = vsub.f32 %v5196, 1.0
          %v5250 = vsub.f32 %v5198, 1.0
          %v5251 = vsub.f32 %v5200, 1.0
          %v5252 = vsub.f32 %v5202, 1.0
          %v5253 = vsub.f32 %v5204, 1.0
          %v5254 = vsub.f32 %v5206, 1.0
          %v5255 = vsub.f32 %v5208, 1.0
          %v5256 = vsub.f32 %v5210, 1.0
          %v5257 = vsub.f32 %v5212, 1.0
          %v5258 = vsub.f32 %v5214, 1.0
          %v5259 = vsub.f32 %v5216, 1.0
          %v5260 = vsub.f32 %v5218, 1.0
          %v5261 = vsub.f32 %v5220, 1.0
          %v5262 = vsub.f32 %v5222, 1.0
          %v5263 = vsub.f32 %v5224, 1.0
          %v5264 = vsub.f32 %v5226, 1.0
          %v5265 = vsub.f32 %v5228, 1.0
          %v5266 = vsub.f32 %v5230, 1.0
          %v5267 = vsub.f32 %v5232, 1.0
          %v5268 = vsub.f32 %v5234, 1.0
          %v5269 = vsub.f32 %v5236, 1.0
          %v5270 = vsub.f32 %v5238, 1.0
          %v5271 = vsel %vm5111, %v5079, %v5239
          %v5272 = vsel %vm5112, %v5080, %v5240
          %v5273 = vsel %vm5113, %v5081, %v5241
          %v5274 = vsel %vm5114, %v5082, %v5242
          %v5275 = vsel %vm5115, %v5083, %v5243
          %v5276 = vsel %vm5116, %v5084, %v5244
          %v5277 = vsel %vm5117, %v5085, %v5245
          %v5278 = vsel %vm5118, %v5086, %v5246
          %v5279 = vsel %vm5119, %v5087, %v5247
          %v5280 = vsel %vm5120, %v5088, %v5248
          %v5281 = vsel %vm5121, %v5089, %v5249
          %v5282 = vsel %vm5122, %v5090, %v5250
          %v5283 = vsel %vm5123, %v5091, %v5251
          %v5284 = vsel %vm5124, %v5092, %v5252
          %v5285 = vsel %vm5125, %v5093, %v5253
          %v5286 = vsel %vm5126, %v5094, %v5254
          %v5287 = vsel %vm5127, %v5095, %v5255
          %v5288 = vsel %vm5128, %v5096, %v5256
          %v5289 = vsel %vm5129, %v5097, %v5257
          %v5290 = vsel %vm5130, %v5098, %v5258
          %v5291 = vsel %vm5131, %v5099, %v5259
          %v5292 = vsel %vm5132, %v5100, %v5260
          %v5293 = vsel %vm5133, %v5101, %v5261
          %v5294 = vsel %vm5134, %v5102, %v5262
          %v5295 = vsel %vm5135, %v5103, %v5263
          %v5296 = vsel %vm5136, %v5104, %v5264
          %v5297 = vsel %vm5137, %v5105, %v5265
          %v5298 = vsel %vm5138, %v5106, %v5266
          %v5299 = vsel %vm5139, %v5107, %v5267
          %v5300 = vsel %vm5140, %v5108, %v5268
          %v5301 = vsel %vm5141, %v5109, %v5269
          %v5302 = vsel %vm5142, %v5110, %v5270
          %5303 = vst [vmem:[#allocation11] sm:$0xff] %v5271
          %5304 = vst [vmem:[#allocation11 + $0x8] sm:$0xff] %v5272
          %5305 = vst [vmem:[#allocation11 + $0x10] sm:$0xff] %v5273
          %5306 = vst [vmem:[#allocation11 + $0x18] sm:$0xff] %v5274
          %5307 = vst [vmem:[#allocation11 + $0x20] sm:$0xff] %v5275
          %5308 = vst [vmem:[#allocation11 + $0x28] sm:$0xff] %v5276
          %5309 = vst [vmem:[#allocation11 + $0x30] sm:$0xff] %v5277
          %5310 = vst [vmem:[#allocation11 + $0x38] sm:$0xff] %v5278
          %5311 = vst [vmem:[#allocation11 + $0x40] sm:$0xff] %v5279
          %5312 = vst [vmem:[#allocation11 + $0x48] sm:$0xff] %v5280
          %5313 = vst [vmem:[#allocation11 + $0x50] sm:$0xff] %v5281
          %5314 = vst [vmem:[#allocation11 + $0x58] sm:$0xff] %v5282
          %5315 = vst [vmem:[#allocation11 + $0x60] sm:$0xff] %v5283
          %5316 = vst [vmem:[#allocation11 + $0x68] sm:$0xff] %v5284
          %5317 = vst [vmem:[#allocation11 + $0x70] sm:$0xff] %v5285
          %5318 = vst [vmem:[#allocation11 + $0x78] sm:$0xff] %v5286
          %5319 = vst [vmem:[#allocation11 + $0x80] sm:$0xff] %v5287
          %5320 = vst [vmem:[#allocation11 + $0x88] sm:$0xff] %v5288
          %5321 = vst [vmem:[#allocation11 + $0x90] sm:$0xff] %v5289
          %5322 = vst [vmem:[#allocation11 + $0x98] sm:$0xff] %v5290
          %5323 = vst [vmem:[#allocation11 + $0xa0] sm:$0xff] %v5291
          %5324 = vst [vmem:[#allocation11 + $0xa8] sm:$0xff] %v5292
          %5325 = vst [vmem:[#allocation11 + $0xb0] sm:$0xff] %v5293
          %5326 = vst [vmem:[#allocation11 + $0xb8] sm:$0xff] %v5294
          %5327 = vst [vmem:[#allocation11 + $0xc0] sm:$0xff] %v5295
          %5328 = vst [vmem:[#allocation11 + $0xc8] sm:$0xff] %v5296
          %5329 = vst [vmem:[#allocation11 + $0xd0] sm:$0xff] %v5297
          %5330 = vst [vmem:[#allocation11 + $0xd8] sm:$0xff] %v5298
          %5331 = vst [vmem:[#allocation11 + $0xe0] sm:$0xff] %v5299
          %5332 = vst [vmem:[#allocation11 + $0xe8] sm:$0xff] %v5300
          %5333 = vst [vmem:[#allocation11 + $0xf0] sm:$0xff] %v5301
          %5334 = vst [vmem:[#allocation11 + $0xf8] sm:$0xff] %v5302
        $region60: #{tpu_custom_call.1} parent=35 // pred_fallthru
          _
        // Predicated region
        $region61: #{tpu_custom_call.1} parent=35 // pred_check
          %p5335 = pneg %p137
        $region62: #{tpu_custom_call.1} parent=35 // pred_check_branch
          %5337 = sbr.rel (%p5335) target = $region64
        $region63: #{tpu_custom_call.1} parent=35 // pred_region
          %s5339 = ssub.s32 4096, 4096
          %5340 = vsyncadd [#allocation5], %s5339
          %s5341 = sshll.u32 [#allocation11], 4
          %s5342 = int_to_ptr.vmem [resolvable:$true] %s5341
          %5347 = dma.vmem_to_hbm [thread:$0]  %s5342, 4096, %s4, [#allocation5], 128, 128, 8
        $region64: #{tpu_custom_call.1} parent=35 // pred_fallthru
          _
        // Predicated region
        $region65: #{tpu_custom_call.1} parent=35 // pred_check
          %p5348 = pneg %p137
        $region66: #{tpu_custom_call.1} parent=35 // pred_check_branch
          %5350 = sbr.rel (%p5348) target = $region68
        $region67: #{tpu_custom_call.1} parent=35 // pred_region
          %5351 = dma.done [#allocation5], 4096
        $region68: #{tpu_custom_call.1} parent=35 // pred_fallthru
          _
      $region36: #{tpu_custom_call.1} parent=5 // pred_fallthru
        _
      %p5352 = scmp.le.s32.totalorder 2, %s20
      // Predicated region
      $region69: #{tpu_custom_call.1} parent=5 // pred_check
        %p5353 = pneg %p5352
      $region70: #{tpu_custom_call.1} parent=5 // pred_check_branch
        %5355 = sbr.rel (%p5353) target = $region72
      $region71: #{tpu_custom_call.1} parent=5 // pred_region
        %s5356 = ssub.s32 %s20, 2
      $region72: #{tpu_custom_call.1} parent=5 // pred_fallthru
        _
    $region6: #{tpu_custom_call.1} parent=1 // loop_footer
      %s24 = sadd.s32 1, %s20
    $region7: #{tpu_custom_call.1} parent=1 // loop_footer_branch
      %19 = sbr.rel target = $region3
    $region8: #{tpu_custom_call.1} parent=1 // loop_exit
      _
    %5357 = vsyncpa [#allocation4], 1
    %s5358 = scalar_lea.sflag [#allocation4], 1
    %5359 = vsyncpa %s5358, 1
    %5360 = vsyncpa [#allocation7], 1
    %s5361 = scalar_lea.sflag [#allocation7], 1
    %5362 = vsyncpa %s5361, 1
    %5363 = vsyncpa [#allocation10], 1
    %s5364 = scalar_lea.sflag [#allocation10], 1
    %5365 = vsyncpa %s5364, 1
    %5366 = vsyncpa [#allocation5], 1
    %s5367 = scalar_lea.sflag [#allocation5], 1
    %5368 = vsyncpa %s5367, 1

</llo_original>
